<compile_context>
chip_gen: v7x
topology: tpu7x:2x2x1
jax: 0.10.0
libtpu: 0.0.40
codegen_flags: <defaults>
</compile_context>

<pallas_src>
import math

import jax
import jax.numpy as jnp
from jax.experimental import pallas as pl
from jax.experimental.pallas import tpu as pltpu

LANE = 128


def _rup(n, m=LANE):
    return ((n + m - 1) // m) * m


# ----------------------------------------------------------------------------------
# Kernel 1: bidirectional single-layer encoder LSTM over the whole source sequence.
# Forward step t and backward step S-1-t are fused in the same iteration so the two
# independent recurrences hide each other's latency; per-step hidden states are
# stored directly into enc_out_ref (lane-aligned halves [0:Hp] / [Hp:2Hp]).
# ----------------------------------------------------------------------------------
def encoder_kernel(x_ref, wif_ref, whf_ref, bf_ref, wib_ref, whb_ref, bb_ref,
                   enc_out_ref, hsum_ref, csum_ref):
    B, S, _ = x_ref.shape
    Hp = whf_ref.shape[0]

    x = x_ref[...]                                   # (B, S, Ep) bf16
    wi_f, wh_f, b_f = wif_ref[...], whf_ref[...], bf_ref[...]
    wi_b, wh_b, b_b = wib_ref[...], whb_ref[...], bb_ref[...]

    def cell(x_t, h, c, wi, wh, b):
        g = (jnp.dot(x_t, wi, preferred_element_type=jnp.float32)
             + jnp.dot(h.astype(jnp.bfloat16), wh, preferred_element_type=jnp.float32)
             + b)                                    # (B, 4*Hp) f32, gates i|f|g|o
        i = jax.nn.sigmoid(g[:, 0:Hp])
        f = jax.nn.sigmoid(g[:, Hp:2 * Hp])
        gg = jnp.tanh(g[:, 2 * Hp:3 * Hp])
        o = jax.nn.sigmoid(g[:, 3 * Hp:4 * Hp])
        c_new = f * c + i * gg
        h_new = o * jnp.tanh(c_new)
        return h_new, c_new

    zeros = jnp.zeros((B, Hp), jnp.float32)
    h_f, c_f, h_b, c_b = zeros, zeros, zeros, zeros
    for t in range(S):                               # S small & static -> unrolled
        h_f, c_f = cell(x[:, t, :], h_f, c_f, wi_f, wh_f, b_f)
        h_b, c_b = cell(x[:, S - 1 - t, :], h_b, c_b, wi_b, wh_b, b_b)
        enc_out_ref[:, pl.ds(t, 1), 0:Hp] = h_f[:, None, :]
        enc_out_ref[:, pl.ds(S - 1 - t, 1), Hp:2 * Hp] = h_b[:, None, :]

    # torch.sum(encoder_hidden[i], axis=0) over the 2 directions.
    hsum_ref[...] = h_f + h_b
    csum_ref[...] = c_f + c_b


def _attention_and_cell(h, c, x_t, enc, wq, wx, wc, whh, bd, Hp):
    """Shared decoder step: Luong attention + LSTM cell. Returns (h_new, c_new)."""
    h_bf = h.astype(jnp.bfloat16)

    # Luong "general" attention: batched MXU matmuls instead of bcast-mul + reduce.
    q = jnp.dot(h_bf, wq, preferred_element_type=jnp.float32)          # (B, 2Hp)
    scores = jnp.einsum('bd,bsd->bs', q, enc,
                        preferred_element_type=jnp.float32)            # (B, S)
    scores = scores - jnp.max(scores, axis=-1, keepdims=True)
    p = jnp.exp(scores)
    attn = p * pl.reciprocal(jnp.sum(p, axis=-1, keepdims=True), approx=True)
    ctx = jnp.einsum('bs,bsd->bd', attn, enc,
                     preferred_element_type=jnp.float32)               # (B, 2Hp)

    # LSTM cell on [embedding ; context] (the concat is folded into two matmuls).
    g = (jnp.dot(x_t, wx, preferred_element_type=jnp.float32)
         + jnp.dot(ctx.astype(jnp.bfloat16), wc, preferred_element_type=jnp.float32)
         + jnp.dot(h_bf, whh, preferred_element_type=jnp.float32)
         + bd)                                                         # (B, 4*Hp)
    i = jax.nn.sigmoid(g[:, 0:Hp])
    f = jax.nn.sigmoid(g[:, Hp:2 * Hp])
    gg = jnp.tanh(g[:, 2 * Hp:3 * Hp])
    o = jax.nn.sigmoid(g[:, 3 * Hp:4 * Hp])
    c_new = f * c + i * gg
    h_new = o * jnp.tanh(c_new)
    return h_new, c_new


def _log_softmax_store(h_new, wout, bout, out_ref, t):
    logits = jnp.dot(h_new.astype(jnp.bfloat16), wout,
                     preferred_element_type=jnp.float32) + bout        # (B, Vp)
    mx = jnp.max(logits, axis=-1, keepdims=True)
    ex = jnp.exp(logits - mx)
    logp = (logits - mx) - jnp.log(jnp.sum(ex, axis=-1, keepdims=True))
    out_ref[:, pl.ds(t, 1), :] = logp[:, None, :]
    return logits, mx


# ----------------------------------------------------------------------------------
# Kernel 2a: attention decoder, teacher forcing (decoder inputs precomputed outside;
# no one-hot embedding matmul and no argmax inside the kernel).
# ----------------------------------------------------------------------------------
def decoder_tf_kernel(enc_ref, xemb_ref, h0_ref, c0_ref,
                      wq_ref, wx_ref, wc_ref, whh_ref, bd_ref, wout_ref, bout_ref,
                      out_ref, h_ref, c_ref):
    Hp = h0_ref.shape[1]
    T = out_ref.shape[1]

    enc = enc_ref[...]                                # (B, S, 2*Hp) f32
    wq = wq_ref[...]
    wx, wc, whh = wx_ref[...], wc_ref[...], whh_ref[...]
    bd = bd_ref[...]
    wout, bout = wout_ref[...], bout_ref[...]

    def step(t, carry):
        h, c = carry
        x_t = xemb_ref[:, pl.ds(t, 1), :][:, 0, :]    # (B, Ep) bf16, teacher-forced
        h_new, c_new = _attention_and_cell(h, c, x_t, enc, wq, wx, wc, whh, bd, Hp)
        _log_softmax_store(h_new, wout, bout, out_ref, t)
        return h_new, c_new

    h, c = jax.lax.fori_loop(0, T, step, (h0_ref[...], c0_ref[...]))
    h_ref[...] = h
    c_ref[...] = c


# ----------------------------------------------------------------------------------
# Kernel 2b: attention decoder, greedy decoding (argmax feeds the next step).
# ----------------------------------------------------------------------------------
def decoder_greedy_kernel(enc_ref, x0_ref, h0_ref, c0_ref, emb_ref,
                          wq_ref, wx_ref, wc_ref, whh_ref, bd_ref, wout_ref, bout_ref,
                          out_ref, h_ref, c_ref):
    B = enc_ref.shape[0]
    Hp = h0_ref.shape[1]
    T = out_ref.shape[1]
    Vp = wout_ref.shape[1]

    enc = enc_ref[...]
    emb_tab = emb_ref[...]                            # (Vp, Ep) bf16
    wq = wq_ref[...]
    wx, wc, whh = wx_ref[...], wc_ref[...], whh_ref[...]
    bd = bd_ref[...]
    wout, bout = wout_ref[...], bout_ref[...]

    vid_f = jax.lax.broadcasted_iota(jnp.int32, (B, Vp), 1).astype(jnp.float32)

    def step(t, carry):
        h, c, x_t = carry
        h_new, c_new = _attention_and_cell(h, c, x_t, enc, wq, wx, wc, whh, bd, Hp)
        logits, mx = _log_softmax_store(h_new, wout, bout, out_ref, t)

        # Greedy argmax (first maximal index) + embedding for the next step.
        # TODO(synk): a dynamic-slice row gather on emb_ref would avoid this
        # full-vocab one-hot matmul; kept vectorized to avoid vreg->sreg transfers.
        pred = jnp.min(jnp.where(logits >= mx, vid_f, float(Vp)),
                       axis=-1, keepdims=True)                         # (B, 1)
        onehot = (vid_f == pred).astype(jnp.bfloat16)                  # (B, Vp)
        x_next = jnp.dot(onehot, emb_tab,
                         preferred_element_type=jnp.float32).astype(jnp.bfloat16)
        return h_new, c_new, x_next

    h, c, _ = jax.lax.fori_loop(0, T, step, (h0_ref[...], c0_ref[...], x0_ref[...]))
    h_ref[...] = h
    c_ref[...] = c


# ----------------------------------------------------------------------------------
# Parameter preparation: pad every feature dim to a 128-lane multiple (per-gate for
# the 4H LSTM gate blocks), cast weight matrices / embedding tables to bf16, keep
# biases f32, and mask padded vocab logits with a large negative bias.
# ----------------------------------------------------------------------------------
def _pad2(a, rows, cols):
    return jnp.pad(a, ((0, rows - a.shape[0]), (0, cols - a.shape[1])))


def _pad_gate_cols(w, H, Hp):
    parts = [w[:, k * H:(k + 1) * H] for k in range(4)]
    return jnp.concatenate([jnp.pad(p, ((0, 0), (0, Hp - H))) for p in parts], axis=1)


def prepare_params(params, V, E, H):
    Ep, Hp, Vp = _rup(E), _rup(H), _rup(V)
    bf16 = jnp.bfloat16

    def enc_weights(wi, wh, b):
        wi_p = _pad2(_pad_gate_cols(wi, H, Hp), Ep, 4 * Hp).astype(bf16)
        wh_p = _pad2(_pad_gate_cols(wh, H, Hp), Hp, 4 * Hp).astype(bf16)
        b_p = _pad_gate_cols(b, H, Hp).astype(jnp.float32)
        return wi_p, wh_p, b_p

    wif, whf, bfw = enc_weights(params["W_ih_f"], params["W_hh_f"], params["b_f"])
    wib, whb, bbw = enc_weights(params["W_ih_b"], params["W_hh_b"], params["b_b"])

    # Decoder LSTM input weights: rows are [emb(E) | ctx_fwd(H) | ctx_bwd(H)].
    w = _pad_gate_cols(params["W_ih_d"], H, Hp)                 # (E+2H, 4Hp)
    w_x = _pad2(w[0:E], Ep, 4 * Hp).astype(bf16)                # (Ep, 4Hp)
    w_cf = jnp.pad(w[E:E + H], ((0, Hp - H), (0, 0)))
    w_cb = jnp.pad(w[E + H:E + 2 * H], ((0, Hp - H), (0, 0)))
    w_c = jnp.concatenate([w_cf, w_cb], axis=0).astype(bf16)    # (2Hp, 4Hp)
    whh_d = _pad2(_pad_gate_cols(params["W_hh_d"], H, Hp), Hp, 4 * Hp).astype(bf16)
    b_d = _pad_gate_cols(params["b_d"], H, Hp).astype(jnp.float32)

    # Attention projection W_q: (H, 2H) with columns [fwd | bwd] -> (Hp, 2Hp).
    wq = params["W_q"]
    wq_f = jnp.pad(wq[:, 0:H], ((0, Hp - H), (0, Hp - H)))
    wq_b = jnp.pad(wq[:, H:2 * H], ((0, Hp - H), (0, Hp - H)))
    w_q = jnp.concatenate([wq_f, wq_b], axis=1).astype(bf16)

    w_out = _pad2(params["W_out"], Hp, Vp).astype(bf16)         # (Hp, Vp)
    b_out = jnp.pad(params["b_out"], ((0, 0), (0, Vp - V)),
                    constant_values=-1e30).astype(jnp.float32)  # padded logits -> ~-inf

    emb_enc = jnp.pad(params["emb_enc"], ((0, 0), (0, Ep - E))).astype(bf16)
    emb_dec = _pad2(params["emb_dec"], Vp, Ep).astype(bf16)

    return dict(Ep=Ep, Hp=Hp, Vp=Vp, V=V, H=H,
                emb_enc=emb_enc, W_ih_f=wif, W_hh_f=whf, b_f=bfw,
                W_ih_b=wib, W_hh_b=whb, b_b=bbw,
                emb_dec=emb_dec, W_q=w_q, W_x_d=w_x, W_c_d=w_c, W_hh_d=whh_d,
                b_d=b_d, W_out=w_out, b_out=b_out)


def _vmem_limit(arrs):
    need = sum(math.prod(a.shape) * jnp.dtype(a.dtype).itemsize for a in arrs)
    return int(min(max(2 * need + (4 << 20), 16 << 20), 32 << 20))


# ----------------------------------------------------------------------------------
# Wrapper = lstm_attn_model.forward
# ----------------------------------------------------------------------------------
def lstm_attn_forward(prep, source, target, tf_prob):
    B, S = source.shape
    T = target.shape[1]
    Hp, Vp, V, H = prep["Hp"], prep["Vp"], prep["V"], prep["H"]

    vmem = pl.BlockSpec(memory_space=pltpu.MemorySpace.VMEM)

    # Glue: encoder embedding gather (nn.Embedding); table already bf16 / E-padded.
    x_emb = jnp.take(prep["emb_enc"], source, axis=0)            # (B, S, Ep)

    enc_inputs = (x_emb, prep["W_ih_f"], prep["W_hh_f"], prep["b_f"],
                  prep["W_ih_b"], prep["W_hh_b"], prep["b_b"])
    enc_outs = (jax.ShapeDtypeStruct((B, S, 2 * Hp), jnp.float32),
                jax.ShapeDtypeStruct((B, Hp), jnp.float32),
                jax.ShapeDtypeStruct((B, Hp), jnp.float32))
    enc_out, h0, c0 = pl.pallas_call(
        encoder_kernel,
        out_shape=enc_outs,
        in_specs=[vmem] * len(enc_inputs),
        out_specs=(vmem, vmem, vmem),
        compiler_params=pltpu.CompilerParams(
            vmem_limit_bytes=_vmem_limit(enc_inputs + enc_outs)),
    )(*enc_inputs)

    # TODO(synk): PyTorch draws random.random() < tf_prob each call; here teacher
    # forcing is a deterministic compile-time threshold on tf_prob.
    use_tf = float(tf_prob) >= 0.5

    dec_outs = (jax.ShapeDtypeStruct((B, T, Vp), jnp.float32),
                jax.ShapeDtypeStruct((B, Hp), jnp.float32),
                jax.ShapeDtypeStruct((B, Hp), jnp.float32))
    common_w = (prep["W_q"], prep["W_x_d"], prep["W_c_d"], prep["W_hh_d"],
                prep["b_d"], prep["W_out"], prep["b_out"])

    if use_tf:
        # Teacher forcing: all decoder-input embeddings are known up front.
        xemb_all = jnp.take(prep["emb_dec"], target, axis=0)     # (B, T, Ep) bf16
        dec_inputs = (enc_out, xemb_all, h0, c0) + common_w
        kernel = decoder_tf_kernel
    else:
        # Greedy decoding: only the first input (target[:, 0] / SOS) is known.
        x0 = jnp.take(prep["emb_dec"], target[:, 0], axis=0)     # (B, Ep) bf16
        dec_inputs = (enc_out, x0, h0, c0, prep["emb_dec"]) + common_w
        kernel = decoder_greedy_kernel

    dec_out, h_n, c_n = pl.pallas_call(
        kernel,
        out_shape=dec_outs,
        in_specs=[vmem] * len(dec_inputs),
        out_specs=(vmem, vmem, vmem),
        compiler_params=pltpu.CompilerParams(
            vmem_limit_bytes=_vmem_limit(dec_inputs + dec_outs)),
    )(*dec_inputs)

    decoder_outputs = dec_out[:, :, :V]                          # (B, T, V) log-probs
    decoder_hidden = (h_n[None, :, :H], c_n[None, :, :H])        # each (1, B, H)
    return decoder_outputs, decoder_hidden


# ----------------------------------------------------------------------------------
# Deterministic parameter init (synthetic; shapes follow the module __init__).
# ----------------------------------------------------------------------------------
def init_params(key, V, E, H):
    ks = jax.random.split(key, 14)
    sH = 1.0 / math.sqrt(H)

    def unif(k, shape):
        return jax.random.uniform(k, shape, jnp.float32, -sH, sH)

    return {
        # EncoderRNN
        "emb_enc": jax.random.normal(ks[0], (V, E), jnp.float32),
        "W_ih_f": unif(ks[1], (E, 4 * H)),
        "W_hh_f": unif(ks[2], (H, 4 * H)),
        "b_f":    unif(ks[3], (1, 4 * H)),
        "W_ih_b": unif(ks[4], (E, 4 * H)),
        "W_hh_b": unif(ks[5], (H, 4 * H)),
        "b_b":    unif(ks[6], (1, 4 * H)),
        # AttnDecoderRNN
        "emb_dec": jax.random.normal(ks[7], (V, E), jnp.float32),
        "W_q":    unif(ks[8], (H, 2 * H)),
        "W_ih_d": unif(ks[9], (E + 2 * H, 4 * H)),
        "W_hh_d": unif(ks[10], (H, 4 * H)),
        "b_d":    unif(ks[11], (1, 4 * H)),
        "W_out":  unif(ks[12], (H, V)),
        "b_out":  unif(ks[13], (1, V)),
    }


if __name__ == "__main__":
    # Small shapes consistent with the module (real model: E=100, H=75, V=26952).
    B, S, T = 2, 8, 8
    V, E, H = 256, 32, 32

    key = jax.random.PRNGKey(0)
    params = init_params(key, V, E, H)
    prep = prepare_params(params, V, E, H)

    k_src, k_tgt = jax.random.split(jax.random.fold_in(key, 123))
    source = jax.random.randint(k_src, (B, S), 0, V, dtype=jnp.int32)
    target = jax.random.randint(k_tgt, (B, T), 0, V, dtype=jnp.int32)

    # Teacher-forcing path (tf_prob = 1.0) and greedy path (tf_prob = 0.0).
    out_tf, hid_tf = lstm_attn_forward(prep, source, target, tf_prob=1.0)
    out_gr, hid_gr = lstm_attn_forward(prep, source, target, tf_prob=0.0)
    jax.block_until_ready((out_tf, out_gr) + hid_tf + hid_gr)

    for out, hid in ((out_tf, hid_tf), (out_gr, hid_gr)):
        assert out.shape == (B, T, V)
        assert hid[0].shape == (1, B, H) and hid[1].shape == (1, B, H)
        assert bool(jnp.all(jnp.isfinite(out)))
        # log_softmax sanity: probabilities over the real vocab sum to ~1.
        prob_sum = jnp.sum(jnp.exp(out), axis=-1)
        assert float(jnp.max(jnp.abs(prob_sum - 1.0))) < 1e-2

    print("KERNEL_OK")
</pallas_src>

<mosaic_0001>
module attributes {stable_mosaic.version = 11 : i64} {
  func.func @encoder_kernel(%arg0: memref<2x8x128xbf16, #tpu.memory_space<vmem>>, %arg1: memref<128x512xbf16, #tpu.memory_space<vmem>>, %arg2: memref<128x512xbf16, #tpu.memory_space<vmem>>, %arg3: memref<1x512xf32, #tpu.memory_space<vmem>>, %arg4: memref<128x512xbf16, #tpu.memory_space<vmem>>, %arg5: memref<128x512xbf16, #tpu.memory_space<vmem>>, %arg6: memref<1x512xf32, #tpu.memory_space<vmem>>, %arg7: memref<2x8x256xf32, #tpu.memory_space<vmem>>, %arg8: memref<2x128xf32, #tpu.memory_space<vmem>>, %arg9: memref<2x128xf32, #tpu.memory_space<vmem>>) attributes {dimension_semantics = [], scalar_prefetch = 0 : i64, scratch_operands = 0 : i64, tpu.core_type = #tpu.core_type<tc>} {
    %c0 = arith.constant 0 : index
    %c0_0 = arith.constant 0 : index
    %c0_1 = arith.constant 0 : index
    %0 = vector.load %arg0[%c0, %c0_0, %c0_1] : memref<2x8x128xbf16, #tpu.memory_space<vmem>>, vector<2x8x128xbf16>
    %c0_2 = arith.constant 0 : index
    %c0_3 = arith.constant 0 : index
    %1 = vector.load %arg1[%c0_2, %c0_3] : memref<128x512xbf16, #tpu.memory_space<vmem>>, vector<128x512xbf16>
    %c0_4 = arith.constant 0 : index
    %c0_5 = arith.constant 0 : index
    %2 = vector.load %arg2[%c0_4, %c0_5] : memref<128x512xbf16, #tpu.memory_space<vmem>>, vector<128x512xbf16>
    %c0_6 = arith.constant 0 : index
    %c0_7 = arith.constant 0 : index
    %3 = vector.load %arg3[%c0_6, %c0_7] : memref<1x512xf32, #tpu.memory_space<vmem>>, vector<1x512xf32>
    %c0_8 = arith.constant 0 : index
    %c0_9 = arith.constant 0 : index
    %4 = vector.load %arg4[%c0_8, %c0_9] : memref<128x512xbf16, #tpu.memory_space<vmem>>, vector<128x512xbf16>
    %c0_10 = arith.constant 0 : index
    %c0_11 = arith.constant 0 : index
    %5 = vector.load %arg5[%c0_10, %c0_11] : memref<128x512xbf16, #tpu.memory_space<vmem>>, vector<128x512xbf16>
    %c0_12 = arith.constant 0 : index
    %c0_13 = arith.constant 0 : index
    %6 = vector.load %arg6[%c0_12, %c0_13] : memref<1x512xf32, #tpu.memory_space<vmem>>, vector<1x512xf32>
    %cst = arith.constant 0.000000e+00 : f32
    %7 = vector.broadcast %cst : f32 to vector<2x128xf32>
    %8 = vector.extract_strided_slice %0 {offsets = [0, 0, 0], sizes = [2, 1, 128], strides = [1, 1, 1]} : vector<2x8x128xbf16> to vector<2x1x128xbf16>
    %9 = vector.shape_cast %8 : vector<2x1x128xbf16> to vector<2x128xbf16>
    %cst_14 = arith.constant dense<0.000000e+00> : vector<2x512xf32>
    %10 = tpu.matmul %9, %1, %cst_14 {dimension_numbers = #tpu.dot_dimension_numbers<[1], [0], [0], [1], [0, 0, 1, 1], [], []>} : vector<2x128xbf16>, vector<128x512xbf16>, vector<2x512xf32> -> vector<2x512xf32>
    %11 = arith.truncf %7 : vector<2x128xf32> to vector<2x128xbf16>
    %cst_15 = arith.constant dense<0.000000e+00> : vector<2x512xf32>
    %12 = tpu.matmul %11, %2, %cst_15 {dimension_numbers = #tpu.dot_dimension_numbers<[1], [0], [0], [1], [0, 0, 1, 1], [], []>} : vector<2x128xbf16>, vector<128x512xbf16>, vector<2x512xf32> -> vector<2x512xf32>
    %13 = arith.addf %10, %12 : vector<2x512xf32>
    %14 = vector.broadcast %3 : vector<1x512xf32> to vector<2x512xf32>
    %15 = arith.addf %13, %14 : vector<2x512xf32>
    %16 = vector.extract_strided_slice %15 {offsets = [0, 0], sizes = [2, 128], strides = [1, 1]} : vector<2x512xf32> to vector<2x128xf32>
    %17 = arith.negf %16 : vector<2x128xf32>
    %18 = math.exp %17 : vector<2x128xf32>
    %cst_16 = arith.constant 1.000000e+00 : f32
    %19 = vector.broadcast %cst_16 : f32 to vector<2x128xf32>
    %20 = arith.addf %19, %18 : vector<2x128xf32>
    %21 = arith.divf %19, %20 : vector<2x128xf32>
    %22 = vector.extract_strided_slice %15 {offsets = [0, 128], sizes = [2, 128], strides = [1, 1]} : vector<2x512xf32> to vector<2x128xf32>
    %23 = arith.negf %22 : vector<2x128xf32>
    %24 = math.exp %23 : vector<2x128xf32>
    %cst_17 = arith.constant 1.000000e+00 : f32
    %25 = vector.broadcast %cst_17 : f32 to vector<2x128xf32>
    %26 = arith.addf %25, %24 : vector<2x128xf32>
    %27 = arith.divf %25, %26 : vector<2x128xf32>
    %28 = vector.extract_strided_slice %15 {offsets = [0, 256], sizes = [2, 128], strides = [1, 1]} : vector<2x512xf32> to vector<2x128xf32>
    %29 = math.tanh %28 : vector<2x128xf32>
    %30 = vector.extract_strided_slice %15 {offsets = [0, 384], sizes = [2, 128], strides = [1, 1]} : vector<2x512xf32> to vector<2x128xf32>
    %31 = arith.negf %30 : vector<2x128xf32>
    %32 = math.exp %31 : vector<2x128xf32>
    %cst_18 = arith.constant 1.000000e+00 : f32
    %33 = vector.broadcast %cst_18 : f32 to vector<2x128xf32>
    %34 = arith.addf %33, %32 : vector<2x128xf32>
    %35 = arith.divf %33, %34 : vector<2x128xf32>
    %36 = arith.mulf %27, %7 : vector<2x128xf32>
    %37 = arith.mulf %21, %29 : vector<2x128xf32>
    %38 = arith.addf %36, %37 : vector<2x128xf32>
    %39 = math.tanh %38 : vector<2x128xf32>
    %40 = arith.mulf %35, %39 : vector<2x128xf32>
    %41 = vector.extract_strided_slice %0 {offsets = [0, 7, 0], sizes = [2, 1, 128], strides = [1, 1, 1]} : vector<2x8x128xbf16> to vector<2x1x128xbf16>
    %42 = vector.shape_cast %41 : vector<2x1x128xbf16> to vector<2x128xbf16>
    %cst_19 = arith.constant dense<0.000000e+00> : vector<2x512xf32>
    %43 = tpu.matmul %42, %4, %cst_19 {dimension_numbers = #tpu.dot_dimension_numbers<[1], [0], [0], [1], [0, 0, 1, 1], [], []>} : vector<2x128xbf16>, vector<128x512xbf16>, vector<2x512xf32> -> vector<2x512xf32>
    %44 = arith.truncf %7 : vector<2x128xf32> to vector<2x128xbf16>
    %cst_20 = arith.constant dense<0.000000e+00> : vector<2x512xf32>
    %45 = tpu.matmul %44, %5, %cst_20 {dimension_numbers = #tpu.dot_dimension_numbers<[1], [0], [0], [1], [0, 0, 1, 1], [], []>} : vector<2x128xbf16>, vector<128x512xbf16>, vector<2x512xf32> -> vector<2x512xf32>
    %46 = arith.addf %43, %45 : vector<2x512xf32>
    %47 = vector.broadcast %6 : vector<1x512xf32> to vector<2x512xf32>
    %48 = arith.addf %46, %47 : vector<2x512xf32>
    %49 = vector.extract_strided_slice %48 {offsets = [0, 0], sizes = [2, 128], strides = [1, 1]} : vector<2x512xf32> to vector<2x128xf32>
    %50 = arith.negf %49 : vector<2x128xf32>
    %51 = math.exp %50 : vector<2x128xf32>
    %cst_21 = arith.constant 1.000000e+00 : f32
    %52 = vector.broadcast %cst_21 : f32 to vector<2x128xf32>
    %53 = arith.addf %52, %51 : vector<2x128xf32>
    %54 = arith.divf %52, %53 : vector<2x128xf32>
    %55 = vector.extract_strided_slice %48 {offsets = [0, 128], sizes = [2, 128], strides = [1, 1]} : vector<2x512xf32> to vector<2x128xf32>
    %56 = arith.negf %55 : vector<2x128xf32>
    %57 = math.exp %56 : vector<2x128xf32>
    %cst_22 = arith.constant 1.000000e+00 : f32
    %58 = vector.broadcast %cst_22 : f32 to vector<2x128xf32>
    %59 = arith.addf %58, %57 : vector<2x128xf32>
    %60 = arith.divf %58, %59 : vector<2x128xf32>
    %61 = vector.extract_strided_slice %48 {offsets = [0, 256], sizes = [2, 128], strides = [1, 1]} : vector<2x512xf32> to vector<2x128xf32>
    %62 = math.tanh %61 : vector<2x128xf32>
    %63 = vector.extract_strided_slice %48 {offsets = [0, 384], sizes = [2, 128], strides = [1, 1]} : vector<2x512xf32> to vector<2x128xf32>
    %64 = arith.negf %63 : vector<2x128xf32>
    %65 = math.exp %64 : vector<2x128xf32>
    %cst_23 = arith.constant 1.000000e+00 : f32
    %66 = vector.broadcast %cst_23 : f32 to vector<2x128xf32>
    %67 = arith.addf %66, %65 : vector<2x128xf32>
    %68 = arith.divf %66, %67 : vector<2x128xf32>
    %69 = arith.mulf %60, %7 : vector<2x128xf32>
    %70 = arith.mulf %54, %62 : vector<2x128xf32>
    %71 = arith.addf %69, %70 : vector<2x128xf32>
    %72 = math.tanh %71 : vector<2x128xf32>
    %73 = arith.mulf %68, %72 : vector<2x128xf32>
    %74 = vector.shape_cast %40 : vector<2x128xf32> to vector<2x1x128xf32>
    %c0_24 = arith.constant 0 : index
    %c0_25 = arith.constant 0 : index
    %c0_26 = arith.constant 0 : index
    %75 = vector.load %arg7[%c0_24, %c0_25, %c0_26] : memref<2x8x256xf32, #tpu.memory_space<vmem>>, vector<2x1x128xf32>
    tpu.vector_store %arg7[%c0_24, %c0_25, %c0_26], %74 {strides = array<i32>} : memref<2x8x256xf32, #tpu.memory_space<vmem>>, vector<2x1x128xf32>,
    %76 = vector.shape_cast %73 : vector<2x128xf32> to vector<2x1x128xf32>
    %c0_27 = arith.constant 0 : index
    %c7 = arith.constant 7 : index
    %c128 = arith.constant 128 : index
    %77 = vector.load %arg7[%c0_27, %c7, %c128] : memref<2x8x256xf32, #tpu.memory_space<vmem>>, vector<2x1x128xf32>
    tpu.vector_store %arg7[%c0_27, %c7, %c128], %76 {strides = array<i32>} : memref<2x8x256xf32, #tpu.memory_space<vmem>>, vector<2x1x128xf32>,
    %78 = vector.extract_strided_slice %0 {offsets = [0, 1, 0], sizes = [2, 1, 128], strides = [1, 1, 1]} : vector<2x8x128xbf16> to vector<2x1x128xbf16>
    %79 = vector.shape_cast %78 : vector<2x1x128xbf16> to vector<2x128xbf16>
    %cst_28 = arith.constant dense<0.000000e+00> : vector<2x512xf32>
    %80 = tpu.matmul %79, %1, %cst_28 {dimension_numbers = #tpu.dot_dimension_numbers<[1], [0], [0], [1], [0, 0, 1, 1], [], []>} : vector<2x128xbf16>, vector<128x512xbf16>, vector<2x512xf32> -> vector<2x512xf32>
    %81 = arith.truncf %40 : vector<2x128xf32> to vector<2x128xbf16>
    %cst_29 = arith.constant dense<0.000000e+00> : vector<2x512xf32>
    %82 = tpu.matmul %81, %2, %cst_29 {dimension_numbers = #tpu.dot_dimension_numbers<[1], [0], [0], [1], [0, 0, 1, 1], [], []>} : vector<2x128xbf16>, vector<128x512xbf16>, vector<2x512xf32> -> vector<2x512xf32>
    %83 = arith.addf %80, %82 : vector<2x512xf32>
    %84 = vector.broadcast %3 : vector<1x512xf32> to vector<2x512xf32>
    %85 = arith.addf %83, %84 : vector<2x512xf32>
    %86 = vector.extract_strided_slice %85 {offsets = [0, 0], sizes = [2, 128], strides = [1, 1]} : vector<2x512xf32> to vector<2x128xf32>
    %87 = arith.negf %86 : vector<2x128xf32>
    %88 = math.exp %87 : vector<2x128xf32>
    %cst_30 = arith.constant 1.000000e+00 : f32
    %89 = vector.broadcast %cst_30 : f32 to vector<2x128xf32>
    %90 = arith.addf %89, %88 : vector<2x128xf32>
    %91 = arith.divf %89, %90 : vector<2x128xf32>
    %92 = vector.extract_strided_slice %85 {offsets = [0, 128], sizes = [2, 128], strides = [1, 1]} : vector<2x512xf32> to vector<2x128xf32>
    %93 = arith.negf %92 : vector<2x128xf32>
    %94 = math.exp %93 : vector<2x128xf32>
    %cst_31 = arith.constant 1.000000e+00 : f32
    %95 = vector.broadcast %cst_31 : f32 to vector<2x128xf32>
    %96 = arith.addf %95, %94 : vector<2x128xf32>
    %97 = arith.divf %95, %96 : vector<2x128xf32>
    %98 = vector.extract_strided_slice %85 {offsets = [0, 256], sizes = [2, 128], strides = [1, 1]} : vector<2x512xf32> to vector<2x128xf32>
    %99 = math.tanh %98 : vector<2x128xf32>
    %100 = vector.extract_strided_slice %85 {offsets = [0, 384], sizes = [2, 128], strides = [1, 1]} : vector<2x512xf32> to vector<2x128xf32>
    %101 = arith.negf %100 : vector<2x128xf32>
    %102 = math.exp %101 : vector<2x128xf32>
    %cst_32 = arith.constant 1.000000e+00 : f32
    %103 = vector.broadcast %cst_32 : f32 to vector<2x128xf32>
    %104 = arith.addf %103, %102 : vector<2x128xf32>
    %105 = arith.divf %103, %104 : vector<2x128xf32>
    %106 = arith.mulf %97, %38 : vector<2x128xf32>
    %107 = arith.mulf %91, %99 : vector<2x128xf32>
    %108 = arith.addf %106, %107 : vector<2x128xf32>
    %109 = math.tanh %108 : vector<2x128xf32>
    %110 = arith.mulf %105, %109 : vector<2x128xf32>
    %111 = vector.extract_strided_slice %0 {offsets = [0, 6, 0], sizes = [2, 1, 128], strides = [1, 1, 1]} : vector<2x8x128xbf16> to vector<2x1x128xbf16>
    %112 = vector.shape_cast %111 : vector<2x1x128xbf16> to vector<2x128xbf16>
    %cst_33 = arith.constant dense<0.000000e+00> : vector<2x512xf32>
    %113 = tpu.matmul %112, %4, %cst_33 {dimension_numbers = #tpu.dot_dimension_numbers<[1], [0], [0], [1], [0, 0, 1, 1], [], []>} : vector<2x128xbf16>, vector<128x512xbf16>, vector<2x512xf32> -> vector<2x512xf32>
    %114 = arith.truncf %73 : vector<2x128xf32> to vector<2x128xbf16>
    %cst_34 = arith.constant dense<0.000000e+00> : vector<2x512xf32>
    %115 = tpu.matmul %114, %5, %cst_34 {dimension_numbers = #tpu.dot_dimension_numbers<[1], [0], [0], [1], [0, 0, 1, 1], [], []>} : vector<2x128xbf16>, vector<128x512xbf16>, vector<2x512xf32> -> vector<2x512xf32>
    %116 = arith.addf %113, %115 : vector<2x512xf32>
    %117 = vector.broadcast %6 : vector<1x512xf32> to vector<2x512xf32>
    %118 = arith.addf %116, %117 : vector<2x512xf32>
    %119 = vector.extract_strided_slice %118 {offsets = [0, 0], sizes = [2, 128], strides = [1, 1]} : vector<2x512xf32> to vector<2x128xf32>
    %120 = arith.negf %119 : vector<2x128xf32>
    %121 = math.exp %120 : vector<2x128xf32>
    %cst_35 = arith.constant 1.000000e+00 : f32
    %122 = vector.broadcast %cst_35 : f32 to vector<2x128xf32>
    %123 = arith.addf %122, %121 : vector<2x128xf32>
    %124 = arith.divf %122, %123 : vector<2x128xf32>
    %125 = vector.extract_strided_slice %118 {offsets = [0, 128], sizes = [2, 128], strides = [1, 1]} : vector<2x512xf32> to vector<2x128xf32>
    %126 = arith.negf %125 : vector<2x128xf32>
    %127 = math.exp %126 : vector<2x128xf32>
    %cst_36 = arith.constant 1.000000e+00 : f32
    %128 = vector.broadcast %cst_36 : f32 to vector<2x128xf32>
    %129 = arith.addf %128, %127 : vector<2x128xf32>
    %130 = arith.divf %128, %129 : vector<2x128xf32>
    %131 = vector.extract_strided_slice %118 {offsets = [0, 256], sizes = [2, 128], strides = [1, 1]} : vector<2x512xf32> to vector<2x128xf32>
    %132 = math.tanh %131 : vector<2x128xf32>
    %133 = vector.extract_strided_slice %118 {offsets = [0, 384], sizes = [2, 128], strides = [1, 1]} : vector<2x512xf32> to vector<2x128xf32>
    %134 = arith.negf %133 : vector<2x128xf32>
    %135 = math.exp %134 : vector<2x128xf32>
    %cst_37 = arith.constant 1.000000e+00 : f32
    %136 = vector.broadcast %cst_37 : f32 to vector<2x128xf32>
    %137 = arith.addf %136, %135 : vector<2x128xf32>
    %138 = arith.divf %136, %137 : vector<2x128xf32>
    %139 = arith.mulf %130, %71 : vector<2x128xf32>
    %140 = arith.mulf %124, %132 : vector<2x128xf32>
    %141 = arith.addf %139, %140 : vector<2x128xf32>
    %142 = math.tanh %141 : vector<2x128xf32>
    %143 = arith.mulf %138, %142 : vector<2x128xf32>
    %144 = vector.shape_cast %110 : vector<2x128xf32> to vector<2x1x128xf32>
    %c0_38 = arith.constant 0 : index
    %c1 = arith.constant 1 : index
    %c0_39 = arith.constant 0 : index
    %145 = vector.load %arg7[%c0_38, %c1, %c0_39] : memref<2x8x256xf32, #tpu.memory_space<vmem>>, vector<2x1x128xf32>
    tpu.vector_store %arg7[%c0_38, %c1, %c0_39], %144 {strides = array<i32>} : memref<2x8x256xf32, #tpu.memory_space<vmem>>, vector<2x1x128xf32>,
    %146 = vector.shape_cast %143 : vector<2x128xf32> to vector<2x1x128xf32>
    %c0_40 = arith.constant 0 : index
    %c6 = arith.constant 6 : index
    %c128_41 = arith.constant 128 : index
    %147 = vector.load %arg7[%c0_40, %c6, %c128_41] : memref<2x8x256xf32, #tpu.memory_space<vmem>>, vector<2x1x128xf32>
    tpu.vector_store %arg7[%c0_40, %c6, %c128_41], %146 {strides = array<i32>} : memref<2x8x256xf32, #tpu.memory_space<vmem>>, vector<2x1x128xf32>,
    %148 = vector.extract_strided_slice %0 {offsets = [0, 2, 0], sizes = [2, 1, 128], strides = [1, 1, 1]} : vector<2x8x128xbf16> to vector<2x1x128xbf16>
    %149 = vector.shape_cast %148 : vector<2x1x128xbf16> to vector<2x128xbf16>
    %cst_42 = arith.constant dense<0.000000e+00> : vector<2x512xf32>
    %150 = tpu.matmul %149, %1, %cst_42 {dimension_numbers = #tpu.dot_dimension_numbers<[1], [0], [0], [1], [0, 0, 1, 1], [], []>} : vector<2x128xbf16>, vector<128x512xbf16>, vector<2x512xf32> -> vector<2x512xf32>
    %151 = arith.truncf %110 : vector<2x128xf32> to vector<2x128xbf16>
    %cst_43 = arith.constant dense<0.000000e+00> : vector<2x512xf32>
    %152 = tpu.matmul %151, %2, %cst_43 {dimension_numbers = #tpu.dot_dimension_numbers<[1], [0], [0], [1], [0, 0, 1, 1], [], []>} : vector<2x128xbf16>, vector<128x512xbf16>, vector<2x512xf32> -> vector<2x512xf32>
    %153 = arith.addf %150, %152 : vector<2x512xf32>
    %154 = vector.broadcast %3 : vector<1x512xf32> to vector<2x512xf32>
    %155 = arith.addf %153, %154 : vector<2x512xf32>
    %156 = vector.extract_strided_slice %155 {offsets = [0, 0], sizes = [2, 128], strides = [1, 1]} : vector<2x512xf32> to vector<2x128xf32>
    %157 = arith.negf %156 : vector<2x128xf32>
    %158 = math.exp %157 : vector<2x128xf32>
    %cst_44 = arith.constant 1.000000e+00 : f32
    %159 = vector.broadcast %cst_44 : f32 to vector<2x128xf32>
    %160 = arith.addf %159, %158 : vector<2x128xf32>
    %161 = arith.divf %159, %160 : vector<2x128xf32>
    %162 = vector.extract_strided_slice %155 {offsets = [0, 128], sizes = [2, 128], strides = [1, 1]} : vector<2x512xf32> to vector<2x128xf32>
    %163 = arith.negf %162 : vector<2x128xf32>
    %164 = math.exp %163 : vector<2x128xf32>
    %cst_45 = arith.constant 1.000000e+00 : f32
    %165 = vector.broadcast %cst_45 : f32 to vector<2x128xf32>
    %166 = arith.addf %165, %164 : vector<2x128xf32>
    %167 = arith.divf %165, %166 : vector<2x128xf32>
    %168 = vector.extract_strided_slice %155 {offsets = [0, 256], sizes = [2, 128], strides = [1, 1]} : vector<2x512xf32> to vector<2x128xf32>
    %169 = math.tanh %168 : vector<2x128xf32>
    %170 = vector.extract_strided_slice %155 {offsets = [0, 384], sizes = [2, 128], strides = [1, 1]} : vector<2x512xf32> to vector<2x128xf32>
    %171 = arith.negf %170 : vector<2x128xf32>
    %172 = math.exp %171 : vector<2x128xf32>
    %cst_46 = arith.constant 1.000000e+00 : f32
    %173 = vector.broadcast %cst_46 : f32 to vector<2x128xf32>
    %174 = arith.addf %173, %172 : vector<2x128xf32>
    %175 = arith.divf %173, %174 : vector<2x128xf32>
    %176 = arith.mulf %167, %108 : vector<2x128xf32>
    %177 = arith.mulf %161, %169 : vector<2x128xf32>
    %178 = arith.addf %176, %177 : vector<2x128xf32>
    %179 = math.tanh %178 : vector<2x128xf32>
    %180 = arith.mulf %175, %179 : vector<2x128xf32>
    %181 = vector.extract_strided_slice %0 {offsets = [0, 5, 0], sizes = [2, 1, 128], strides = [1, 1, 1]} : vector<2x8x128xbf16> to vector<2x1x128xbf16>
    %182 = vector.shape_cast %181 : vector<2x1x128xbf16> to vector<2x128xbf16>
    %cst_47 = arith.constant dense<0.000000e+00> : vector<2x512xf32>
    %183 = tpu.matmul %182, %4, %cst_47 {dimension_numbers = #tpu.dot_dimension_numbers<[1], [0], [0], [1], [0, 0, 1, 1], [], []>} : vector<2x128xbf16>, vector<128x512xbf16>, vector<2x512xf32> -> vector<2x512xf32>
    %184 = arith.truncf %143 : vector<2x128xf32> to vector<2x128xbf16>
    %cst_48 = arith.constant dense<0.000000e+00> : vector<2x512xf32>
    %185 = tpu.matmul %184, %5, %cst_48 {dimension_numbers = #tpu.dot_dimension_numbers<[1], [0], [0], [1], [0, 0, 1, 1], [], []>} : vector<2x128xbf16>, vector<128x512xbf16>, vector<2x512xf32> -> vector<2x512xf32>
    %186 = arith.addf %183, %185 : vector<2x512xf32>
    %187 = vector.broadcast %6 : vector<1x512xf32> to vector<2x512xf32>
    %188 = arith.addf %186, %187 : vector<2x512xf32>
    %189 = vector.extract_strided_slice %188 {offsets = [0, 0], sizes = [2, 128], strides = [1, 1]} : vector<2x512xf32> to vector<2x128xf32>
    %190 = arith.negf %189 : vector<2x128xf32>
    %191 = math.exp %190 : vector<2x128xf32>
    %cst_49 = arith.constant 1.000000e+00 : f32
    %192 = vector.broadcast %cst_49 : f32 to vector<2x128xf32>
    %193 = arith.addf %192, %191 : vector<2x128xf32>
    %194 = arith.divf %192, %193 : vector<2x128xf32>
    %195 = vector.extract_strided_slice %188 {offsets = [0, 128], sizes = [2, 128], strides = [1, 1]} : vector<2x512xf32> to vector<2x128xf32>
    %196 = arith.negf %195 : vector<2x128xf32>
    %197 = math.exp %196 : vector<2x128xf32>
    %cst_50 = arith.constant 1.000000e+00 : f32
    %198 = vector.broadcast %cst_50 : f32 to vector<2x128xf32>
    %199 = arith.addf %198, %197 : vector<2x128xf32>
    %200 = arith.divf %198, %199 : vector<2x128xf32>
    %201 = vector.extract_strided_slice %188 {offsets = [0, 256], sizes = [2, 128], strides = [1, 1]} : vector<2x512xf32> to vector<2x128xf32>
    %202 = math.tanh %201 : vector<2x128xf32>
    %203 = vector.extract_strided_slice %188 {offsets = [0, 384], sizes = [2, 128], strides = [1, 1]} : vector<2x512xf32> to vector<2x128xf32>
    %204 = arith.negf %203 : vector<2x128xf32>
    %205 = math.exp %204 : vector<2x128xf32>
    %cst_51 = arith.constant 1.000000e+00 : f32
    %206 = vector.broadcast %cst_51 : f32 to vector<2x128xf32>
    %207 = arith.addf %206, %205 : vector<2x128xf32>
    %208 = arith.divf %206, %207 : vector<2x128xf32>
    %209 = arith.mulf %200, %141 : vector<2x128xf32>
    %210 = arith.mulf %194, %202 : vector<2x128xf32>
    %211 = arith.addf %209, %210 : vector<2x128xf32>
    %212 = math.tanh %211 : vector<2x128xf32>
    %213 = arith.mulf %208, %212 : vector<2x128xf32>
    %214 = vector.shape_cast %180 : vector<2x128xf32> to vector<2x1x128xf32>
    %c0_52 = arith.constant 0 : index
    %c2 = arith.constant 2 : index
    %c0_53 = arith.constant 0 : index
    %215 = vector.load %arg7[%c0_52, %c2, %c0_53] : memref<2x8x256xf32, #tpu.memory_space<vmem>>, vector<2x1x128xf32>
    tpu.vector_store %arg7[%c0_52, %c2, %c0_53], %214 {strides = array<i32>} : memref<2x8x256xf32, #tpu.memory_space<vmem>>, vector<2x1x128xf32>,
    %216 = vector.shape_cast %213 : vector<2x128xf32> to vector<2x1x128xf32>
    %c0_54 = arith.constant 0 : index
    %c5 = arith.constant 5 : index
    %c128_55 = arith.constant 128 : index
    %217 = vector.load %arg7[%c0_54, %c5, %c128_55] : memref<2x8x256xf32, #tpu.memory_space<vmem>>, vector<2x1x128xf32>
    tpu.vector_store %arg7[%c0_54, %c5, %c128_55], %216 {strides = array<i32>} : memref<2x8x256xf32, #tpu.memory_space<vmem>>, vector<2x1x128xf32>,
    %218 = vector.extract_strided_slice %0 {offsets = [0, 3, 0], sizes = [2, 1, 128], strides = [1, 1, 1]} : vector<2x8x128xbf16> to vector<2x1x128xbf16>
    %219 = vector.shape_cast %218 : vector<2x1x128xbf16> to vector<2x128xbf16>
    %cst_56 = arith.constant dense<0.000000e+00> : vector<2x512xf32>
    %220 = tpu.matmul %219, %1, %cst_56 {dimension_numbers = #tpu.dot_dimension_numbers<[1], [0], [0], [1], [0, 0, 1, 1], [], []>} : vector<2x128xbf16>, vector<128x512xbf16>, vector<2x512xf32> -> vector<2x512xf32>
    %221 = arith.truncf %180 : vector<2x128xf32> to vector<2x128xbf16>
    %cst_57 = arith.constant dense<0.000000e+00> : vector<2x512xf32>
    %222 = tpu.matmul %221, %2, %cst_57 {dimension_numbers = #tpu.dot_dimension_numbers<[1], [0], [0], [1], [0, 0, 1, 1], [], []>} : vector<2x128xbf16>, vector<128x512xbf16>, vector<2x512xf32> -> vector<2x512xf32>
    %223 = arith.addf %220, %222 : vector<2x512xf32>
    %224 = vector.broadcast %3 : vector<1x512xf32> to vector<2x512xf32>
    %225 = arith.addf %223, %224 : vector<2x512xf32>
    %226 = vector.extract_strided_slice %225 {offsets = [0, 0], sizes = [2, 128], strides = [1, 1]} : vector<2x512xf32> to vector<2x128xf32>
    %227 = arith.negf %226 : vector<2x128xf32>
    %228 = math.exp %227 : vector<2x128xf32>
    %cst_58 = arith.constant 1.000000e+00 : f32
    %229 = vector.broadcast %cst_58 : f32 to vector<2x128xf32>
    %230 = arith.addf %229, %228 : vector<2x128xf32>
    %231 = arith.divf %229, %230 : vector<2x128xf32>
    %232 = vector.extract_strided_slice %225 {offsets = [0, 128], sizes = [2, 128], strides = [1, 1]} : vector<2x512xf32> to vector<2x128xf32>
    %233 = arith.negf %232 : vector<2x128xf32>
    %234 = math.exp %233 : vector<2x128xf32>
    %cst_59 = arith.constant 1.000000e+00 : f32
    %235 = vector.broadcast %cst_59 : f32 to vector<2x128xf32>
    %236 = arith.addf %235, %234 : vector<2x128xf32>
    %237 = arith.divf %235, %236 : vector<2x128xf32>
    %238 = vector.extract_strided_slice %225 {offsets = [0, 256], sizes = [2, 128], strides = [1, 1]} : vector<2x512xf32> to vector<2x128xf32>
    %239 = math.tanh %238 : vector<2x128xf32>
    %240 = vector.extract_strided_slice %225 {offsets = [0, 384], sizes = [2, 128], strides = [1, 1]} : vector<2x512xf32> to vector<2x128xf32>
    %241 = arith.negf %240 : vector<2x128xf32>
    %242 = math.exp %241 : vector<2x128xf32>
    %cst_60 = arith.constant 1.000000e+00 : f32
    %243 = vector.broadcast %cst_60 : f32 to vector<2x128xf32>
    %244 = arith.addf %243, %242 : vector<2x128xf32>
    %245 = arith.divf %243, %244 : vector<2x128xf32>
    %246 = arith.mulf %237, %178 : vector<2x128xf32>
    %247 = arith.mulf %231, %239 : vector<2x128xf32>
    %248 = arith.addf %246, %247 : vector<2x128xf32>
    %249 = math.tanh %248 : vector<2x128xf32>
    %250 = arith.mulf %245, %249 : vector<2x128xf32>
    %251 = vector.extract_strided_slice %0 {offsets = [0, 4, 0], sizes = [2, 1, 128], strides = [1, 1, 1]} : vector<2x8x128xbf16> to vector<2x1x128xbf16>
    %252 = vector.shape_cast %251 : vector<2x1x128xbf16> to vector<2x128xbf16>
    %cst_61 = arith.constant dense<0.000000e+00> : vector<2x512xf32>
    %253 = tpu.matmul %252, %4, %cst_61 {dimension_numbers = #tpu.dot_dimension_numbers<[1], [0], [0], [1], [0, 0, 1, 1], [], []>} : vector<2x128xbf16>, vector<128x512xbf16>, vector<2x512xf32> -> vector<2x512xf32>
    %254 = arith.truncf %213 : vector<2x128xf32> to vector<2x128xbf16>
    %cst_62 = arith.constant dense<0.000000e+00> : vector<2x512xf32>
    %255 = tpu.matmul %254, %5, %cst_62 {dimension_numbers = #tpu.dot_dimension_numbers<[1], [0], [0], [1], [0, 0, 1, 1], [], []>} : vector<2x128xbf16>, vector<128x512xbf16>, vector<2x512xf32> -> vector<2x512xf32>
    %256 = arith.addf %253, %255 : vector<2x512xf32>
    %257 = vector.broadcast %6 : vector<1x512xf32> to vector<2x512xf32>
    %258 = arith.addf %256, %257 : vector<2x512xf32>
    %259 = vector.extract_strided_slice %258 {offsets = [0, 0], sizes = [2, 128], strides = [1, 1]} : vector<2x512xf32> to vector<2x128xf32>
    %260 = arith.negf %259 : vector<2x128xf32>
    %261 = math.exp %260 : vector<2x128xf32>
    %cst_63 = arith.constant 1.000000e+00 : f32
    %262 = vector.broadcast %cst_63 : f32 to vector<2x128xf32>
    %263 = arith.addf %262, %261 : vector<2x128xf32>
    %264 = arith.divf %262, %263 : vector<2x128xf32>
    %265 = vector.extract_strided_slice %258 {offsets = [0, 128], sizes = [2, 128], strides = [1, 1]} : vector<2x512xf32> to vector<2x128xf32>
    %266 = arith.negf %265 : vector<2x128xf32>
    %267 = math.exp %266 : vector<2x128xf32>
    %cst_64 = arith.constant 1.000000e+00 : f32
    %268 = vector.broadcast %cst_64 : f32 to vector<2x128xf32>
    %269 = arith.addf %268, %267 : vector<2x128xf32>
    %270 = arith.divf %268, %269 : vector<2x128xf32>
    %271 = vector.extract_strided_slice %258 {offsets = [0, 256], sizes = [2, 128], strides = [1, 1]} : vector<2x512xf32> to vector<2x128xf32>
    %272 = math.tanh %271 : vector<2x128xf32>
    %273 = vector.extract_strided_slice %258 {offsets = [0, 384], sizes = [2, 128], strides = [1, 1]} : vector<2x512xf32> to vector<2x128xf32>
    %274 = arith.negf %273 : vector<2x128xf32>
    %275 = math.exp %274 : vector<2x128xf32>
    %cst_65 = arith.constant 1.000000e+00 : f32
    %276 = vector.broadcast %cst_65 : f32 to vector<2x128xf32>
    %277 = arith.addf %276, %275 : vector<2x128xf32>
    %278 = arith.divf %276, %277 : vector<2x128xf32>
    %279 = arith.mulf %270, %211 : vector<2x128xf32>
    %280 = arith.mulf %264, %272 : vector<2x128xf32>
    %281 = arith.addf %279, %280 : vector<2x128xf32>
    %282 = math.tanh %281 : vector<2x128xf32>
    %283 = arith.mulf %278, %282 : vector<2x128xf32>
    %284 = vector.shape_cast %250 : vector<2x128xf32> to vector<2x1x128xf32>
    %c0_66 = arith.constant 0 : index
    %c3 = arith.constant 3 : index
    %c0_67 = arith.constant 0 : index
    %285 = vector.load %arg7[%c0_66, %c3, %c0_67] : memref<2x8x256xf32, #tpu.memory_space<vmem>>, vector<2x1x128xf32>
    tpu.vector_store %arg7[%c0_66, %c3, %c0_67], %284 {strides = array<i32>} : memref<2x8x256xf32, #tpu.memory_space<vmem>>, vector<2x1x128xf32>,
    %286 = vector.shape_cast %283 : vector<2x128xf32> to vector<2x1x128xf32>
    %c0_68 = arith.constant 0 : index
    %c4 = arith.constant 4 : index
    %c128_69 = arith.constant 128 : index
    %287 = vector.load %arg7[%c0_68, %c4, %c128_69] : memref<2x8x256xf32, #tpu.memory_space<vmem>>, vector<2x1x128xf32>
    tpu.vector_store %arg7[%c0_68, %c4, %c128_69], %286 {strides = array<i32>} : memref<2x8x256xf32, #tpu.memory_space<vmem>>, vector<2x1x128xf32>,
    %288 = vector.extract_strided_slice %0 {offsets = [0, 4, 0], sizes = [2, 1, 128], strides = [1, 1, 1]} : vector<2x8x128xbf16> to vector<2x1x128xbf16>
    %289 = vector.shape_cast %288 : vector<2x1x128xbf16> to vector<2x128xbf16>
    %cst_70 = arith.constant dense<0.000000e+00> : vector<2x512xf32>
    %290 = tpu.matmul %289, %1, %cst_70 {dimension_numbers = #tpu.dot_dimension_numbers<[1], [0], [0], [1], [0, 0, 1, 1], [], []>} : vector<2x128xbf16>, vector<128x512xbf16>, vector<2x512xf32> -> vector<2x512xf32>
    %291 = arith.truncf %250 : vector<2x128xf32> to vector<2x128xbf16>
    %cst_71 = arith.constant dense<0.000000e+00> : vector<2x512xf32>
    %292 = tpu.matmul %291, %2, %cst_71 {dimension_numbers = #tpu.dot_dimension_numbers<[1], [0], [0], [1], [0, 0, 1, 1], [], []>} : vector<2x128xbf16>, vector<128x512xbf16>, vector<2x512xf32> -> vector<2x512xf32>
    %293 = arith.addf %290, %292 : vector<2x512xf32>
    %294 = vector.broadcast %3 : vector<1x512xf32> to vector<2x512xf32>
    %295 = arith.addf %293, %294 : vector<2x512xf32>
    %296 = vector.extract_strided_slice %295 {offsets = [0, 0], sizes = [2, 128], strides = [1, 1]} : vector<2x512xf32> to vector<2x128xf32>
    %297 = arith.negf %296 : vector<2x128xf32>
    %298 = math.exp %297 : vector<2x128xf32>
    %cst_72 = arith.constant 1.000000e+00 : f32
    %299 = vector.broadcast %cst_72 : f32 to vector<2x128xf32>
    %300 = arith.addf %299, %298 : vector<2x128xf32>
    %301 = arith.divf %299, %300 : vector<2x128xf32>
    %302 = vector.extract_strided_slice %295 {offsets = [0, 128], sizes = [2, 128], strides = [1, 1]} : vector<2x512xf32> to vector<2x128xf32>
    %303 = arith.negf %302 : vector<2x128xf32>
    %304 = math.exp %303 : vector<2x128xf32>
    %cst_73 = arith.constant 1.000000e+00 : f32
    %305 = vector.broadcast %cst_73 : f32 to vector<2x128xf32>
    %306 = arith.addf %305, %304 : vector<2x128xf32>
    %307 = arith.divf %305, %306 : vector<2x128xf32>
    %308 = vector.extract_strided_slice %295 {offsets = [0, 256], sizes = [2, 128], strides = [1, 1]} : vector<2x512xf32> to vector<2x128xf32>
    %309 = math.tanh %308 : vector<2x128xf32>
    %310 = vector.extract_strided_slice %295 {offsets = [0, 384], sizes = [2, 128], strides = [1, 1]} : vector<2x512xf32> to vector<2x128xf32>
    %311 = arith.negf %310 : vector<2x128xf32>
    %312 = math.exp %311 : vector<2x128xf32>
    %cst_74 = arith.constant 1.000000e+00 : f32
    %313 = vector.broadcast %cst_74 : f32 to vector<2x128xf32>
    %314 = arith.addf %313, %312 : vector<2x128xf32>
    %315 = arith.divf %313, %314 : vector<2x128xf32>
    %316 = arith.mulf %307, %248 : vector<2x128xf32>
    %317 = arith.mulf %301, %309 : vector<2x128xf32>
    %318 = arith.addf %316, %317 : vector<2x128xf32>
    %319 = math.tanh %318 : vector<2x128xf32>
    %320 = arith.mulf %315, %319 : vector<2x128xf32>
    %321 = vector.extract_strided_slice %0 {offsets = [0, 3, 0], sizes = [2, 1, 128], strides = [1, 1, 1]} : vector<2x8x128xbf16> to vector<2x1x128xbf16>
    %322 = vector.shape_cast %321 : vector<2x1x128xbf16> to vector<2x128xbf16>
    %cst_75 = arith.constant dense<0.000000e+00> : vector<2x512xf32>
    %323 = tpu.matmul %322, %4, %cst_75 {dimension_numbers = #tpu.dot_dimension_numbers<[1], [0], [0], [1], [0, 0, 1, 1], [], []>} : vector<2x128xbf16>, vector<128x512xbf16>, vector<2x512xf32> -> vector<2x512xf32>
    %324 = arith.truncf %283 : vector<2x128xf32> to vector<2x128xbf16>
    %cst_76 = arith.constant dense<0.000000e+00> : vector<2x512xf32>
    %325 = tpu.matmul %324, %5, %cst_76 {dimension_numbers = #tpu.dot_dimension_numbers<[1], [0], [0], [1], [0, 0, 1, 1], [], []>} : vector<2x128xbf16>, vector<128x512xbf16>, vector<2x512xf32> -> vector<2x512xf32>
    %326 = arith.addf %323, %325 : vector<2x512xf32>
    %327 = vector.broadcast %6 : vector<1x512xf32> to vector<2x512xf32>
    %328 = arith.addf %326, %327 : vector<2x512xf32>
    %329 = vector.extract_strided_slice %328 {offsets = [0, 0], sizes = [2, 128], strides = [1, 1]} : vector<2x512xf32> to vector<2x128xf32>
    %330 = arith.negf %329 : vector<2x128xf32>
    %331 = math.exp %330 : vector<2x128xf32>
    %cst_77 = arith.constant 1.000000e+00 : f32
    %332 = vector.broadcast %cst_77 : f32 to vector<2x128xf32>
    %333 = arith.addf %332, %331 : vector<2x128xf32>
    %334 = arith.divf %332, %333 : vector<2x128xf32>
    %335 = vector.extract_strided_slice %328 {offsets = [0, 128], sizes = [2, 128], strides = [1, 1]} : vector<2x512xf32> to vector<2x128xf32>
    %336 = arith.negf %335 : vector<2x128xf32>
    %337 = math.exp %336 : vector<2x128xf32>
    %cst_78 = arith.constant 1.000000e+00 : f32
    %338 = vector.broadcast %cst_78 : f32 to vector<2x128xf32>
    %339 = arith.addf %338, %337 : vector<2x128xf32>
    %340 = arith.divf %338, %339 : vector<2x128xf32>
    %341 = vector.extract_strided_slice %328 {offsets = [0, 256], sizes = [2, 128], strides = [1, 1]} : vector<2x512xf32> to vector<2x128xf32>
    %342 = math.tanh %341 : vector<2x128xf32>
    %343 = vector.extract_strided_slice %328 {offsets = [0, 384], sizes = [2, 128], strides = [1, 1]} : vector<2x512xf32> to vector<2x128xf32>
    %344 = arith.negf %343 : vector<2x128xf32>
    %345 = math.exp %344 : vector<2x128xf32>
    %cst_79 = arith.constant 1.000000e+00 : f32
    %346 = vector.broadcast %cst_79 : f32 to vector<2x128xf32>
    %347 = arith.addf %346, %345 : vector<2x128xf32>
    %348 = arith.divf %346, %347 : vector<2x128xf32>
    %349 = arith.mulf %340, %281 : vector<2x128xf32>
    %350 = arith.mulf %334, %342 : vector<2x128xf32>
    %351 = arith.addf %349, %350 : vector<2x128xf32>
    %352 = math.tanh %351 : vector<2x128xf32>
    %353 = arith.mulf %348, %352 : vector<2x128xf32>
    %354 = vector.shape_cast %320 : vector<2x128xf32> to vector<2x1x128xf32>
    %c0_80 = arith.constant 0 : index
    %c4_81 = arith.constant 4 : index
    %c0_82 = arith.constant 0 : index
    %355 = vector.load %arg7[%c0_80, %c4_81, %c0_82] : memref<2x8x256xf32, #tpu.memory_space<vmem>>, vector<2x1x128xf32>
    tpu.vector_store %arg7[%c0_80, %c4_81, %c0_82], %354 {strides = array<i32>} : memref<2x8x256xf32, #tpu.memory_space<vmem>>, vector<2x1x128xf32>,
    %356 = vector.shape_cast %353 : vector<2x128xf32> to vector<2x1x128xf32>
    %c0_83 = arith.constant 0 : index
    %c3_84 = arith.constant 3 : index
    %c128_85 = arith.constant 128 : index
    %357 = vector.load %arg7[%c0_83, %c3_84, %c128_85] : memref<2x8x256xf32, #tpu.memory_space<vmem>>, vector<2x1x128xf32>
    tpu.vector_store %arg7[%c0_83, %c3_84, %c128_85], %356 {strides = array<i32>} : memref<2x8x256xf32, #tpu.memory_space<vmem>>, vector<2x1x128xf32>,
    %358 = vector.extract_strided_slice %0 {offsets = [0, 5, 0], sizes = [2, 1, 128], strides = [1, 1, 1]} : vector<2x8x128xbf16> to vector<2x1x128xbf16>
    %359 = vector.shape_cast %358 : vector<2x1x128xbf16> to vector<2x128xbf16>
    %cst_86 = arith.constant dense<0.000000e+00> : vector<2x512xf32>
    %360 = tpu.matmul %359, %1, %cst_86 {dimension_numbers = #tpu.dot_dimension_numbers<[1], [0], [0], [1], [0, 0, 1, 1], [], []>} : vector<2x128xbf16>, vector<128x512xbf16>, vector<2x512xf32> -> vector<2x512xf32>
    %361 = arith.truncf %320 : vector<2x128xf32> to vector<2x128xbf16>
    %cst_87 = arith.constant dense<0.000000e+00> : vector<2x512xf32>
    %362 = tpu.matmul %361, %2, %cst_87 {dimension_numbers = #tpu.dot_dimension_numbers<[1], [0], [0], [1], [0, 0, 1, 1], [], []>} : vector<2x128xbf16>, vector<128x512xbf16>, vector<2x512xf32> -> vector<2x512xf32>
    %363 = arith.addf %360, %362 : vector<2x512xf32>
    %364 = vector.broadcast %3 : vector<1x512xf32> to vector<2x512xf32>
    %365 = arith.addf %363, %364 : vector<2x512xf32>
    %366 = vector.extract_strided_slice %365 {offsets = [0, 0], sizes = [2, 128], strides = [1, 1]} : vector<2x512xf32> to vector<2x128xf32>
    %367 = arith.negf %366 : vector<2x128xf32>
    %368 = math.exp %367 : vector<2x128xf32>
    %cst_88 = arith.constant 1.000000e+00 : f32
    %369 = vector.broadcast %cst_88 : f32 to vector<2x128xf32>
    %370 = arith.addf %369, %368 : vector<2x128xf32>
    %371 = arith.divf %369, %370 : vector<2x128xf32>
    %372 = vector.extract_strided_slice %365 {offsets = [0, 128], sizes = [2, 128], strides = [1, 1]} : vector<2x512xf32> to vector<2x128xf32>
    %373 = arith.negf %372 : vector<2x128xf32>
    %374 = math.exp %373 : vector<2x128xf32>
    %cst_89 = arith.constant 1.000000e+00 : f32
    %375 = vector.broadcast %cst_89 : f32 to vector<2x128xf32>
    %376 = arith.addf %375, %374 : vector<2x128xf32>
    %377 = arith.divf %375, %376 : vector<2x128xf32>
    %378 = vector.extract_strided_slice %365 {offsets = [0, 256], sizes = [2, 128], strides = [1, 1]} : vector<2x512xf32> to vector<2x128xf32>
    %379 = math.tanh %378 : vector<2x128xf32>
    %380 = vector.extract_strided_slice %365 {offsets = [0, 384], sizes = [2, 128], strides = [1, 1]} : vector<2x512xf32> to vector<2x128xf32>
    %381 = arith.negf %380 : vector<2x128xf32>
    %382 = math.exp %381 : vector<2x128xf32>
    %cst_90 = arith.constant 1.000000e+00 : f32
    %383 = vector.broadcast %cst_90 : f32 to vector<2x128xf32>
    %384 = arith.addf %383, %382 : vector<2x128xf32>
    %385 = arith.divf %383, %384 : vector<2x128xf32>
    %386 = arith.mulf %377, %318 : vector<2x128xf32>
    %387 = arith.mulf %371, %379 : vector<2x128xf32>
    %388 = arith.addf %386, %387 : vector<2x128xf32>
    %389 = math.tanh %388 : vector<2x128xf32>
    %390 = arith.mulf %385, %389 : vector<2x128xf32>
    %391 = vector.extract_strided_slice %0 {offsets = [0, 2, 0], sizes = [2, 1, 128], strides = [1, 1, 1]} : vector<2x8x128xbf16> to vector<2x1x128xbf16>
    %392 = vector.shape_cast %391 : vector<2x1x128xbf16> to vector<2x128xbf16>
    %cst_91 = arith.constant dense<0.000000e+00> : vector<2x512xf32>
    %393 = tpu.matmul %392, %4, %cst_91 {dimension_numbers = #tpu.dot_dimension_numbers<[1], [0], [0], [1], [0, 0, 1, 1], [], []>} : vector<2x128xbf16>, vector<128x512xbf16>, vector<2x512xf32> -> vector<2x512xf32>
    %394 = arith.truncf %353 : vector<2x128xf32> to vector<2x128xbf16>
    %cst_92 = arith.constant dense<0.000000e+00> : vector<2x512xf32>
    %395 = tpu.matmul %394, %5, %cst_92 {dimension_numbers = #tpu.dot_dimension_numbers<[1], [0], [0], [1], [0, 0, 1, 1], [], []>} : vector<2x128xbf16>, vector<128x512xbf16>, vector<2x512xf32> -> vector<2x512xf32>
    %396 = arith.addf %393, %395 : vector<2x512xf32>
    %397 = vector.broadcast %6 : vector<1x512xf32> to vector<2x512xf32>
    %398 = arith.addf %396, %397 : vector<2x512xf32>
    %399 = vector.extract_strided_slice %398 {offsets = [0, 0], sizes = [2, 128], strides = [1, 1]} : vector<2x512xf32> to vector<2x128xf32>
    %400 = arith.negf %399 : vector<2x128xf32>
    %401 = math.exp %400 : vector<2x128xf32>
    %cst_93 = arith.constant 1.000000e+00 : f32
    %402 = vector.broadcast %cst_93 : f32 to vector<2x128xf32>
    %403 = arith.addf %402, %401 : vector<2x128xf32>
    %404 = arith.divf %402, %403 : vector<2x128xf32>
    %405 = vector.extract_strided_slice %398 {offsets = [0, 128], sizes = [2, 128], strides = [1, 1]} : vector<2x512xf32> to vector<2x128xf32>
    %406 = arith.negf %405 : vector<2x128xf32>
    %407 = math.exp %406 : vector<2x128xf32>
    %cst_94 = arith.constant 1.000000e+00 : f32
    %408 = vector.broadcast %cst_94 : f32 to vector<2x128xf32>
    %409 = arith.addf %408, %407 : vector<2x128xf32>
    %410 = arith.divf %408, %409 : vector<2x128xf32>
    %411 = vector.extract_strided_slice %398 {offsets = [0, 256], sizes = [2, 128], strides = [1, 1]} : vector<2x512xf32> to vector<2x128xf32>
    %412 = math.tanh %411 : vector<2x128xf32>
    %413 = vector.extract_strided_slice %398 {offsets = [0, 384], sizes = [2, 128], strides = [1, 1]} : vector<2x512xf32> to vector<2x128xf32>
    %414 = arith.negf %413 : vector<2x128xf32>
    %415 = math.exp %414 : vector<2x128xf32>
    %cst_95 = arith.constant 1.000000e+00 : f32
    %416 = vector.broadcast %cst_95 : f32 to vector<2x128xf32>
    %417 = arith.addf %416, %415 : vector<2x128xf32>
    %418 = arith.divf %416, %417 : vector<2x128xf32>
    %419 = arith.mulf %410, %351 : vector<2x128xf32>
    %420 = arith.mulf %404, %412 : vector<2x128xf32>
    %421 = arith.addf %419, %420 : vector<2x128xf32>
    %422 = math.tanh %421 : vector<2x128xf32>
    %423 = arith.mulf %418, %422 : vector<2x128xf32>
    %424 = vector.shape_cast %390 : vector<2x128xf32> to vector<2x1x128xf32>
    %c0_96 = arith.constant 0 : index
    %c5_97 = arith.constant 5 : index
    %c0_98 = arith.constant 0 : index
    %425 = vector.load %arg7[%c0_96, %c5_97, %c0_98] : memref<2x8x256xf32, #tpu.memory_space<vmem>>, vector<2x1x128xf32>
    tpu.vector_store %arg7[%c0_96, %c5_97, %c0_98], %424 {strides = array<i32>} : memref<2x8x256xf32, #tpu.memory_space<vmem>>, vector<2x1x128xf32>,
    %426 = vector.shape_cast %423 : vector<2x128xf32> to vector<2x1x128xf32>
    %c0_99 = arith.constant 0 : index
    %c2_100 = arith.constant 2 : index
    %c128_101 = arith.constant 128 : index
    %427 = vector.load %arg7[%c0_99, %c2_100, %c128_101] : memref<2x8x256xf32, #tpu.memory_space<vmem>>, vector<2x1x128xf32>
    tpu.vector_store %arg7[%c0_99, %c2_100, %c128_101], %426 {strides = array<i32>} : memref<2x8x256xf32, #tpu.memory_space<vmem>>, vector<2x1x128xf32>,
    %428 = vector.extract_strided_slice %0 {offsets = [0, 6, 0], sizes = [2, 1, 128], strides = [1, 1, 1]} : vector<2x8x128xbf16> to vector<2x1x128xbf16>
    %429 = vector.shape_cast %428 : vector<2x1x128xbf16> to vector<2x128xbf16>
    %cst_102 = arith.constant dense<0.000000e+00> : vector<2x512xf32>
    %430 = tpu.matmul %429, %1, %cst_102 {dimension_numbers = #tpu.dot_dimension_numbers<[1], [0], [0], [1], [0, 0, 1, 1], [], []>} : vector<2x128xbf16>, vector<128x512xbf16>, vector<2x512xf32> -> vector<2x512xf32>
    %431 = arith.truncf %390 : vector<2x128xf32> to vector<2x128xbf16>
    %cst_103 = arith.constant dense<0.000000e+00> : vector<2x512xf32>
    %432 = tpu.matmul %431, %2, %cst_103 {dimension_numbers = #tpu.dot_dimension_numbers<[1], [0], [0], [1], [0, 0, 1, 1], [], []>} : vector<2x128xbf16>, vector<128x512xbf16>, vector<2x512xf32> -> vector<2x512xf32>
    %433 = arith.addf %430, %432 : vector<2x512xf32>
    %434 = vector.broadcast %3 : vector<1x512xf32> to vector<2x512xf32>
    %435 = arith.addf %433, %434 : vector<2x512xf32>
    %436 = vector.extract_strided_slice %435 {offsets = [0, 0], sizes = [2, 128], strides = [1, 1]} : vector<2x512xf32> to vector<2x128xf32>
    %437 = arith.negf %436 : vector<2x128xf32>
    %438 = math.exp %437 : vector<2x128xf32>
    %cst_104 = arith.constant 1.000000e+00 : f32
    %439 = vector.broadcast %cst_104 : f32 to vector<2x128xf32>
    %440 = arith.addf %439, %438 : vector<2x128xf32>
    %441 = arith.divf %439, %440 : vector<2x128xf32>
    %442 = vector.extract_strided_slice %435 {offsets = [0, 128], sizes = [2, 128], strides = [1, 1]} : vector<2x512xf32> to vector<2x128xf32>
    %443 = arith.negf %442 : vector<2x128xf32>
    %444 = math.exp %443 : vector<2x128xf32>
    %cst_105 = arith.constant 1.000000e+00 : f32
    %445 = vector.broadcast %cst_105 : f32 to vector<2x128xf32>
    %446 = arith.addf %445, %444 : vector<2x128xf32>
    %447 = arith.divf %445, %446 : vector<2x128xf32>
    %448 = vector.extract_strided_slice %435 {offsets = [0, 256], sizes = [2, 128], strides = [1, 1]} : vector<2x512xf32> to vector<2x128xf32>
    %449 = math.tanh %448 : vector<2x128xf32>
    %450 = vector.extract_strided_slice %435 {offsets = [0, 384], sizes = [2, 128], strides = [1, 1]} : vector<2x512xf32> to vector<2x128xf32>
    %451 = arith.negf %450 : vector<2x128xf32>
    %452 = math.exp %451 : vector<2x128xf32>
    %cst_106 = arith.constant 1.000000e+00 : f32
    %453 = vector.broadcast %cst_106 : f32 to vector<2x128xf32>
    %454 = arith.addf %453, %452 : vector<2x128xf32>
    %455 = arith.divf %453, %454 : vector<2x128xf32>
    %456 = arith.mulf %447, %388 : vector<2x128xf32>
    %457 = arith.mulf %441, %449 : vector<2x128xf32>
    %458 = arith.addf %456, %457 : vector<2x128xf32>
    %459 = math.tanh %458 : vector<2x128xf32>
    %460 = arith.mulf %455, %459 : vector<2x128xf32>
    %461 = vector.extract_strided_slice %0 {offsets = [0, 1, 0], sizes = [2, 1, 128], strides = [1, 1, 1]} : vector<2x8x128xbf16> to vector<2x1x128xbf16>
    %462 = vector.shape_cast %461 : vector<2x1x128xbf16> to vector<2x128xbf16>
    %cst_107 = arith.constant dense<0.000000e+00> : vector<2x512xf32>
    %463 = tpu.matmul %462, %4, %cst_107 {dimension_numbers = #tpu.dot_dimension_numbers<[1], [0], [0], [1], [0, 0, 1, 1], [], []>} : vector<2x128xbf16>, vector<128x512xbf16>, vector<2x512xf32> -> vector<2x512xf32>
    %464 = arith.truncf %423 : vector<2x128xf32> to vector<2x128xbf16>
    %cst_108 = arith.constant dense<0.000000e+00> : vector<2x512xf32>
    %465 = tpu.matmul %464, %5, %cst_108 {dimension_numbers = #tpu.dot_dimension_numbers<[1], [0], [0], [1], [0, 0, 1, 1], [], []>} : vector<2x128xbf16>, vector<128x512xbf16>, vector<2x512xf32> -> vector<2x512xf32>
    %466 = arith.addf %463, %465 : vector<2x512xf32>
    %467 = vector.broadcast %6 : vector<1x512xf32> to vector<2x512xf32>
    %468 = arith.addf %466, %467 : vector<2x512xf32>
    %469 = vector.extract_strided_slice %468 {offsets = [0, 0], sizes = [2, 128], strides = [1, 1]} : vector<2x512xf32> to vector<2x128xf32>
    %470 = arith.negf %469 : vector<2x128xf32>
    %471 = math.exp %470 : vector<2x128xf32>
    %cst_109 = arith.constant 1.000000e+00 : f32
    %472 = vector.broadcast %cst_109 : f32 to vector<2x128xf32>
    %473 = arith.addf %472, %471 : vector<2x128xf32>
    %474 = arith.divf %472, %473 : vector<2x128xf32>
    %475 = vector.extract_strided_slice %468 {offsets = [0, 128], sizes = [2, 128], strides = [1, 1]} : vector<2x512xf32> to vector<2x128xf32>
    %476 = arith.negf %475 : vector<2x128xf32>
    %477 = math.exp %476 : vector<2x128xf32>
    %cst_110 = arith.constant 1.000000e+00 : f32
    %478 = vector.broadcast %cst_110 : f32 to vector<2x128xf32>
    %479 = arith.addf %478, %477 : vector<2x128xf32>
    %480 = arith.divf %478, %479 : vector<2x128xf32>
    %481 = vector.extract_strided_slice %468 {offsets = [0, 256], sizes = [2, 128], strides = [1, 1]} : vector<2x512xf32> to vector<2x128xf32>
    %482 = math.tanh %481 : vector<2x128xf32>
    %483 = vector.extract_strided_slice %468 {offsets = [0, 384], sizes = [2, 128], strides = [1, 1]} : vector<2x512xf32> to vector<2x128xf32>
    %484 = arith.negf %483 : vector<2x128xf32>
    %485 = math.exp %484 : vector<2x128xf32>
    %cst_111 = arith.constant 1.000000e+00 : f32
    %486 = vector.broadcast %cst_111 : f32 to vector<2x128xf32>
    %487 = arith.addf %486, %485 : vector<2x128xf32>
    %488 = arith.divf %486, %487 : vector<2x128xf32>
    %489 = arith.mulf %480, %421 : vector<2x128xf32>
    %490 = arith.mulf %474, %482 : vector<2x128xf32>
    %491 = arith.addf %489, %490 : vector<2x128xf32>
    %492 = math.tanh %491 : vector<2x128xf32>
    %493 = arith.mulf %488, %492 : vector<2x128xf32>
    %494 = vector.shape_cast %460 : vector<2x128xf32> to vector<2x1x128xf32>
    %c0_112 = arith.constant 0 : index
    %c6_113 = arith.constant 6 : index
    %c0_114 = arith.constant 0 : index
    %495 = vector.load %arg7[%c0_112, %c6_113, %c0_114] : memref<2x8x256xf32, #tpu.memory_space<vmem>>, vector<2x1x128xf32>
    tpu.vector_store %arg7[%c0_112, %c6_113, %c0_114], %494 {strides = array<i32>} : memref<2x8x256xf32, #tpu.memory_space<vmem>>, vector<2x1x128xf32>,
    %496 = vector.shape_cast %493 : vector<2x128xf32> to vector<2x1x128xf32>
    %c0_115 = arith.constant 0 : index
    %c1_116 = arith.constant 1 : index
    %c128_117 = arith.constant 128 : index
    %497 = vector.load %arg7[%c0_115, %c1_116, %c128_117] : memref<2x8x256xf32, #tpu.memory_space<vmem>>, vector<2x1x128xf32>
    tpu.vector_store %arg7[%c0_115, %c1_116, %c128_117], %496 {strides = array<i32>} : memref<2x8x256xf32, #tpu.memory_space<vmem>>, vector<2x1x128xf32>,
    %498 = vector.extract_strided_slice %0 {offsets = [0, 7, 0], sizes = [2, 1, 128], strides = [1, 1, 1]} : vector<2x8x128xbf16> to vector<2x1x128xbf16>
    %499 = vector.shape_cast %498 : vector<2x1x128xbf16> to vector<2x128xbf16>
    %cst_118 = arith.constant dense<0.000000e+00> : vector<2x512xf32>
    %500 = tpu.matmul %499, %1, %cst_118 {dimension_numbers = #tpu.dot_dimension_numbers<[1], [0], [0], [1], [0, 0, 1, 1], [], []>} : vector<2x128xbf16>, vector<128x512xbf16>, vector<2x512xf32> -> vector<2x512xf32>
    %501 = arith.truncf %460 : vector<2x128xf32> to vector<2x128xbf16>
    %cst_119 = arith.constant dense<0.000000e+00> : vector<2x512xf32>
    %502 = tpu.matmul %501, %2, %cst_119 {dimension_numbers = #tpu.dot_dimension_numbers<[1], [0], [0], [1], [0, 0, 1, 1], [], []>} : vector<2x128xbf16>, vector<128x512xbf16>, vector<2x512xf32> -> vector<2x512xf32>
    %503 = arith.addf %500, %502 : vector<2x512xf32>
    %504 = vector.broadcast %3 : vector<1x512xf32> to vector<2x512xf32>
    %505 = arith.addf %503, %504 : vector<2x512xf32>
    %506 = vector.extract_strided_slice %505 {offsets = [0, 0], sizes = [2, 128], strides = [1, 1]} : vector<2x512xf32> to vector<2x128xf32>
    %507 = arith.negf %506 : vector<2x128xf32>
    %508 = math.exp %507 : vector<2x128xf32>
    %cst_120 = arith.constant 1.000000e+00 : f32
    %509 = vector.broadcast %cst_120 : f32 to vector<2x128xf32>
    %510 = arith.addf %509, %508 : vector<2x128xf32>
    %511 = arith.divf %509, %510 : vector<2x128xf32>
    %512 = vector.extract_strided_slice %505 {offsets = [0, 128], sizes = [2, 128], strides = [1, 1]} : vector<2x512xf32> to vector<2x128xf32>
    %513 = arith.negf %512 : vector<2x128xf32>
    %514 = math.exp %513 : vector<2x128xf32>
    %cst_121 = arith.constant 1.000000e+00 : f32
    %515 = vector.broadcast %cst_121 : f32 to vector<2x128xf32>
    %516 = arith.addf %515, %514 : vector<2x128xf32>
    %517 = arith.divf %515, %516 : vector<2x128xf32>
    %518 = vector.extract_strided_slice %505 {offsets = [0, 256], sizes = [2, 128], strides = [1, 1]} : vector<2x512xf32> to vector<2x128xf32>
    %519 = math.tanh %518 : vector<2x128xf32>
    %520 = vector.extract_strided_slice %505 {offsets = [0, 384], sizes = [2, 128], strides = [1, 1]} : vector<2x512xf32> to vector<2x128xf32>
    %521 = arith.negf %520 : vector<2x128xf32>
    %522 = math.exp %521 : vector<2x128xf32>
    %cst_122 = arith.constant 1.000000e+00 : f32
    %523 = vector.broadcast %cst_122 : f32 to vector<2x128xf32>
    %524 = arith.addf %523, %522 : vector<2x128xf32>
    %525 = arith.divf %523, %524 : vector<2x128xf32>
    %526 = arith.mulf %517, %458 : vector<2x128xf32>
    %527 = arith.mulf %511, %519 : vector<2x128xf32>
    %528 = arith.addf %526, %527 : vector<2x128xf32>
    %529 = math.tanh %528 : vector<2x128xf32>
    %530 = arith.mulf %525, %529 : vector<2x128xf32>
    %531 = vector.extract_strided_slice %0 {offsets = [0, 0, 0], sizes = [2, 1, 128], strides = [1, 1, 1]} : vector<2x8x128xbf16> to vector<2x1x128xbf16>
    %532 = vector.shape_cast %531 : vector<2x1x128xbf16> to vector<2x128xbf16>
    %cst_123 = arith.constant dense<0.000000e+00> : vector<2x512xf32>
    %533 = tpu.matmul %532, %4, %cst_123 {dimension_numbers = #tpu.dot_dimension_numbers<[1], [0], [0], [1], [0, 0, 1, 1], [], []>} : vector<2x128xbf16>, vector<128x512xbf16>, vector<2x512xf32> -> vector<2x512xf32>
    %534 = arith.truncf %493 : vector<2x128xf32> to vector<2x128xbf16>
    %cst_124 = arith.constant dense<0.000000e+00> : vector<2x512xf32>
    %535 = tpu.matmul %534, %5, %cst_124 {dimension_numbers = #tpu.dot_dimension_numbers<[1], [0], [0], [1], [0, 0, 1, 1], [], []>} : vector<2x128xbf16>, vector<128x512xbf16>, vector<2x512xf32> -> vector<2x512xf32>
    %536 = arith.addf %533, %535 : vector<2x512xf32>
    %537 = vector.broadcast %6 : vector<1x512xf32> to vector<2x512xf32>
    %538 = arith.addf %536, %537 : vector<2x512xf32>
    %539 = vector.extract_strided_slice %538 {offsets = [0, 0], sizes = [2, 128], strides = [1, 1]} : vector<2x512xf32> to vector<2x128xf32>
    %540 = arith.negf %539 : vector<2x128xf32>
    %541 = math.exp %540 : vector<2x128xf32>
    %cst_125 = arith.constant 1.000000e+00 : f32
    %542 = vector.broadcast %cst_125 : f32 to vector<2x128xf32>
    %543 = arith.addf %542, %541 : vector<2x128xf32>
    %544 = arith.divf %542, %543 : vector<2x128xf32>
    %545 = vector.extract_strided_slice %538 {offsets = [0, 128], sizes = [2, 128], strides = [1, 1]} : vector<2x512xf32> to vector<2x128xf32>
    %546 = arith.negf %545 : vector<2x128xf32>
    %547 = math.exp %546 : vector<2x128xf32>
    %cst_126 = arith.constant 1.000000e+00 : f32
    %548 = vector.broadcast %cst_126 : f32 to vector<2x128xf32>
    %549 = arith.addf %548, %547 : vector<2x128xf32>
    %550 = arith.divf %548, %549 : vector<2x128xf32>
    %551 = vector.extract_strided_slice %538 {offsets = [0, 256], sizes = [2, 128], strides = [1, 1]} : vector<2x512xf32> to vector<2x128xf32>
    %552 = math.tanh %551 : vector<2x128xf32>
    %553 = vector.extract_strided_slice %538 {offsets = [0, 384], sizes = [2, 128], strides = [1, 1]} : vector<2x512xf32> to vector<2x128xf32>
    %554 = arith.negf %553 : vector<2x128xf32>
    %555 = math.exp %554 : vector<2x128xf32>
    %cst_127 = arith.constant 1.000000e+00 : f32
    %556 = vector.broadcast %cst_127 : f32 to vector<2x128xf32>
    %557 = arith.addf %556, %555 : vector<2x128xf32>
    %558 = arith.divf %556, %557 : vector<2x128xf32>
    %559 = arith.mulf %550, %491 : vector<2x128xf32>
    %560 = arith.mulf %544, %552 : vector<2x128xf32>
    %561 = arith.addf %559, %560 : vector<2x128xf32>
    %562 = math.tanh %561 : vector<2x128xf32>
    %563 = arith.mulf %558, %562 : vector<2x128xf32>
    %564 = vector.shape_cast %530 : vector<2x128xf32> to vector<2x1x128xf32>
    %c0_128 = arith.constant 0 : index
    %c7_129 = arith.constant 7 : index
    %c0_130 = arith.constant 0 : index
    %565 = vector.load %arg7[%c0_128, %c7_129, %c0_130] : memref<2x8x256xf32, #tpu.memory_space<vmem>>, vector<2x1x128xf32>
    tpu.vector_store %arg7[%c0_128, %c7_129, %c0_130], %564 {strides = array<i32>} : memref<2x8x256xf32, #tpu.memory_space<vmem>>, vector<2x1x128xf32>,
    %566 = vector.shape_cast %563 : vector<2x128xf32> to vector<2x1x128xf32>
    %c0_131 = arith.constant 0 : index
    %c0_132 = arith.constant 0 : index
    %c128_133 = arith.constant 128 : index
    %567 = vector.load %arg7[%c0_131, %c0_132, %c128_133] : memref<2x8x256xf32, #tpu.memory_space<vmem>>, vector<2x1x128xf32>
    tpu.vector_store %arg7[%c0_131, %c0_132, %c128_133], %566 {strides = array<i32>} : memref<2x8x256xf32, #tpu.memory_space<vmem>>, vector<2x1x128xf32>,
    %568 = arith.addf %530, %563 : vector<2x128xf32>
    %c0_134 = arith.constant 0 : index
    %c0_135 = arith.constant 0 : index
    %569 = vector.load %arg8[%c0_134, %c0_135] : memref<2x128xf32, #tpu.memory_space<vmem>>, vector<2x128xf32>
    tpu.vector_store %arg8[%c0_134, %c0_135], %568 {strides = array<i32>} : memref<2x128xf32, #tpu.memory_space<vmem>>, vector<2x128xf32>,
    %570 = arith.addf %528, %561 : vector<2x128xf32>
    %c0_136 = arith.constant 0 : index
    %c0_137 = arith.constant 0 : index
    %571 = vector.load %arg9[%c0_136, %c0_137] : memref<2x128xf32, #tpu.memory_space<vmem>>, vector<2x128xf32>
    tpu.vector_store %arg9[%c0_136, %c0_137], %570 {strides = array<i32>} : memref<2x128xf32, #tpu.memory_space<vmem>>, vector<2x128xf32>,
    return
  }
}

</mosaic_0001>

<llo_original>
// kernel: tpu_custom_call.1
$region0: #{tpu_custom_call.1}
  #allocation0 [shape = 'u32[]', space=smem, size = 0x4, offset = 0x4, fixed_abs, tag = 'smem constant byte address 0x4 - core index']
  #allocation1 [shape = 'u32[144,128]{1,0:T(1,128)}', space=vmem, size = 0x12000, scoped, tag = 'internal scratch']
  %s0 = inlined_call_operand.hbm [shape: bf16[2,8,128], index: 0, kind: input, shape index: {}]
  %s1 = inlined_call_operand.hbm [shape: bf16[128,512], index: 1, kind: input, shape index: {}]
  %s2 = inlined_call_operand.hbm [shape: bf16[128,512], index: 2, kind: input, shape index: {}]
  %s3 = inlined_call_operand.vmem [shape: f32[1,512], index: 3, kind: input, shape index: {}]
  %s4 = inlined_call_operand.hbm [shape: bf16[128,512], index: 4, kind: input, shape index: {}]
  %s5 = inlined_call_operand.hbm [shape: bf16[128,512], index: 5, kind: input, shape index: {}]
  %s6 = inlined_call_operand.vmem [shape: f32[1,512], index: 6, kind: input, shape index: {}]
  %s7 = inlined_call_operand.hbm [shape: f32[2,8,256], index: 7, kind: output, shape index: {0}]
  %s8 = inlined_call_operand.hbm [shape: f32[2,128], index: 8, kind: output, shape index: {1}]
  %s9 = inlined_call_operand.hbm [shape: f32[2,128], index: 9, kind: output, shape index: {2}]
  %10 = xla_tuple %s7, %s8, %s9
  %s11 = sld [smem:[#allocation0]]
  $region74: #{tpu_custom_call.1} parent=0
    _
  %s13 = ssub.s32 1, %s11
  %s14 = scalar_select 0, %s13, %s11
  $region1: #{tpu_custom_call.1} parent=0
    #allocation2 [shape = 'u8[4096]{0}', space=vmem, size = 0x1000, scoped, tag = 'input window, operand 0, single buffered']
    #allocation3 [shape = 's32[1]{0}', space=sflag, size = 0x4, scoped, tag = 'scoped memory for tpu_custom_call.1']
    #allocation4 [shape = 's32[1]{0}', space=sflag, size = 0x4, scoped, tag = 'scoped memory for tpu_custom_call.1']
    #allocation5 [shape = 'u8[131072]{0}', space=vmem, size = 0x20000, scoped, tag = 'input window, operand 1, single buffered']
    #allocation6 [shape = 's32[1]{0}', space=sflag, size = 0x4, scoped, tag = 'scoped memory for tpu_custom_call.1']
    #allocation7 [shape = 'u8[131072]{0}', space=vmem, size = 0x20000, scoped, tag = 'input window, operand 2, single buffered']
    #allocation8 [shape = 'u8[131072]{0}', space=vmem, size = 0x20000, scoped, tag = 'input window, operand 4, single buffered']
    #allocation9 [shape = 's32[1]{0}', space=sflag, size = 0x4, scoped, tag = 'scoped memory for tpu_custom_call.1']
    #allocation10 [shape = 'u8[131072]{0}', space=vmem, size = 0x20000, scoped, tag = 'input window, operand 5, single buffered']
    #allocation11 [shape = 'u8[16384]{0}', space=vmem, size = 0x4000, scoped, tag = 'output window, operand 0, single buffered']
    #allocation12 [shape = 'u8[1024]{0}', space=vmem, size = 0x400, scoped, tag = 'output window, operand 1, single buffered']
    #allocation13 [shape = 's32[1]{0}', space=sflag, size = 0x4, scoped, tag = 'scoped memory for tpu_custom_call.1']
    #allocation14 [shape = 'u8[1024]{0}', space=vmem, size = 0x400, scoped, tag = 'output window, operand 2, single buffered']
    %15 = vsyncpa [#allocation3], 0
    %16 = vsyncpa [#allocation6], 0
    %17 = vsyncpa [#allocation9], 0
    %18 = vsyncpa [#allocation4], 0
    %19 = vsyncpa [#allocation13], 0
    // Predicated region
    $region2: #{tpu_custom_call.1} parent=1 // pred_check
      _
    $region3: #{tpu_custom_call.1} parent=1 // pred_check_branch
      %21 = sbr.rel (0) target = $region5
    $region4: #{tpu_custom_call.1} parent=1 // pred_region
      %s23 = ssub.s32 128, 128
      %24 = vsyncadd [#allocation3], %s23
      %s25 = sshll.u32 [#allocation2], 4
      %s26 = int_to_ptr.vmem [resolvable:$true] %s25
      %31 = dma.hbm_to_vmem [thread:$0]  %s0, 128, %s26, [#allocation3], 64, 64, 4
    $region5: #{tpu_custom_call.1} parent=1 // pred_fallthru
      _
    // Predicated region
    $region6: #{tpu_custom_call.1} parent=1 // pred_check
      _
    $region7: #{tpu_custom_call.1} parent=1 // pred_check_branch
      %33 = sbr.rel (0) target = $region9
    $region8: #{tpu_custom_call.1} parent=1 // pred_region
      %s35 = ssub.s32 4096, 4096
      %36 = vsyncadd [#allocation6], %s35
      %s37 = sshll.u32 [#allocation5], 4
      %s38 = int_to_ptr.vmem [resolvable:$true] %s37
      %43 = dma.hbm_to_vmem [thread:$0]  %s1, 4096, %s38, [#allocation6], 256, 256, 16
    $region9: #{tpu_custom_call.1} parent=1 // pred_fallthru
      _
    // Predicated region
    $region10: #{tpu_custom_call.1} parent=1 // pred_check
      _
    $region11: #{tpu_custom_call.1} parent=1 // pred_check_branch
      %45 = sbr.rel (0) target = $region13
    $region12: #{tpu_custom_call.1} parent=1 // pred_region
      %s47 = ssub.s32 4096, 4096
      %48 = vsyncadd [#allocation6], %s47
      %s49 = sshll.u32 [#allocation7], 4
      %s50 = int_to_ptr.vmem [resolvable:$true] %s49
      %55 = dma.hbm_to_vmem [thread:$0]  %s2, 4096, %s50, [#allocation6], 256, 256, 16
    $region13: #{tpu_custom_call.1} parent=1 // pred_fallthru
      _
    // Predicated region
    $region14: #{tpu_custom_call.1} parent=1 // pred_check
      _
    $region15: #{tpu_custom_call.1} parent=1 // pred_check_branch
      %57 = sbr.rel (0) target = $region17
    $region16: #{tpu_custom_call.1} parent=1 // pred_region
      _
    $region17: #{tpu_custom_call.1} parent=1 // pred_fallthru
      _
    // Predicated region
    $region18: #{tpu_custom_call.1} parent=1 // pred_check
      _
    $region19: #{tpu_custom_call.1} parent=1 // pred_check_branch
      %59 = sbr.rel (0) target = $region21
    $region20: #{tpu_custom_call.1} parent=1 // pred_region
      %s61 = ssub.s32 4096, 4096
      %62 = vsyncadd [#allocation9], %s61
      %s63 = sshll.u32 [#allocation8], 4
      %s64 = int_to_ptr.vmem [resolvable:$true] %s63
      %69 = dma.hbm_to_vmem [thread:$0]  %s4, 4096, %s64, [#allocation9], 256, 256, 16
    $region21: #{tpu_custom_call.1} parent=1 // pred_fallthru
      _
    // Predicated region
    $region22: #{tpu_custom_call.1} parent=1 // pred_check
      _
    $region23: #{tpu_custom_call.1} parent=1 // pred_check_branch
      %71 = sbr.rel (0) target = $region25
    $region24: #{tpu_custom_call.1} parent=1 // pred_region
      %s73 = ssub.s32 4096, 4096
      %74 = vsyncadd [#allocation9], %s73
      %s75 = sshll.u32 [#allocation10], 4
      %s76 = int_to_ptr.vmem [resolvable:$true] %s75
      %81 = dma.hbm_to_vmem [thread:$0]  %s5, 4096, %s76, [#allocation9], 256, 256, 16
    $region25: #{tpu_custom_call.1} parent=1 // pred_fallthru
      _
    // Predicated region
    $region26: #{tpu_custom_call.1} parent=1 // pred_check
      _
    $region27: #{tpu_custom_call.1} parent=1 // pred_check_branch
      %83 = sbr.rel (0) target = $region29
    $region28: #{tpu_custom_call.1} parent=1 // pred_region
      _
    $region29: #{tpu_custom_call.1} parent=1 // pred_fallthru
      _
    // Predicated region
    $region30: #{tpu_custom_call.1} parent=1 // pred_check
      _
    $region31: #{tpu_custom_call.1} parent=1 // pred_check_branch
      %85 = sbr.rel (0) target = $region33
    $region32: #{tpu_custom_call.1} parent=1 // pred_region
      %86 = dma.done [#allocation3], 128
    $region33: #{tpu_custom_call.1} parent=1 // pred_fallthru
      _
    // Predicated region
    $region34: #{tpu_custom_call.1} parent=1 // pred_check
      _
    $region35: #{tpu_custom_call.1} parent=1 // pred_check_branch
      %88 = sbr.rel (0) target = $region37
    $region36: #{tpu_custom_call.1} parent=1 // pred_region
      %89 = dma.done [#allocation6], 4096
    $region37: #{tpu_custom_call.1} parent=1 // pred_fallthru
      _
    // Predicated region
    $region38: #{tpu_custom_call.1} parent=1 // pred_check
      _
    $region39: #{tpu_custom_call.1} parent=1 // pred_check_branch
      %91 = sbr.rel (0) target = $region41
    $region40: #{tpu_custom_call.1} parent=1 // pred_region
      %92 = dma.done [#allocation6], 4096
    $region41: #{tpu_custom_call.1} parent=1 // pred_fallthru
      _
    // Predicated region
    $region42: #{tpu_custom_call.1} parent=1 // pred_check
      _
    $region43: #{tpu_custom_call.1} parent=1 // pred_check_branch
      %94 = sbr.rel (0) target = $region45
    $region44: #{tpu_custom_call.1} parent=1 // pred_region
      %95 = dma.done [#allocation9], 4096
    $region45: #{tpu_custom_call.1} parent=1 // pred_fallthru
      _
    // Predicated region
    $region46: #{tpu_custom_call.1} parent=1 // pred_check
      _
    $region47: #{tpu_custom_call.1} parent=1 // pred_check_branch
      %97 = sbr.rel (0) target = $region49
    $region48: #{tpu_custom_call.1} parent=1 // pred_region
      %98 = dma.done [#allocation9], 4096
    $region49: #{tpu_custom_call.1} parent=1 // pred_fallthru
      _
    %v100 = vld [vmem:[#allocation2] sm:$0xf]
    %v101 = vld [vmem:[#allocation2 + $0x4] sm:$0xf]
    %v102 = vld [vmem:[#allocation5] sm:$0xff]
    %v103 = vld [vmem:[#allocation5 + $0x8] sm:$0xff]
    %v104 = vld [vmem:[#allocation5 + $0x10] sm:$0xff]
    %v105 = vld [vmem:[#allocation5 + $0x18] sm:$0xff]
    %v106 = vld [vmem:[#allocation5 + $0x20] sm:$0xff]
    %v107 = vld [vmem:[#allocation5 + $0x28] sm:$0xff]
    %v108 = vld [vmem:[#allocation5 + $0x30] sm:$0xff]
    %v109 = vld [vmem:[#allocation5 + $0x38] sm:$0xff]
    %v110 = vld [vmem:[#allocation5 + $0x40] sm:$0xff]
    %v111 = vld [vmem:[#allocation5 + $0x48] sm:$0xff]
    %v112 = vld [vmem:[#allocation5 + $0x50] sm:$0xff]
    %v113 = vld [vmem:[#allocation5 + $0x58] sm:$0xff]
    %v114 = vld [vmem:[#allocation5 + $0x60] sm:$0xff]
    %v115 = vld [vmem:[#allocation5 + $0x68] sm:$0xff]
    %v116 = vld [vmem:[#allocation5 + $0x70] sm:$0xff]
    %v117 = vld [vmem:[#allocation5 + $0x78] sm:$0xff]
    %v118 = vld [vmem:[#allocation5 + $0x80] sm:$0xff]
    %v119 = vld [vmem:[#allocation5 + $0x88] sm:$0xff]
    %v120 = vld [vmem:[#allocation5 + $0x90] sm:$0xff]
    %v121 = vld [vmem:[#allocation5 + $0x98] sm:$0xff]
    %v122 = vld [vmem:[#allocation5 + $0xa0] sm:$0xff]
    %v123 = vld [vmem:[#allocation5 + $0xa8] sm:$0xff]
    %v124 = vld [vmem:[#allocation5 + $0xb0] sm:$0xff]
    %v125 = vld [vmem:[#allocation5 + $0xb8] sm:$0xff]
    %v126 = vld [vmem:[#allocation5 + $0xc0] sm:$0xff]
    %v127 = vld [vmem:[#allocation5 + $0xc8] sm:$0xff]
    %v128 = vld [vmem:[#allocation5 + $0xd0] sm:$0xff]
    %v129 = vld [vmem:[#allocation5 + $0xd8] sm:$0xff]
    %v130 = vld [vmem:[#allocation5 + $0xe0] sm:$0xff]
    %v131 = vld [vmem:[#allocation5 + $0xe8] sm:$0xff]
    %v132 = vld [vmem:[#allocation5 + $0xf0] sm:$0xff]
    %v133 = vld [vmem:[#allocation5 + $0xf8] sm:$0xff]
    %v134 = vld [vmem:[#allocation7] sm:$0xff]
    %v135 = vld [vmem:[#allocation7 + $0x8] sm:$0xff]
    %v136 = vld [vmem:[#allocation7 + $0x10] sm:$0xff]
    %v137 = vld [vmem:[#allocation7 + $0x18] sm:$0xff]
    %v138 = vld [vmem:[#allocation7 + $0x20] sm:$0xff]
    %v139 = vld [vmem:[#allocation7 + $0x28] sm:$0xff]
    %v140 = vld [vmem:[#allocation7 + $0x30] sm:$0xff]
    %v141 = vld [vmem:[#allocation7 + $0x38] sm:$0xff]
    %v142 = vld [vmem:[#allocation7 + $0x40] sm:$0xff]
    %v143 = vld [vmem:[#allocation7 + $0x48] sm:$0xff]
    %v144 = vld [vmem:[#allocation7 + $0x50] sm:$0xff]
    %v145 = vld [vmem:[#allocation7 + $0x58] sm:$0xff]
    %v146 = vld [vmem:[#allocation7 + $0x60] sm:$0xff]
    %v147 = vld [vmem:[#allocation7 + $0x68] sm:$0xff]
    %v148 = vld [vmem:[#allocation7 + $0x70] sm:$0xff]
    %v149 = vld [vmem:[#allocation7 + $0x78] sm:$0xff]
    %v150 = vld [vmem:[#allocation7 + $0x80] sm:$0xff]
    %v151 = vld [vmem:[#allocation7 + $0x88] sm:$0xff]
    %v152 = vld [vmem:[#allocation7 + $0x90] sm:$0xff]
    %v153 = vld [vmem:[#allocation7 + $0x98] sm:$0xff]
    %v154 = vld [vmem:[#allocation7 + $0xa0] sm:$0xff]
    %v155 = vld [vmem:[#allocation7 + $0xa8] sm:$0xff]
    %v156 = vld [vmem:[#allocation7 + $0xb0] sm:$0xff]
    %v157 = vld [vmem:[#allocation7 + $0xb8] sm:$0xff]
    %v158 = vld [vmem:[#allocation7 + $0xc0] sm:$0xff]
    %v159 = vld [vmem:[#allocation7 + $0xc8] sm:$0xff]
    %v160 = vld [vmem:[#allocation7 + $0xd0] sm:$0xff]
    %v161 = vld [vmem:[#allocation7 + $0xd8] sm:$0xff]
    %v162 = vld [vmem:[#allocation7 + $0xe0] sm:$0xff]
    %v163 = vld [vmem:[#allocation7 + $0xe8] sm:$0xff]
    %v164 = vld [vmem:[#allocation7 + $0xf0] sm:$0xff]
    %v165 = vld [vmem:[#allocation7 + $0xf8] sm:$0xff]
    %v166 = vld [vmem:[%s3] sm:$0xf]
    %v167 = vld [vmem:[#allocation8] sm:$0xff]
    %v168 = vld [vmem:[#allocation8 + $0x8] sm:$0xff]
    %v169 = vld [vmem:[#allocation8 + $0x10] sm:$0xff]
    %v170 = vld [vmem:[#allocation8 + $0x18] sm:$0xff]
    %v171 = vld [vmem:[#allocation8 + $0x20] sm:$0xff]
    %v172 = vld [vmem:[#allocation8 + $0x28] sm:$0xff]
    %v173 = vld [vmem:[#allocation8 + $0x30] sm:$0xff]
    %v174 = vld [vmem:[#allocation8 + $0x38] sm:$0xff]
    %v175 = vld [vmem:[#allocation8 + $0x40] sm:$0xff]
    %v176 = vld [vmem:[#allocation8 + $0x48] sm:$0xff]
    %v177 = vld [vmem:[#allocation8 + $0x50] sm:$0xff]
    %v178 = vld [vmem:[#allocation8 + $0x58] sm:$0xff]
    %v179 = vld [vmem:[#allocation8 + $0x60] sm:$0xff]
    %v180 = vld [vmem:[#allocation8 + $0x68] sm:$0xff]
    %v181 = vld [vmem:[#allocation8 + $0x70] sm:$0xff]
    %v182 = vld [vmem:[#allocation8 + $0x78] sm:$0xff]
    %v183 = vld [vmem:[#allocation8 + $0x80] sm:$0xff]
    %v184 = vld [vmem:[#allocation8 + $0x88] sm:$0xff]
    %v185 = vld [vmem:[#allocation8 + $0x90] sm:$0xff]
    %v186 = vld [vmem:[#allocation8 + $0x98] sm:$0xff]
    %v187 = vld [vmem:[#allocation8 + $0xa0] sm:$0xff]
    %v188 = vld [vmem:[#allocation8 + $0xa8] sm:$0xff]
    %v189 = vld [vmem:[#allocation8 + $0xb0] sm:$0xff]
    %v190 = vld [vmem:[#allocation8 + $0xb8] sm:$0xff]
    %v191 = vld [vmem:[#allocation8 + $0xc0] sm:$0xff]
    %v192 = vld [vmem:[#allocation8 + $0xc8] sm:$0xff]
    %v193 = vld [vmem:[#allocation8 + $0xd0] sm:$0xff]
    %v194 = vld [vmem:[#allocation8 + $0xd8] sm:$0xff]
    %v195 = vld [vmem:[#allocation8 + $0xe0] sm:$0xff]
    %v196 = vld [vmem:[#allocation8 + $0xe8] sm:$0xff]
    %v197 = vld [vmem:[#allocation8 + $0xf0] sm:$0xff]
    %v198 = vld [vmem:[#allocation8 + $0xf8] sm:$0xff]
    %v199 = vld [vmem:[#allocation10] sm:$0xff]
    %v200 = vld [vmem:[#allocation10 + $0x8] sm:$0xff]
    %v201 = vld [vmem:[#allocation10 + $0x10] sm:$0xff]
    %v202 = vld [vmem:[#allocation10 + $0x18] sm:$0xff]
    %v203 = vld [vmem:[#allocation10 + $0x20] sm:$0xff]
    %v204 = vld [vmem:[#allocation10 + $0x28] sm:$0xff]
    %v205 = vld [vmem:[#allocation10 + $0x30] sm:$0xff]
    %v206 = vld [vmem:[#allocation10 + $0x38] sm:$0xff]
    %v207 = vld [vmem:[#allocation10 + $0x40] sm:$0xff]
    %v208 = vld [vmem:[#allocation10 + $0x48] sm:$0xff]
    %v209 = vld [vmem:[#allocation10 + $0x50] sm:$0xff]
    %v210 = vld [vmem:[#allocation10 + $0x58] sm:$0xff]
    %v211 = vld [vmem:[#allocation10 + $0x60] sm:$0xff]
    %v212 = vld [vmem:[#allocation10 + $0x68] sm:$0xff]
    %v213 = vld [vmem:[#allocation10 + $0x70] sm:$0xff]
    %v214 = vld [vmem:[#allocation10 + $0x78] sm:$0xff]
    %v215 = vld [vmem:[#allocation10 + $0x80] sm:$0xff]
    %v216 = vld [vmem:[#allocation10 + $0x88] sm:$0xff]
    %v217 = vld [vmem:[#allocation10 + $0x90] sm:$0xff]
    %v218 = vld [vmem:[#allocation10 + $0x98] sm:$0xff]
    %v219 = vld [vmem:[#allocation10 + $0xa0] sm:$0xff]
    %v220 = vld [vmem:[#allocation10 + $0xa8] sm:$0xff]
    %v221 = vld [vmem:[#allocation10 + $0xb0] sm:$0xff]
    %v222 = vld [vmem:[#allocation10 + $0xb8] sm:$0xff]
    %v223 = vld [vmem:[#allocation10 + $0xc0] sm:$0xff]
    %v224 = vld [vmem:[#allocation10 + $0xc8] sm:$0xff]
    %v225 = vld [vmem:[#allocation10 + $0xd0] sm:$0xff]
    %v226 = vld [vmem:[#allocation10 + $0xd8] sm:$0xff]
    %v227 = vld [vmem:[#allocation10 + $0xe0] sm:$0xff]
    %v228 = vld [vmem:[#allocation10 + $0xe8] sm:$0xff]
    %v229 = vld [vmem:[#allocation10 + $0xf0] sm:$0xff]
    %v230 = vld [vmem:[#allocation10 + $0xf8] sm:$0xff]
    %v231 = vld [vmem:[%s6] sm:$0xf]
    %v264 = vunpack.c.l.b16 %v134
    %v265 = vunpack.c.h.b16 %v134
    %v266 = vunpack.c.l.b16 %v135
    %v267 = vunpack.c.h.b16 %v135
    %v268 = vunpack.c.l.b16 %v136
    %v269 = vunpack.c.h.b16 %v136
    %v270 = vunpack.c.l.b16 %v137
    %v271 = vunpack.c.h.b16 %v137
    %v272 = vunpack.c.l.b16 %v138
    %v273 = vunpack.c.h.b16 %v138
    %v274 = vunpack.c.l.b16 %v139
    %v275 = vunpack.c.h.b16 %v139
    %v276 = vunpack.c.l.b16 %v140
    %v277 = vunpack.c.h.b16 %v140
    %v278 = vunpack.c.l.b16 %v141
    %v279 = vunpack.c.h.b16 %v141
    %v280 = vunpack.c.l.b16 %v142
    %v281 = vunpack.c.h.b16 %v142
    %v282 = vunpack.c.l.b16 %v143
    %v283 = vunpack.c.h.b16 %v143
    %v284 = vunpack.c.l.b16 %v144
    %v285 = vunpack.c.h.b16 %v144
    %v286 = vunpack.c.l.b16 %v145
    %v287 = vunpack.c.h.b16 %v145
    %v288 = vunpack.c.l.b16 %v146
    %v289 = vunpack.c.h.b16 %v146
    %v290 = vunpack.c.l.b16 %v147
    %v291 = vunpack.c.h.b16 %v147
    %v292 = vunpack.c.l.b16 %v148
    %v293 = vunpack.c.h.b16 %v148
    %v294 = vunpack.c.l.b16 %v149
    %v295 = vunpack.c.h.b16 %v149
    %v296 = vunpack.c.l.b16 %v150
    %v297 = vunpack.c.h.b16 %v150
    %v298 = vunpack.c.l.b16 %v151
    %v299 = vunpack.c.h.b16 %v151
    %v300 = vunpack.c.l.b16 %v152
    %v301 = vunpack.c.h.b16 %v152
    %v302 = vunpack.c.l.b16 %v153
    %v303 = vunpack.c.h.b16 %v153
    %v304 = vunpack.c.l.b16 %v154
    %v305 = vunpack.c.h.b16 %v154
    %v306 = vunpack.c.l.b16 %v155
    %v307 = vunpack.c.h.b16 %v155
    %v308 = vunpack.c.l.b16 %v156
    %v309 = vunpack.c.h.b16 %v156
    %v310 = vunpack.c.l.b16 %v157
    %v311 = vunpack.c.h.b16 %v157
    %v312 = vunpack.c.l.b16 %v158
    %v313 = vunpack.c.h.b16 %v158
    %v314 = vunpack.c.l.b16 %v159
    %v315 = vunpack.c.h.b16 %v159
    %v316 = vunpack.c.l.b16 %v160
    %v317 = vunpack.c.h.b16 %v160
    %v318 = vunpack.c.l.b16 %v161
    %v319 = vunpack.c.h.b16 %v161
    %v320 = vunpack.c.l.b16 %v162
    %v321 = vunpack.c.h.b16 %v162
    %v322 = vunpack.c.l.b16 %v163
    %v323 = vunpack.c.h.b16 %v163
    %v324 = vunpack.c.l.b16 %v164
    %v325 = vunpack.c.h.b16 %v164
    %v326 = vunpack.c.l.b16 %v165
    %v327 = vunpack.c.h.b16 %v165
    %v328 = vpack.c.b16 %v268, %v264
    %v329 = vpack.c.b16 %v269, %v265
    %v330 = vpack.c.b16 %v270, %v266
    %v331 = vpack.c.b16 %v271, %v267
    %v332 = vpack.c.b16 %v276, %v272
    %v333 = vpack.c.b16 %v277, %v273
    %v334 = vpack.c.b16 %v278, %v274
    %v335 = vpack.c.b16 %v279, %v275
    %v336 = vpack.c.b16 %v284, %v280
    %v337 = vpack.c.b16 %v285, %v281
    %v338 = vpack.c.b16 %v286, %v282
    %v339 = vpack.c.b16 %v287, %v283
    %v340 = vpack.c.b16 %v292, %v288
    %v341 = vpack.c.b16 %v293, %v289
    %v342 = vpack.c.b16 %v294, %v290
    %v343 = vpack.c.b16 %v295, %v291
    %v344 = vpack.c.b16 %v300, %v296
    %v345 = vpack.c.b16 %v301, %v297
    %v346 = vpack.c.b16 %v302, %v298
    %v347 = vpack.c.b16 %v303, %v299
    %v348 = vpack.c.b16 %v308, %v304
    %v349 = vpack.c.b16 %v309, %v305
    %v350 = vpack.c.b16 %v310, %v306
    %v351 = vpack.c.b16 %v311, %v307
    %v352 = vpack.c.b16 %v316, %v312
    %v353 = vpack.c.b16 %v317, %v313
    %v354 = vpack.c.b16 %v318, %v314
    %v355 = vpack.c.b16 %v319, %v315
    %v356 = vpack.c.b16 %v324, %v320
    %v357 = vpack.c.b16 %v325, %v321
    %v358 = vpack.c.b16 %v326, %v322
    %v359 = vpack.c.b16 %v327, %v323
    %392 = vmatprep.subr.bf16.mxu0 %v329
    %393 = vmatpush1.bf16.msra.mxu0 %v328
    %394 = vmatprep.subr.bf16.mxu0 %v333
    %395 = vmatpush1.bf16.msra.mxu0 %v332
    %396 = vmatprep.subr.bf16.mxu0 %v337
    %397 = vmatpush1.bf16.msra.mxu0 %v336
    %398 = vmatprep.subr.bf16.mxu0 %v341
    %399 = vmatpush1.bf16.msra.mxu0 %v340
    %400 = vmatprep.subr.bf16.mxu0 %v345
    %401 = vmatpush1.bf16.msra.mxu0 %v344
    %402 = vmatprep.subr.bf16.mxu0 %v349
    %403 = vmatpush1.bf16.msra.mxu0 %v348
    %404 = vmatprep.subr.bf16.mxu0 %v353
    %405 = vmatpush1.bf16.msra.mxu0 %v352
    %406 = vmatprep.subr.bf16.mxu0 %v357
    %407 = vmatpush1.bf16.msra.mxu0 %v356
    %408 = vmatprep.subr.bf16.mxu0 0
    %409 = vmatpush1.bf16.msra.mxu0 0
    %410 = vmatprep.subr.bf16.mxu0 0
    %411 = vmatpush1.bf16.msra.mxu0 0
    %412 = vmatprep.subr.bf16.mxu0 0
    %413 = vmatpush1.bf16.msra.mxu0 0
    %414 = vmatprep.subr.bf16.mxu0 0
    %415 = vmatpush1.bf16.msra.mxu0 0
    %416 = vmatprep.subr.bf16.mxu0 0
    %417 = vmatpush1.bf16.msra.mxu0 0
    %418 = vmatprep.subr.bf16.mxu0 0
    %419 = vmatpush1.bf16.msra.mxu0 0
    %420 = vmatprep.subr.bf16.mxu0 0
    %421 = vmatpush1.bf16.msra.mxu0 0
    %422 = vmatprep.subr.bf16.mxu0 0
    %423 = vmatpush1.bf16.msra.mxu0 0
    %424 = vmatprep.mubr.bf16.mxu0 0
    %425 = vmatmul.mubr.bf16.gmra.mrb[0].mxu0 0
    %v426 = vpop.f32.mrb[0].mxu0
    %v427 = vadd.f32 0.0, %v426
    %v428 = vpop.f32.mrb[0].mxu0
    %v429 = vadd.f32 0.0, %v428
    %v430 = vpop.f32.mrb[0].mxu0
    %v431 = vpop.f32.mrb[0].mxu0
    %432 = vdwg.mxu0
    %433 = vmatprep.subr.bf16.mxu0 %v331
    %434 = vmatpush1.bf16.msra.mxu0 %v330
    %435 = vmatprep.subr.bf16.mxu0 %v335
    %436 = vmatpush1.bf16.msra.mxu0 %v334
    %437 = vmatprep.subr.bf16.mxu0 %v339
    %438 = vmatpush1.bf16.msra.mxu0 %v338
    %439 = vmatprep.subr.bf16.mxu0 %v343
    %440 = vmatpush1.bf16.msra.mxu0 %v342
    %441 = vmatprep.subr.bf16.mxu0 %v347
    %442 = vmatpush1.bf16.msra.mxu0 %v346
    %443 = vmatprep.subr.bf16.mxu0 %v351
    %444 = vmatpush1.bf16.msra.mxu0 %v350
    %445 = vmatprep.subr.bf16.mxu0 %v355
    %446 = vmatpush1.bf16.msra.mxu0 %v354
    %447 = vmatprep.subr.bf16.mxu0 %v359
    %448 = vmatpush1.bf16.msra.mxu0 %v358
    %449 = vmatprep.subr.bf16.mxu0 0
    %450 = vmatpush1.bf16.msra.mxu0 0
    %451 = vmatprep.subr.bf16.mxu0 0
    %452 = vmatpush1.bf16.msra.mxu0 0
    %453 = vmatprep.subr.bf16.mxu0 0
    %454 = vmatpush1.bf16.msra.mxu0 0
    %455 = vmatprep.subr.bf16.mxu0 0
    %456 = vmatpush1.bf16.msra.mxu0 0
    %457 = vmatprep.subr.bf16.mxu0 0
    %458 = vmatpush1.bf16.msra.mxu0 0
    %459 = vmatprep.subr.bf16.mxu0 0
    %460 = vmatpush1.bf16.msra.mxu0 0
    %461 = vmatprep.subr.bf16.mxu0 0
    %462 = vmatpush1.bf16.msra.mxu0 0
    %463 = vmatprep.subr.bf16.mxu0 0
    %464 = vmatpush1.bf16.msra.mxu0 0
    %465 = vmatprep.mubr.bf16.mxu0 0
    %466 = vmatmul.mubr.bf16.gmra.mrb[0].mxu0 0
    %v467 = vpop.f32.mrb[0].mxu0
    %v468 = vadd.f32 0.0, %v467
    %v469 = vpop.f32.mrb[0].mxu0
    %v470 = vadd.f32 0.0, %v469
    %v471 = vpop.f32.mrb[0].mxu0
    %v472 = vpop.f32.mrb[0].mxu0
    %473 = vdwg.mxu0
    %v476 = vunpack.c.l.b16 %v100
    %v477 = vunpack.c.l.b16 %v101
    %v478 = vpack.c.b16 %v476, %v476
    %v479 = vpack.c.b16 %v477, %v477
    %v480 = vunpack.c.l.b16 %v478
    %v481 = vunpack.c.l.b16 %v479
    %v482 = vrot.slane %v481, 7
    %vm483 = vcmask 1041409
    %v484 = vsel %vm483, %v482, %v480
    %v485 = vpack.c.b16 %v484, %v484
    %v519 = vunpack.c.l.b16 %v102
    %v520 = vunpack.c.h.b16 %v102
    %v521 = vunpack.c.l.b16 %v103
    %v522 = vunpack.c.h.b16 %v103
    %v523 = vunpack.c.l.b16 %v104
    %v524 = vunpack.c.h.b16 %v104
    %v525 = vunpack.c.l.b16 %v105
    %v526 = vunpack.c.h.b16 %v105
    %v527 = vunpack.c.l.b16 %v106
    %v528 = vunpack.c.h.b16 %v106
    %v529 = vunpack.c.l.b16 %v107
    %v530 = vunpack.c.h.b16 %v107
    %v531 = vunpack.c.l.b16 %v108
    %v532 = vunpack.c.h.b16 %v108
    %v533 = vunpack.c.l.b16 %v109
    %v534 = vunpack.c.h.b16 %v109
    %v535 = vunpack.c.l.b16 %v110
    %v536 = vunpack.c.h.b16 %v110
    %v537 = vunpack.c.l.b16 %v111
    %v538 = vunpack.c.h.b16 %v111
    %v539 = vunpack.c.l.b16 %v112
    %v540 = vunpack.c.h.b16 %v112
    %v541 = vunpack.c.l.b16 %v113
    %v542 = vunpack.c.h.b16 %v113
    %v543 = vunpack.c.l.b16 %v114
    %v544 = vunpack.c.h.b16 %v114
    %v545 = vunpack.c.l.b16 %v115
    %v546 = vunpack.c.h.b16 %v115
    %v547 = vunpack.c.l.b16 %v116
    %v548 = vunpack.c.h.b16 %v116
    %v549 = vunpack.c.l.b16 %v117
    %v550 = vunpack.c.h.b16 %v117
    %v551 = vunpack.c.l.b16 %v118
    %v552 = vunpack.c.h.b16 %v118
    %v553 = vunpack.c.l.b16 %v119
    %v554 = vunpack.c.h.b16 %v119
    %v555 = vunpack.c.l.b16 %v120
    %v556 = vunpack.c.h.b16 %v120
    %v557 = vunpack.c.l.b16 %v121
    %v558 = vunpack.c.h.b16 %v121
    %v559 = vunpack.c.l.b16 %v122
    %v560 = vunpack.c.h.b16 %v122
    %v561 = vunpack.c.l.b16 %v123
    %v562 = vunpack.c.h.b16 %v123
    %v563 = vunpack.c.l.b16 %v124
    %v564 = vunpack.c.h.b16 %v124
    %v565 = vunpack.c.l.b16 %v125
    %v566 = vunpack.c.h.b16 %v125
    %v567 = vunpack.c.l.b16 %v126
    %v568 = vunpack.c.h.b16 %v126
    %v569 = vunpack.c.l.b16 %v127
    %v570 = vunpack.c.h.b16 %v127
    %v571 = vunpack.c.l.b16 %v128
    %v572 = vunpack.c.h.b16 %v128
    %v573 = vunpack.c.l.b16 %v129
    %v574 = vunpack.c.h.b16 %v129
    %v575 = vunpack.c.l.b16 %v130
    %v576 = vunpack.c.h.b16 %v130
    %v577 = vunpack.c.l.b16 %v131
    %v578 = vunpack.c.h.b16 %v131
    %v579 = vunpack.c.l.b16 %v132
    %v580 = vunpack.c.h.b16 %v132
    %v581 = vunpack.c.l.b16 %v133
    %v582 = vunpack.c.h.b16 %v133
    %v583 = vpack.c.b16 %v523, %v519
    %v584 = vpack.c.b16 %v524, %v520
    %v585 = vpack.c.b16 %v525, %v521
    %v586 = vpack.c.b16 %v526, %v522
    %v587 = vpack.c.b16 %v531, %v527
    %v588 = vpack.c.b16 %v532, %v528
    %v589 = vpack.c.b16 %v533, %v529
    %v590 = vpack.c.b16 %v534, %v530
    %v591 = vpack.c.b16 %v539, %v535
    %v592 = vpack.c.b16 %v540, %v536
    %v593 = vpack.c.b16 %v541, %v537
    %v594 = vpack.c.b16 %v542, %v538
    %v595 = vpack.c.b16 %v547, %v543
    %v596 = vpack.c.b16 %v548, %v544
    %v597 = vpack.c.b16 %v549, %v545
    %v598 = vpack.c.b16 %v550, %v546
    %v599 = vpack.c.b16 %v555, %v551
    %v600 = vpack.c.b16 %v556, %v552
    %v601 = vpack.c.b16 %v557, %v553
    %v602 = vpack.c.b16 %v558, %v554
    %v603 = vpack.c.b16 %v563, %v559
    %v604 = vpack.c.b16 %v564, %v560
    %v605 = vpack.c.b16 %v565, %v561
    %v606 = vpack.c.b16 %v566, %v562
    %v607 = vpack.c.b16 %v571, %v567
    %v608 = vpack.c.b16 %v572, %v568
    %v609 = vpack.c.b16 %v573, %v569
    %v610 = vpack.c.b16 %v574, %v570
    %v611 = vpack.c.b16 %v579, %v575
    %v612 = vpack.c.b16 %v580, %v576
    %v613 = vpack.c.b16 %v581, %v577
    %v614 = vpack.c.b16 %v582, %v578
    %647 = vmatprep.subr.bf16.mxu0 %v584
    %648 = vmatpush1.bf16.msra.mxu0 %v583
    %649 = vmatprep.subr.bf16.mxu0 %v588
    %650 = vmatpush1.bf16.msra.mxu0 %v587
    %651 = vmatprep.subr.bf16.mxu0 %v592
    %652 = vmatpush1.bf16.msra.mxu0 %v591
    %653 = vmatprep.subr.bf16.mxu0 %v596
    %654 = vmatpush1.bf16.msra.mxu0 %v595
    %655 = vmatprep.subr.bf16.mxu0 %v600
    %656 = vmatpush1.bf16.msra.mxu0 %v599
    %657 = vmatprep.subr.bf16.mxu0 %v604
    %658 = vmatpush1.bf16.msra.mxu0 %v603
    %659 = vmatprep.subr.bf16.mxu0 %v608
    %660 = vmatpush1.bf16.msra.mxu0 %v607
    %661 = vmatprep.subr.bf16.mxu0 %v612
    %662 = vmatpush1.bf16.msra.mxu0 %v611
    %663 = vmatprep.subr.bf16.mxu0 0
    %664 = vmatpush1.bf16.msra.mxu0 0
    %665 = vmatprep.subr.bf16.mxu0 0
    %666 = vmatpush1.bf16.msra.mxu0 0
    %667 = vmatprep.subr.bf16.mxu0 0
    %668 = vmatpush1.bf16.msra.mxu0 0
    %669 = vmatprep.subr.bf16.mxu0 0
    %670 = vmatpush1.bf16.msra.mxu0 0
    %671 = vmatprep.subr.bf16.mxu0 0
    %672 = vmatpush1.bf16.msra.mxu0 0
    %673 = vmatprep.subr.bf16.mxu0 0
    %674 = vmatpush1.bf16.msra.mxu0 0
    %675 = vmatprep.subr.bf16.mxu0 0
    %676 = vmatpush1.bf16.msra.mxu0 0
    %677 = vmatprep.subr.bf16.mxu0 0
    %678 = vmatpush1.bf16.msra.mxu0 0
    %679 = vmatprep.mubr.bf16.mxu0 0
    %680 = vmatmul.mubr.bf16.gmra.mrb[0].mxu0 %v485
    %v681 = vpop.f32.mrb[0].mxu0
    %v682 = vadd.f32 %v427, %v681
    %v683 = vpop.f32.mrb[0].mxu0
    %v684 = vadd.f32 %v429, %v683
    %v685 = vpop.f32.mrb[0].mxu0
    %v686 = vpop.f32.mrb[0].mxu0
    %687 = vdwg.mxu0
    %688 = vmatprep.subr.bf16.mxu0 %v586
    %689 = vmatpush1.bf16.msra.mxu0 %v585
    %690 = vmatprep.subr.bf16.mxu0 %v590
    %691 = vmatpush1.bf16.msra.mxu0 %v589
    %692 = vmatprep.subr.bf16.mxu0 %v594
    %693 = vmatpush1.bf16.msra.mxu0 %v593
    %694 = vmatprep.subr.bf16.mxu0 %v598
    %695 = vmatpush1.bf16.msra.mxu0 %v597
    %696 = vmatprep.subr.bf16.mxu0 %v602
    %697 = vmatpush1.bf16.msra.mxu0 %v601
    %698 = vmatprep.subr.bf16.mxu0 %v606
    %699 = vmatpush1.bf16.msra.mxu0 %v605
    %700 = vmatprep.subr.bf16.mxu0 %v610
    %701 = vmatpush1.bf16.msra.mxu0 %v609
    %702 = vmatprep.subr.bf16.mxu0 %v614
    %703 = vmatpush1.bf16.msra.mxu0 %v613
    %704 = vmatprep.subr.bf16.mxu0 0
    %705 = vmatpush1.bf16.msra.mxu0 0
    %706 = vmatprep.subr.bf16.mxu0 0
    %707 = vmatpush1.bf16.msra.mxu0 0
    %708 = vmatprep.subr.bf16.mxu0 0
    %709 = vmatpush1.bf16.msra.mxu0 0
    %710 = vmatprep.subr.bf16.mxu0 0
    %711 = vmatpush1.bf16.msra.mxu0 0
    %712 = vmatprep.subr.bf16.mxu0 0
    %713 = vmatpush1.bf16.msra.mxu0 0
    %714 = vmatprep.subr.bf16.mxu0 0
    %715 = vmatpush1.bf16.msra.mxu0 0
    %716 = vmatprep.subr.bf16.mxu0 0
    %717 = vmatpush1.bf16.msra.mxu0 0
    %718 = vmatprep.subr.bf16.mxu0 0
    %719 = vmatpush1.bf16.msra.mxu0 0
    %720 = vmatprep.mubr.bf16.mxu0 0
    %721 = vmatmul.mubr.bf16.gmra.mrb[0].mxu0 %v485
    %v722 = vpop.f32.mrb[0].mxu0
    %v723 = vadd.f32 %v468, %v722
    %v724 = vpop.f32.mrb[0].mxu0
    %v725 = vadd.f32 %v470, %v724
    %v726 = vpop.f32.mrb[0].mxu0
    %v727 = vpop.f32.mrb[0].mxu0
    %728 = vdwg.mxu0
    %v730 = vlaneseq
    %v731 = vshrl.u32 %v730, 7
    %v732 = vsub.s32 0, %v731
    %v733 = vrot.slane %v166, %v732
    %v734 = vlaneseq
    %v735 = vshrl.u32 %v734, 7
    %v736 = vsub.s32 1, %v735
    %v737 = vrot.slane %v166, %v736
    %v738 = vlaneseq
    %v739 = vshrl.u32 %v738, 7
    %v740 = vsub.s32 2, %v739
    %v741 = vrot.slane %v166, %v740
    %v742 = vlaneseq
    %v743 = vshrl.u32 %v742, 7
    %v744 = vsub.s32 3, %v743
    %v745 = vrot.slane %v166, %v744
    %v750 = vadd.f32 %v682, %v733
    %v751 = vadd.f32 %v684, %v737
    %v752 = vadd.f32 %v723, %v741
    %v753 = vadd.f32 %v725, %v745
    %v754 = vxor.u32 %v750, 2147483648
    %v755 = vmul.f32 %v754, 1.442695
    %v756 = vpow.pop %v755
    %v757 = vadd.f32 %v756, 1.0
    %v758 = vrcp.pop %v757
    %v759 = vmul.f32 1.0, %v758
    %v760 = vxor.u32 %v751, 2147483648
    %v761 = vmul.f32 %v760, 1.442695
    %v762 = vpow.pop %v761
    %v763 = vadd.f32 %v762, 1.0
    %v764 = vrcp.pop %v763
    %v765 = vmul.f32 1.0, %v764
    %v766 = vtanh.pop %v752
    %v767 = vxor.u32 %v753, 2147483648
    %v768 = vmul.f32 %v767, 1.442695
    %v769 = vpow.pop %v768
    %v770 = vadd.f32 %v769, 1.0
    %v771 = vrcp.pop %v770
    %v772 = vmul.f32 1.0, %v771
    %v773 = vmul.f32 %v765, 0.0
    %v774 = vmul.f32 %v759, %v766
    %v775 = vadd.f32 %v773, %v774
    %v776 = vtanh.pop %v775
    %v777 = vmul.f32 %v772, %v776
    %v810 = vunpack.c.l.b16 %v199
    %v811 = vunpack.c.h.b16 %v199
    %v812 = vunpack.c.l.b16 %v200
    %v813 = vunpack.c.h.b16 %v200
    %v814 = vunpack.c.l.b16 %v201
    %v815 = vunpack.c.h.b16 %v201
    %v816 = vunpack.c.l.b16 %v202
    %v817 = vunpack.c.h.b16 %v202
    %v818 = vunpack.c.l.b16 %v203
    %v819 = vunpack.c.h.b16 %v203
    %v820 = vunpack.c.l.b16 %v204
    %v821 = vunpack.c.h.b16 %v204
    %v822 = vunpack.c.l.b16 %v205
    %v823 = vunpack.c.h.b16 %v205
    %v824 = vunpack.c.l.b16 %v206
    %v825 = vunpack.c.h.b16 %v206
    %v826 = vunpack.c.l.b16 %v207
    %v827 = vunpack.c.h.b16 %v207
    %v828 = vunpack.c.l.b16 %v208
    %v829 = vunpack.c.h.b16 %v208
    %v830 = vunpack.c.l.b16 %v209
    %v831 = vunpack.c.h.b16 %v209
    %v832 = vunpack.c.l.b16 %v210
    %v833 = vunpack.c.h.b16 %v210
    %v834 = vunpack.c.l.b16 %v211
    %v835 = vunpack.c.h.b16 %v211
    %v836 = vunpack.c.l.b16 %v212
    %v837 = vunpack.c.h.b16 %v212
    %v838 = vunpack.c.l.b16 %v213
    %v839 = vunpack.c.h.b16 %v213
    %v840 = vunpack.c.l.b16 %v214
    %v841 = vunpack.c.h.b16 %v214
    %v842 = vunpack.c.l.b16 %v215
    %v843 = vunpack.c.h.b16 %v215
    %v844 = vunpack.c.l.b16 %v216
    %v845 = vunpack.c.h.b16 %v216
    %v846 = vunpack.c.l.b16 %v217
    %v847 = vunpack.c.h.b16 %v217
    %v848 = vunpack.c.l.b16 %v218
    %v849 = vunpack.c.h.b16 %v218
    %v850 = vunpack.c.l.b16 %v219
    %v851 = vunpack.c.h.b16 %v219
    %v852 = vunpack.c.l.b16 %v220
    %v853 = vunpack.c.h.b16 %v220
    %v854 = vunpack.c.l.b16 %v221
    %v855 = vunpack.c.h.b16 %v221
    %v856 = vunpack.c.l.b16 %v222
    %v857 = vunpack.c.h.b16 %v222
    %v858 = vunpack.c.l.b16 %v223
    %v859 = vunpack.c.h.b16 %v223
    %v860 = vunpack.c.l.b16 %v224
    %v861 = vunpack.c.h.b16 %v224
    %v862 = vunpack.c.l.b16 %v225
    %v863 = vunpack.c.h.b16 %v225
    %v864 = vunpack.c.l.b16 %v226
    %v865 = vunpack.c.h.b16 %v226
    %v866 = vunpack.c.l.b16 %v227
    %v867 = vunpack.c.h.b16 %v227
    %v868 = vunpack.c.l.b16 %v228
    %v869 = vunpack.c.h.b16 %v228
    %v870 = vunpack.c.l.b16 %v229
    %v871 = vunpack.c.h.b16 %v229
    %v872 = vunpack.c.l.b16 %v230
    %v873 = vunpack.c.h.b16 %v230
    %v874 = vpack.c.b16 %v814, %v810
    %v875 = vpack.c.b16 %v815, %v811
    %v876 = vpack.c.b16 %v816, %v812
    %v877 = vpack.c.b16 %v817, %v813
    %v878 = vpack.c.b16 %v822, %v818
    %v879 = vpack.c.b16 %v823, %v819
    %v880 = vpack.c.b16 %v824, %v820
    %v881 = vpack.c.b16 %v825, %v821
    %v882 = vpack.c.b16 %v830, %v826
    %v883 = vpack.c.b16 %v831, %v827
    %v884 = vpack.c.b16 %v832, %v828
    %v885 = vpack.c.b16 %v833, %v829
    %v886 = vpack.c.b16 %v838, %v834
    %v887 = vpack.c.b16 %v839, %v835
    %v888 = vpack.c.b16 %v840, %v836
    %v889 = vpack.c.b16 %v841, %v837
    %v890 = vpack.c.b16 %v846, %v842
    %v891 = vpack.c.b16 %v847, %v843
    %v892 = vpack.c.b16 %v848, %v844
    %v893 = vpack.c.b16 %v849, %v845
    %v894 = vpack.c.b16 %v854, %v850
    %v895 = vpack.c.b16 %v855, %v851
    %v896 = vpack.c.b16 %v856, %v852
    %v897 = vpack.c.b16 %v857, %v853
    %v898 = vpack.c.b16 %v862, %v858
    %v899 = vpack.c.b16 %v863, %v859
    %v900 = vpack.c.b16 %v864, %v860
    %v901 = vpack.c.b16 %v865, %v861
    %v902 = vpack.c.b16 %v870, %v866
    %v903 = vpack.c.b16 %v871, %v867
    %v904 = vpack.c.b16 %v872, %v868
    %v905 = vpack.c.b16 %v873, %v869
    %938 = vmatprep.subr.bf16.mxu0 %v875
    %939 = vmatpush1.bf16.msra.mxu0 %v874
    %940 = vmatprep.subr.bf16.mxu0 %v879
    %941 = vmatpush1.bf16.msra.mxu0 %v878
    %942 = vmatprep.subr.bf16.mxu0 %v883
    %943 = vmatpush1.bf16.msra.mxu0 %v882
    %944 = vmatprep.subr.bf16.mxu0 %v887
    %945 = vmatpush1.bf16.msra.mxu0 %v886
    %946 = vmatprep.subr.bf16.mxu0 %v891
    %947 = vmatpush1.bf16.msra.mxu0 %v890
    %948 = vmatprep.subr.bf16.mxu0 %v895
    %949 = vmatpush1.bf16.msra.mxu0 %v894
    %950 = vmatprep.subr.bf16.mxu0 %v899
    %951 = vmatpush1.bf16.msra.mxu0 %v898
    %952 = vmatprep.subr.bf16.mxu0 %v903
    %953 = vmatpush1.bf16.msra.mxu0 %v902
    %954 = vmatprep.subr.bf16.mxu0 0
    %955 = vmatpush1.bf16.msra.mxu0 0
    %956 = vmatprep.subr.bf16.mxu0 0
    %957 = vmatpush1.bf16.msra.mxu0 0
    %958 = vmatprep.subr.bf16.mxu0 0
    %959 = vmatpush1.bf16.msra.mxu0 0
    %960 = vmatprep.subr.bf16.mxu0 0
    %961 = vmatpush1.bf16.msra.mxu0 0
    %962 = vmatprep.subr.bf16.mxu0 0
    %963 = vmatpush1.bf16.msra.mxu0 0
    %964 = vmatprep.subr.bf16.mxu0 0
    %965 = vmatpush1.bf16.msra.mxu0 0
    %966 = vmatprep.subr.bf16.mxu0 0
    %967 = vmatpush1.bf16.msra.mxu0 0
    %968 = vmatprep.subr.bf16.mxu0 0
    %969 = vmatpush1.bf16.msra.mxu0 0
    %970 = vmatprep.mubr.bf16.mxu0 0
    %971 = vmatmul.mubr.bf16.gmra.mrb[0].mxu0 0
    %v972 = vpop.f32.mrb[0].mxu0
    %v973 = vadd.f32 0.0, %v972
    %v974 = vpop.f32.mrb[0].mxu0
    %v975 = vadd.f32 0.0, %v974
    %v976 = vpop.f32.mrb[0].mxu0
    %v977 = vpop.f32.mrb[0].mxu0
    %978 = vdwg.mxu0
    %979 = vmatprep.subr.bf16.mxu0 %v877
    %980 = vmatpush1.bf16.msra.mxu0 %v876
    %981 = vmatprep.subr.bf16.mxu0 %v881
    %982 = vmatpush1.bf16.msra.mxu0 %v880
    %983 = vmatprep.subr.bf16.mxu0 %v885
    %984 = vmatpush1.bf16.msra.mxu0 %v884
    %985 = vmatprep.subr.bf16.mxu0 %v889
    %986 = vmatpush1.bf16.msra.mxu0 %v888
    %987 = vmatprep.subr.bf16.mxu0 %v893
    %988 = vmatpush1.bf16.msra.mxu0 %v892
    %989 = vmatprep.subr.bf16.mxu0 %v897
    %990 = vmatpush1.bf16.msra.mxu0 %v896
    %991 = vmatprep.subr.bf16.mxu0 %v901
    %992 = vmatpush1.bf16.msra.mxu0 %v900
    %993 = vmatprep.subr.bf16.mxu0 %v905
    %994 = vmatpush1.bf16.msra.mxu0 %v904
    %995 = vmatprep.subr.bf16.mxu0 0
    %996 = vmatpush1.bf16.msra.mxu0 0
    %997 = vmatprep.subr.bf16.mxu0 0
    %998 = vmatpush1.bf16.msra.mxu0 0
    %999 = vmatprep.subr.bf16.mxu0 0
    %1000 = vmatpush1.bf16.msra.mxu0 0
    %1001 = vmatprep.subr.bf16.mxu0 0
    %1002 = vmatpush1.bf16.msra.mxu0 0
    %1003 = vmatprep.subr.bf16.mxu0 0
    %1004 = vmatpush1.bf16.msra.mxu0 0
    %1005 = vmatprep.subr.bf16.mxu0 0
    %1006 = vmatpush1.bf16.msra.mxu0 0
    %1007 = vmatprep.subr.bf16.mxu0 0
    %1008 = vmatpush1.bf16.msra.mxu0 0
    %1009 = vmatprep.subr.bf16.mxu0 0
    %1010 = vmatpush1.bf16.msra.mxu0 0
    %1011 = vmatprep.mubr.bf16.mxu0 0
    %1012 = vmatmul.mubr.bf16.gmra.mrb[0].mxu0 0
    %v1013 = vpop.f32.mrb[0].mxu0
    %v1014 = vadd.f32 0.0, %v1013
    %v1015 = vpop.f32.mrb[0].mxu0
    %v1016 = vadd.f32 0.0, %v1015
    %v1017 = vpop.f32.mrb[0].mxu0
    %v1018 = vpop.f32.mrb[0].mxu0
    %1019 = vdwg.mxu0
    %v1020 = vrot.slane %v480, 7
    %v1021 = vrot.slane %v481, 6
    %v1022 = vsel %vm483, %v1021, %v1020
    %v1023 = vpack.c.b16 %v1022, %v1022
    %v1057 = vunpack.c.l.b16 %v167
    %v1058 = vunpack.c.h.b16 %v167
    %v1059 = vunpack.c.l.b16 %v168
    %v1060 = vunpack.c.h.b16 %v168
    %v1061 = vunpack.c.l.b16 %v169
    %v1062 = vunpack.c.h.b16 %v169
    %v1063 = vunpack.c.l.b16 %v170
    %v1064 = vunpack.c.h.b16 %v170
    %v1065 = vunpack.c.l.b16 %v171
    %v1066 = vunpack.c.h.b16 %v171
    %v1067 = vunpack.c.l.b16 %v172
    %v1068 = vunpack.c.h.b16 %v172
    %v1069 = vunpack.c.l.b16 %v173
    %v1070 = vunpack.c.h.b16 %v173
    %v1071 = vunpack.c.l.b16 %v174
    %v1072 = vunpack.c.h.b16 %v174
    %v1073 = vunpack.c.l.b16 %v175
    %v1074 = vunpack.c.h.b16 %v175
    %v1075 = vunpack.c.l.b16 %v176
    %v1076 = vunpack.c.h.b16 %v176
    %v1077 = vunpack.c.l.b16 %v177
    %v1078 = vunpack.c.h.b16 %v177
    %v1079 = vunpack.c.l.b16 %v178
    %v1080 = vunpack.c.h.b16 %v178
    %v1081 = vunpack.c.l.b16 %v179
    %v1082 = vunpack.c.h.b16 %v179
    %v1083 = vunpack.c.l.b16 %v180
    %v1084 = vunpack.c.h.b16 %v180
    %v1085 = vunpack.c.l.b16 %v181
    %v1086 = vunpack.c.h.b16 %v181
    %v1087 = vunpack.c.l.b16 %v182
    %v1088 = vunpack.c.h.b16 %v182
    %v1089 = vunpack.c.l.b16 %v183
    %v1090 = vunpack.c.h.b16 %v183
    %v1091 = vunpack.c.l.b16 %v184
    %v1092 = vunpack.c.h.b16 %v184
    %v1093 = vunpack.c.l.b16 %v185
    %v1094 = vunpack.c.h.b16 %v185
    %v1095 = vunpack.c.l.b16 %v186
    %v1096 = vunpack.c.h.b16 %v186
    %v1097 = vunpack.c.l.b16 %v187
    %v1098 = vunpack.c.h.b16 %v187
    %v1099 = vunpack.c.l.b16 %v188
    %v1100 = vunpack.c.h.b16 %v188
    %v1101 = vunpack.c.l.b16 %v189
    %v1102 = vunpack.c.h.b16 %v189
    %v1103 = vunpack.c.l.b16 %v190
    %v1104 = vunpack.c.h.b16 %v190
    %v1105 = vunpack.c.l.b16 %v191
    %v1106 = vunpack.c.h.b16 %v191
    %v1107 = vunpack.c.l.b16 %v192
    %v1108 = vunpack.c.h.b16 %v192
    %v1109 = vunpack.c.l.b16 %v193
    %v1110 = vunpack.c.h.b16 %v193
    %v1111 = vunpack.c.l.b16 %v194
    %v1112 = vunpack.c.h.b16 %v194
    %v1113 = vunpack.c.l.b16 %v195
    %v1114 = vunpack.c.h.b16 %v195
    %v1115 = vunpack.c.l.b16 %v196
    %v1116 = vunpack.c.h.b16 %v196
    %v1117 = vunpack.c.l.b16 %v197
    %v1118 = vunpack.c.h.b16 %v197
    %v1119 = vunpack.c.l.b16 %v198
    %v1120 = vunpack.c.h.b16 %v198
    %v1121 = vpack.c.b16 %v1061, %v1057
    %v1122 = vpack.c.b16 %v1062, %v1058
    %v1123 = vpack.c.b16 %v1063, %v1059
    %v1124 = vpack.c.b16 %v1064, %v1060
    %v1125 = vpack.c.b16 %v1069, %v1065
    %v1126 = vpack.c.b16 %v1070, %v1066
    %v1127 = vpack.c.b16 %v1071, %v1067
    %v1128 = vpack.c.b16 %v1072, %v1068
    %v1129 = vpack.c.b16 %v1077, %v1073
    %v1130 = vpack.c.b16 %v1078, %v1074
    %v1131 = vpack.c.b16 %v1079, %v1075
    %v1132 = vpack.c.b16 %v1080, %v1076
    %v1133 = vpack.c.b16 %v1085, %v1081
    %v1134 = vpack.c.b16 %v1086, %v1082
    %v1135 = vpack.c.b16 %v1087, %v1083
    %v1136 = vpack.c.b16 %v1088, %v1084
    %v1137 = vpack.c.b16 %v1093, %v1089
    %v1138 = vpack.c.b16 %v1094, %v1090
    %v1139 = vpack.c.b16 %v1095, %v1091
    %v1140 = vpack.c.b16 %v1096, %v1092
    %v1141 = vpack.c.b16 %v1101, %v1097
    %v1142 = vpack.c.b16 %v1102, %v1098
    %v1143 = vpack.c.b16 %v1103, %v1099
    %v1144 = vpack.c.b16 %v1104, %v1100
    %v1145 = vpack.c.b16 %v1109, %v1105
    %v1146 = vpack.c.b16 %v1110, %v1106
    %v1147 = vpack.c.b16 %v1111, %v1107
    %v1148 = vpack.c.b16 %v1112, %v1108
    %v1149 = vpack.c.b16 %v1117, %v1113
    %v1150 = vpack.c.b16 %v1118, %v1114
    %v1151 = vpack.c.b16 %v1119, %v1115
    %v1152 = vpack.c.b16 %v1120, %v1116
    %1185 = vmatprep.subr.bf16.mxu0 %v1122
    %1186 = vmatpush1.bf16.msra.mxu0 %v1121
    %1187 = vmatprep.subr.bf16.mxu0 %v1126
    %1188 = vmatpush1.bf16.msra.mxu0 %v1125
    %1189 = vmatprep.subr.bf16.mxu0 %v1130
    %1190 = vmatpush1.bf16.msra.mxu0 %v1129
    %1191 = vmatprep.subr.bf16.mxu0 %v1134
    %1192 = vmatpush1.bf16.msra.mxu0 %v1133
    %1193 = vmatprep.subr.bf16.mxu0 %v1138
    %1194 = vmatpush1.bf16.msra.mxu0 %v1137
    %1195 = vmatprep.subr.bf16.mxu0 %v1142
    %1196 = vmatpush1.bf16.msra.mxu0 %v1141
    %1197 = vmatprep.subr.bf16.mxu0 %v1146
    %1198 = vmatpush1.bf16.msra.mxu0 %v1145
    %1199 = vmatprep.subr.bf16.mxu0 %v1150
    %1200 = vmatpush1.bf16.msra.mxu0 %v1149
    %1201 = vmatprep.subr.bf16.mxu0 0
    %1202 = vmatpush1.bf16.msra.mxu0 0
    %1203 = vmatprep.subr.bf16.mxu0 0
    %1204 = vmatpush1.bf16.msra.mxu0 0
    %1205 = vmatprep.subr.bf16.mxu0 0
    %1206 = vmatpush1.bf16.msra.mxu0 0
    %1207 = vmatprep.subr.bf16.mxu0 0
    %1208 = vmatpush1.bf16.msra.mxu0 0
    %1209 = vmatprep.subr.bf16.mxu0 0
    %1210 = vmatpush1.bf16.msra.mxu0 0
    %1211 = vmatprep.subr.bf16.mxu0 0
    %1212 = vmatpush1.bf16.msra.mxu0 0
    %1213 = vmatprep.subr.bf16.mxu0 0
    %1214 = vmatpush1.bf16.msra.mxu0 0
    %1215 = vmatprep.subr.bf16.mxu0 0
    %1216 = vmatpush1.bf16.msra.mxu0 0
    %1217 = vmatprep.mubr.bf16.mxu0 0
    %1218 = vmatmul.mubr.bf16.gmra.mrb[0].mxu0 %v1023
    %v1219 = vpop.f32.mrb[0].mxu0
    %v1220 = vadd.f32 %v973, %v1219
    %v1221 = vpop.f32.mrb[0].mxu0
    %v1222 = vadd.f32 %v975, %v1221
    %v1223 = vpop.f32.mrb[0].mxu0
    %v1224 = vpop.f32.mrb[0].mxu0
    %1225 = vdwg.mxu0
    %1226 = vmatprep.subr.bf16.mxu0 %v1124
    %1227 = vmatpush1.bf16.msra.mxu0 %v1123
    %1228 = vmatprep.subr.bf16.mxu0 %v1128
    %1229 = vmatpush1.bf16.msra.mxu0 %v1127
    %1230 = vmatprep.subr.bf16.mxu0 %v1132
    %1231 = vmatpush1.bf16.msra.mxu0 %v1131
    %1232 = vmatprep.subr.bf16.mxu0 %v1136
    %1233 = vmatpush1.bf16.msra.mxu0 %v1135
    %1234 = vmatprep.subr.bf16.mxu0 %v1140
    %1235 = vmatpush1.bf16.msra.mxu0 %v1139
    %1236 = vmatprep.subr.bf16.mxu0 %v1144
    %1237 = vmatpush1.bf16.msra.mxu0 %v1143
    %1238 = vmatprep.subr.bf16.mxu0 %v1148
    %1239 = vmatpush1.bf16.msra.mxu0 %v1147
    %1240 = vmatprep.subr.bf16.mxu0 %v1152
    %1241 = vmatpush1.bf16.msra.mxu0 %v1151
    %1242 = vmatprep.subr.bf16.mxu0 0
    %1243 = vmatpush1.bf16.msra.mxu0 0
    %1244 = vmatprep.subr.bf16.mxu0 0
    %1245 = vmatpush1.bf16.msra.mxu0 0
    %1246 = vmatprep.subr.bf16.mxu0 0
    %1247 = vmatpush1.bf16.msra.mxu0 0
    %1248 = vmatprep.subr.bf16.mxu0 0
    %1249 = vmatpush1.bf16.msra.mxu0 0
    %1250 = vmatprep.subr.bf16.mxu0 0
    %1251 = vmatpush1.bf16.msra.mxu0 0
    %1252 = vmatprep.subr.bf16.mxu0 0
    %1253 = vmatpush1.bf16.msra.mxu0 0
    %1254 = vmatprep.subr.bf16.mxu0 0
    %1255 = vmatpush1.bf16.msra.mxu0 0
    %1256 = vmatprep.subr.bf16.mxu0 0
    %1257 = vmatpush1.bf16.msra.mxu0 0
    %1258 = vmatprep.mubr.bf16.mxu0 0
    %1259 = vmatmul.mubr.bf16.gmra.mrb[0].mxu0 %v1023
    %v1260 = vpop.f32.mrb[0].mxu0
    %v1261 = vadd.f32 %v1014, %v1260
    %v1262 = vpop.f32.mrb[0].mxu0
    %v1263 = vadd.f32 %v1016, %v1262
    %v1264 = vpop.f32.mrb[0].mxu0
    %v1265 = vpop.f32.mrb[0].mxu0
    %1266 = vdwg.mxu0
    %v1268 = vlaneseq
    %v1269 = vshrl.u32 %v1268, 7
    %v1270 = vsub.s32 0, %v1269
    %v1271 = vrot.slane %v231, %v1270
    %v1272 = vlaneseq
    %v1273 = vshrl.u32 %v1272, 7
    %v1274 = vsub.s32 1, %v1273
    %v1275 = vrot.slane %v231, %v1274
    %v1276 = vlaneseq
    %v1277 = vshrl.u32 %v1276, 7
    %v1278 = vsub.s32 2, %v1277
    %v1279 = vrot.slane %v231, %v1278
    %v1280 = vlaneseq
    %v1281 = vshrl.u32 %v1280, 7
    %v1282 = vsub.s32 3, %v1281
    %v1283 = vrot.slane %v231, %v1282
    %v1288 = vadd.f32 %v1220, %v1271
    %v1289 = vadd.f32 %v1222, %v1275
    %v1290 = vadd.f32 %v1261, %v1279
    %v1291 = vadd.f32 %v1263, %v1283
    %v1292 = vxor.u32 %v1288, 2147483648
    %v1293 = vmul.f32 %v1292, 1.442695
    %v1294 = vpow.pop %v1293
    %v1295 = vadd.f32 %v1294, 1.0
    %v1296 = vrcp.pop %v1295
    %v1297 = vmul.f32 1.0, %v1296
    %v1298 = vxor.u32 %v1289, 2147483648
    %v1299 = vmul.f32 %v1298, 1.442695
    %v1300 = vpow.pop %v1299
    %v1301 = vadd.f32 %v1300, 1.0
    %v1302 = vrcp.pop %v1301
    %v1303 = vmul.f32 1.0, %v1302
    %v1304 = vtanh.pop %v1290
    %v1305 = vxor.u32 %v1291, 2147483648
    %v1306 = vmul.f32 %v1305, 1.442695
    %v1307 = vpow.pop %v1306
    %v1308 = vadd.f32 %v1307, 1.0
    %v1309 = vrcp.pop %v1308
    %v1310 = vmul.f32 1.0, %v1309
    %v1311 = vmul.f32 %v1303, 0.0
    %v1312 = vmul.f32 %v1297, %v1304
    %v1313 = vadd.f32 %v1311, %v1312
    %v1314 = vtanh.pop %v1313
    %v1315 = vmul.f32 %v1310, %v1314
    %v1318 = vunpack.c.l.s4 1966171168
    %v1319 = vunpack.c.0.s8 %v1318
    %v1320 = vlaneseq
    %v1321 = vshrl.u32 %v1320, 7
    %v1322 = vsub.s32 %v1319, %v1321
    %v1323 = vrot.slane %v777, %v1322
    %v1324 = vcombine.high %v1323, %v1323
    %v1326 = vunpack.c.l.s4 1966171168
    %v1327 = vunpack.c.0.s8 %v1326
    %v1328 = vlaneseq
    %v1329 = vshrl.u32 %v1328, 7
    %v1330 = vsub.s32 %v1327, %v1329
    %v1331 = vrot.slane %v1323, %v1330
    %v1333 = vunpack.c.l.s4 1966171168
    %v1334 = vunpack.c.0.s8 %v1333
    %v1335 = vlaneseq
    %v1336 = vshrl.u32 %v1335, 7
    %v1337 = vsub.s32 %v1334, %v1336
    %v1338 = vrot.slane %v1324, %v1337
    %1341 = vst [vmem:[#allocation11] sm:$0x1] %v1331
    %1342 = vst [vmem:[#allocation11 + $0x10] sm:$0x1] %v1338
    %v1345 = vunpack.c.l.s4 1966171168
    %v1346 = vunpack.c.0.s8 %v1345
    %v1347 = vlaneseq
    %v1348 = vshrl.u32 %v1347, 7
    %v1349 = vsub.s32 %v1346, %v1348
    %v1350 = vrot.slane %v1315, %v1349
    %v1351 = vcombine.high %v1350, %v1350
    %v1353 = vunpack.c.l.s4 1966171168
    %v1354 = vunpack.c.0.s8 %v1353
    %v1355 = vlaneseq
    %v1356 = vshrl.u32 %v1355, 7
    %v1357 = vsub.s32 %v1354, %v1356
    %v1358 = vrot.slane %v1350, %v1357
    %v1360 = vunpack.c.l.s4 1966171168
    %v1361 = vunpack.c.0.s8 %v1360
    %v1362 = vlaneseq
    %v1363 = vshrl.u32 %v1362, 7
    %v1364 = vsub.s32 %v1361, %v1363
    %v1365 = vrot.slane %v1351, %v1364
    %1368 = vst [vmem:[#allocation11 + $0xf] sm:$0x1] %v1358
    %1369 = vst [vmem:[#allocation11 + $0x1f] sm:$0x1] %v1365
    %v1370 = vpack.c.bf16 %v777, %v777
    %1371 = vmatprep.subr.bf16.mxu0 %v329
    %1372 = vmatpush1.bf16.msra.mxu0 %v328
    %1373 = vmatprep.subr.bf16.mxu0 %v333
    %1374 = vmatpush1.bf16.msra.mxu0 %v332
    %1375 = vmatprep.subr.bf16.mxu0 %v337
    %1376 = vmatpush1.bf16.msra.mxu0 %v336
    %1377 = vmatprep.subr.bf16.mxu0 %v341
    %1378 = vmatpush1.bf16.msra.mxu0 %v340
    %1379 = vmatprep.subr.bf16.mxu0 %v345
    %1380 = vmatpush1.bf16.msra.mxu0 %v344
    %1381 = vmatprep.subr.bf16.mxu0 %v349
    %1382 = vmatpush1.bf16.msra.mxu0 %v348
    %1383 = vmatprep.subr.bf16.mxu0 %v353
    %1384 = vmatpush1.bf16.msra.mxu0 %v352
    %1385 = vmatprep.subr.bf16.mxu0 %v357
    %1386 = vmatpush1.bf16.msra.mxu0 %v356
    %1387 = vmatprep.subr.bf16.mxu0 0
    %1388 = vmatpush1.bf16.msra.mxu0 0
    %1389 = vmatprep.subr.bf16.mxu0 0
    %1390 = vmatpush1.bf16.msra.mxu0 0
    %1391 = vmatprep.subr.bf16.mxu0 0
    %1392 = vmatpush1.bf16.msra.mxu0 0
    %1393 = vmatprep.subr.bf16.mxu0 0
    %1394 = vmatpush1.bf16.msra.mxu0 0
    %1395 = vmatprep.subr.bf16.mxu0 0
    %1396 = vmatpush1.bf16.msra.mxu0 0
    %1397 = vmatprep.subr.bf16.mxu0 0
    %1398 = vmatpush1.bf16.msra.mxu0 0
    %1399 = vmatprep.subr.bf16.mxu0 0
    %1400 = vmatpush1.bf16.msra.mxu0 0
    %1401 = vmatprep.subr.bf16.mxu0 0
    %1402 = vmatpush1.bf16.msra.mxu0 0
    %1403 = vmatprep.mubr.bf16.mxu0 0
    %1404 = vmatmul.mubr.bf16.gmra.mrb[0].mxu0 %v1370
    %v1405 = vpop.f32.mrb[0].mxu0
    %v1406 = vadd.f32 0.0, %v1405
    %v1407 = vpop.f32.mrb[0].mxu0
    %v1408 = vadd.f32 0.0, %v1407
    %v1409 = vpop.f32.mrb[0].mxu0
    %v1410 = vpop.f32.mrb[0].mxu0
    %1411 = vdwg.mxu0
    %1412 = vmatprep.subr.bf16.mxu0 %v331
    %1413 = vmatpush1.bf16.msra.mxu0 %v330
    %1414 = vmatprep.subr.bf16.mxu0 %v335
    %1415 = vmatpush1.bf16.msra.mxu0 %v334
    %1416 = vmatprep.subr.bf16.mxu0 %v339
    %1417 = vmatpush1.bf16.msra.mxu0 %v338
    %1418 = vmatprep.subr.bf16.mxu0 %v343
    %1419 = vmatpush1.bf16.msra.mxu0 %v342
    %1420 = vmatprep.subr.bf16.mxu0 %v347
    %1421 = vmatpush1.bf16.msra.mxu0 %v346
    %1422 = vmatprep.subr.bf16.mxu0 %v351
    %1423 = vmatpush1.bf16.msra.mxu0 %v350
    %1424 = vmatprep.subr.bf16.mxu0 %v355
    %1425 = vmatpush1.bf16.msra.mxu0 %v354
    %1426 = vmatprep.subr.bf16.mxu0 %v359
    %1427 = vmatpush1.bf16.msra.mxu0 %v358
    %1428 = vmatprep.subr.bf16.mxu0 0
    %1429 = vmatpush1.bf16.msra.mxu0 0
    %1430 = vmatprep.subr.bf16.mxu0 0
    %1431 = vmatpush1.bf16.msra.mxu0 0
    %1432 = vmatprep.subr.bf16.mxu0 0
    %1433 = vmatpush1.bf16.msra.mxu0 0
    %1434 = vmatprep.subr.bf16.mxu0 0
    %1435 = vmatpush1.bf16.msra.mxu0 0
    %1436 = vmatprep.subr.bf16.mxu0 0
    %1437 = vmatpush1.bf16.msra.mxu0 0
    %1438 = vmatprep.subr.bf16.mxu0 0
    %1439 = vmatpush1.bf16.msra.mxu0 0
    %1440 = vmatprep.subr.bf16.mxu0 0
    %1441 = vmatpush1.bf16.msra.mxu0 0
    %1442 = vmatprep.subr.bf16.mxu0 0
    %1443 = vmatpush1.bf16.msra.mxu0 0
    %1444 = vmatprep.mubr.bf16.mxu0 0
    %1445 = vmatmul.mubr.bf16.gmra.mrb[0].mxu0 %v1370
    %v1446 = vpop.f32.mrb[0].mxu0
    %v1447 = vadd.f32 0.0, %v1446
    %v1448 = vpop.f32.mrb[0].mxu0
    %v1449 = vadd.f32 0.0, %v1448
    %v1450 = vpop.f32.mrb[0].mxu0
    %v1451 = vpop.f32.mrb[0].mxu0
    %1452 = vdwg.mxu0
    %v1453 = vrot.slane %v480, 1
    %v1454 = vsel %vm483, %v481, %v1453
    %v1455 = vpack.c.b16 %v1454, %v1454
    %1457 = vmatprep.subr.bf16.mxu0 %v584
    %1458 = vmatpush1.bf16.msra.mxu0 %v583
    %1459 = vmatprep.subr.bf16.mxu0 %v588
    %1460 = vmatpush1.bf16.msra.mxu0 %v587
    %1461 = vmatprep.subr.bf16.mxu0 %v592
    %1462 = vmatpush1.bf16.msra.mxu0 %v591
    %1463 = vmatprep.subr.bf16.mxu0 %v596
    %1464 = vmatpush1.bf16.msra.mxu0 %v595
    %1465 = vmatprep.subr.bf16.mxu0 %v600
    %1466 = vmatpush1.bf16.msra.mxu0 %v599
    %1467 = vmatprep.subr.bf16.mxu0 %v604
    %1468 = vmatpush1.bf16.msra.mxu0 %v603
    %1469 = vmatprep.subr.bf16.mxu0 %v608
    %1470 = vmatpush1.bf16.msra.mxu0 %v607
    %1471 = vmatprep.subr.bf16.mxu0 %v612
    %1472 = vmatpush1.bf16.msra.mxu0 %v611
    %1473 = vmatprep.subr.bf16.mxu0 0
    %1474 = vmatpush1.bf16.msra.mxu0 0
    %1475 = vmatprep.subr.bf16.mxu0 0
    %1476 = vmatpush1.bf16.msra.mxu0 0
    %1477 = vmatprep.subr.bf16.mxu0 0
    %1478 = vmatpush1.bf16.msra.mxu0 0
    %1479 = vmatprep.subr.bf16.mxu0 0
    %1480 = vmatpush1.bf16.msra.mxu0 0
    %1481 = vmatprep.subr.bf16.mxu0 0
    %1482 = vmatpush1.bf16.msra.mxu0 0
    %1483 = vmatprep.subr.bf16.mxu0 0
    %1484 = vmatpush1.bf16.msra.mxu0 0
    %1485 = vmatprep.subr.bf16.mxu0 0
    %1486 = vmatpush1.bf16.msra.mxu0 0
    %1487 = vmatprep.subr.bf16.mxu0 0
    %1488 = vmatpush1.bf16.msra.mxu0 0
    %1489 = vmatprep.mubr.bf16.mxu0 0
    %1490 = vmatmul.mubr.bf16.gmra.mrb[0].mxu0 %v1455
    %v1491 = vpop.f32.mrb[0].mxu0
    %v1492 = vadd.f32 %v1406, %v1491
    %v1493 = vpop.f32.mrb[0].mxu0
    %v1494 = vadd.f32 %v1408, %v1493
    %v1495 = vpop.f32.mrb[0].mxu0
    %v1496 = vpop.f32.mrb[0].mxu0
    %1497 = vdwg.mxu0
    %1498 = vmatprep.subr.bf16.mxu0 %v586
    %1499 = vmatpush1.bf16.msra.mxu0 %v585
    %1500 = vmatprep.subr.bf16.mxu0 %v590
    %1501 = vmatpush1.bf16.msra.mxu0 %v589
    %1502 = vmatprep.subr.bf16.mxu0 %v594
    %1503 = vmatpush1.bf16.msra.mxu0 %v593
    %1504 = vmatprep.subr.bf16.mxu0 %v598
    %1505 = vmatpush1.bf16.msra.mxu0 %v597
    %1506 = vmatprep.subr.bf16.mxu0 %v602
    %1507 = vmatpush1.bf16.msra.mxu0 %v601
    %1508 = vmatprep.subr.bf16.mxu0 %v606
    %1509 = vmatpush1.bf16.msra.mxu0 %v605
    %1510 = vmatprep.subr.bf16.mxu0 %v610
    %1511 = vmatpush1.bf16.msra.mxu0 %v609
    %1512 = vmatprep.subr.bf16.mxu0 %v614
    %1513 = vmatpush1.bf16.msra.mxu0 %v613
    %1514 = vmatprep.subr.bf16.mxu0 0
    %1515 = vmatpush1.bf16.msra.mxu0 0
    %1516 = vmatprep.subr.bf16.mxu0 0
    %1517 = vmatpush1.bf16.msra.mxu0 0
    %1518 = vmatprep.subr.bf16.mxu0 0
    %1519 = vmatpush1.bf16.msra.mxu0 0
    %1520 = vmatprep.subr.bf16.mxu0 0
    %1521 = vmatpush1.bf16.msra.mxu0 0
    %1522 = vmatprep.subr.bf16.mxu0 0
    %1523 = vmatpush1.bf16.msra.mxu0 0
    %1524 = vmatprep.subr.bf16.mxu0 0
    %1525 = vmatpush1.bf16.msra.mxu0 0
    %1526 = vmatprep.subr.bf16.mxu0 0
    %1527 = vmatpush1.bf16.msra.mxu0 0
    %1528 = vmatprep.subr.bf16.mxu0 0
    %1529 = vmatpush1.bf16.msra.mxu0 0
    %1530 = vmatprep.mubr.bf16.mxu0 0
    %1531 = vmatmul.mubr.bf16.gmra.mrb[0].mxu0 %v1455
    %v1532 = vpop.f32.mrb[0].mxu0
    %v1533 = vadd.f32 %v1447, %v1532
    %v1534 = vpop.f32.mrb[0].mxu0
    %v1535 = vadd.f32 %v1449, %v1534
    %v1536 = vpop.f32.mrb[0].mxu0
    %v1537 = vpop.f32.mrb[0].mxu0
    %1538 = vdwg.mxu0
    %v1539 = vadd.f32 %v1492, %v733
    %v1540 = vadd.f32 %v1494, %v737
    %v1541 = vadd.f32 %v1533, %v741
    %v1542 = vadd.f32 %v1535, %v745
    %v1543 = vxor.u32 %v1539, 2147483648
    %v1544 = vmul.f32 %v1543, 1.442695
    %v1545 = vpow.pop %v1544
    %v1546 = vadd.f32 %v1545, 1.0
    %v1547 = vrcp.pop %v1546
    %v1548 = vmul.f32 1.0, %v1547
    %v1549 = vxor.u32 %v1540, 2147483648
    %v1550 = vmul.f32 %v1549, 1.442695
    %v1551 = vpow.pop %v1550
    %v1552 = vadd.f32 %v1551, 1.0
    %v1553 = vrcp.pop %v1552
    %v1554 = vmul.f32 1.0, %v1553
    %v1555 = vtanh.pop %v1541
    %v1556 = vxor.u32 %v1542, 2147483648
    %v1557 = vmul.f32 %v1556, 1.442695
    %v1558 = vpow.pop %v1557
    %v1559 = vadd.f32 %v1558, 1.0
    %v1560 = vrcp.pop %v1559
    %v1561 = vmul.f32 1.0, %v1560
    %v1562 = vmul.f32 %v1554, %v775
    %v1563 = vmul.f32 %v1548, %v1555
    %v1564 = vadd.f32 %v1562, %v1563
    %v1565 = vtanh.pop %v1564
    %v1566 = vmul.f32 %v1561, %v1565
    %v1567 = vpack.c.bf16 %v1315, %v1315
    %1568 = vmatprep.subr.bf16.mxu0 %v875
    %1569 = vmatpush1.bf16.msra.mxu0 %v874
    %1570 = vmatprep.subr.bf16.mxu0 %v879
    %1571 = vmatpush1.bf16.msra.mxu0 %v878
    %1572 = vmatprep.subr.bf16.mxu0 %v883
    %1573 = vmatpush1.bf16.msra.mxu0 %v882
    %1574 = vmatprep.subr.bf16.mxu0 %v887
    %1575 = vmatpush1.bf16.msra.mxu0 %v886
    %1576 = vmatprep.subr.bf16.mxu0 %v891
    %1577 = vmatpush1.bf16.msra.mxu0 %v890
    %1578 = vmatprep.subr.bf16.mxu0 %v895
    %1579 = vmatpush1.bf16.msra.mxu0 %v894
    %1580 = vmatprep.subr.bf16.mxu0 %v899
    %1581 = vmatpush1.bf16.msra.mxu0 %v898
    %1582 = vmatprep.subr.bf16.mxu0 %v903
    %1583 = vmatpush1.bf16.msra.mxu0 %v902
    %1584 = vmatprep.subr.bf16.mxu0 0
    %1585 = vmatpush1.bf16.msra.mxu0 0
    %1586 = vmatprep.subr.bf16.mxu0 0
    %1587 = vmatpush1.bf16.msra.mxu0 0
    %1588 = vmatprep.subr.bf16.mxu0 0
    %1589 = vmatpush1.bf16.msra.mxu0 0
    %1590 = vmatprep.subr.bf16.mxu0 0
    %1591 = vmatpush1.bf16.msra.mxu0 0
    %1592 = vmatprep.subr.bf16.mxu0 0
    %1593 = vmatpush1.bf16.msra.mxu0 0
    %1594 = vmatprep.subr.bf16.mxu0 0
    %1595 = vmatpush1.bf16.msra.mxu0 0
    %1596 = vmatprep.subr.bf16.mxu0 0
    %1597 = vmatpush1.bf16.msra.mxu0 0
    %1598 = vmatprep.subr.bf16.mxu0 0
    %1599 = vmatpush1.bf16.msra.mxu0 0
    %1600 = vmatprep.mubr.bf16.mxu0 0
    %1601 = vmatmul.mubr.bf16.gmra.mrb[0].mxu0 %v1567
    %v1602 = vpop.f32.mrb[0].mxu0
    %v1603 = vadd.f32 0.0, %v1602
    %v1604 = vpop.f32.mrb[0].mxu0
    %v1605 = vadd.f32 0.0, %v1604
    %v1606 = vpop.f32.mrb[0].mxu0
    %v1607 = vpop.f32.mrb[0].mxu0
    %1608 = vdwg.mxu0
    %1609 = vmatprep.subr.bf16.mxu0 %v877
    %1610 = vmatpush1.bf16.msra.mxu0 %v876
    %1611 = vmatprep.subr.bf16.mxu0 %v881
    %1612 = vmatpush1.bf16.msra.mxu0 %v880
    %1613 = vmatprep.subr.bf16.mxu0 %v885
    %1614 = vmatpush1.bf16.msra.mxu0 %v884
    %1615 = vmatprep.subr.bf16.mxu0 %v889
    %1616 = vmatpush1.bf16.msra.mxu0 %v888
    %1617 = vmatprep.subr.bf16.mxu0 %v893
    %1618 = vmatpush1.bf16.msra.mxu0 %v892
    %1619 = vmatprep.subr.bf16.mxu0 %v897
    %1620 = vmatpush1.bf16.msra.mxu0 %v896
    %1621 = vmatprep.subr.bf16.mxu0 %v901
    %1622 = vmatpush1.bf16.msra.mxu0 %v900
    %1623 = vmatprep.subr.bf16.mxu0 %v905
    %1624 = vmatpush1.bf16.msra.mxu0 %v904
    %1625 = vmatprep.subr.bf16.mxu0 0
    %1626 = vmatpush1.bf16.msra.mxu0 0
    %1627 = vmatprep.subr.bf16.mxu0 0
    %1628 = vmatpush1.bf16.msra.mxu0 0
    %1629 = vmatprep.subr.bf16.mxu0 0
    %1630 = vmatpush1.bf16.msra.mxu0 0
    %1631 = vmatprep.subr.bf16.mxu0 0
    %1632 = vmatpush1.bf16.msra.mxu0 0
    %1633 = vmatprep.subr.bf16.mxu0 0
    %1634 = vmatpush1.bf16.msra.mxu0 0
    %1635 = vmatprep.subr.bf16.mxu0 0
    %1636 = vmatpush1.bf16.msra.mxu0 0
    %1637 = vmatprep.subr.bf16.mxu0 0
    %1638 = vmatpush1.bf16.msra.mxu0 0
    %1639 = vmatprep.subr.bf16.mxu0 0
    %1640 = vmatpush1.bf16.msra.mxu0 0
    %1641 = vmatprep.mubr.bf16.mxu0 0
    %1642 = vmatmul.mubr.bf16.gmra.mrb[0].mxu0 %v1567
    %v1643 = vpop.f32.mrb[0].mxu0
    %v1644 = vadd.f32 0.0, %v1643
    %v1645 = vpop.f32.mrb[0].mxu0
    %v1646 = vadd.f32 0.0, %v1645
    %v1647 = vpop.f32.mrb[0].mxu0
    %v1648 = vpop.f32.mrb[0].mxu0
    %1649 = vdwg.mxu0
    %v1650 = vrot.slane %v480, 6
    %v1651 = vrot.slane %v481, 5
    %v1652 = vsel %vm483, %v1651, %v1650
    %v1653 = vpack.c.b16 %v1652, %v1652
    %1655 = vmatprep.subr.bf16.mxu0 %v1122
    %1656 = vmatpush1.bf16.msra.mxu0 %v1121
    %1657 = vmatprep.subr.bf16.mxu0 %v1126
    %1658 = vmatpush1.bf16.msra.mxu0 %v1125
    %1659 = vmatprep.subr.bf16.mxu0 %v1130
    %1660 = vmatpush1.bf16.msra.mxu0 %v1129
    %1661 = vmatprep.subr.bf16.mxu0 %v1134
    %1662 = vmatpush1.bf16.msra.mxu0 %v1133
    %1663 = vmatprep.subr.bf16.mxu0 %v1138
    %1664 = vmatpush1.bf16.msra.mxu0 %v1137
    %1665 = vmatprep.subr.bf16.mxu0 %v1142
    %1666 = vmatpush1.bf16.msra.mxu0 %v1141
    %1667 = vmatprep.subr.bf16.mxu0 %v1146
    %1668 = vmatpush1.bf16.msra.mxu0 %v1145
    %1669 = vmatprep.subr.bf16.mxu0 %v1150
    %1670 = vmatpush1.bf16.msra.mxu0 %v1149
    %1671 = vmatprep.subr.bf16.mxu0 0
    %1672 = vmatpush1.bf16.msra.mxu0 0
    %1673 = vmatprep.subr.bf16.mxu0 0
    %1674 = vmatpush1.bf16.msra.mxu0 0
    %1675 = vmatprep.subr.bf16.mxu0 0
    %1676 = vmatpush1.bf16.msra.mxu0 0
    %1677 = vmatprep.subr.bf16.mxu0 0
    %1678 = vmatpush1.bf16.msra.mxu0 0
    %1679 = vmatprep.subr.bf16.mxu0 0
    %1680 = vmatpush1.bf16.msra.mxu0 0
    %1681 = vmatprep.subr.bf16.mxu0 0
    %1682 = vmatpush1.bf16.msra.mxu0 0
    %1683 = vmatprep.subr.bf16.mxu0 0
    %1684 = vmatpush1.bf16.msra.mxu0 0
    %1685 = vmatprep.subr.bf16.mxu0 0
    %1686 = vmatpush1.bf16.msra.mxu0 0
    %1687 = vmatprep.mubr.bf16.mxu0 0
    %1688 = vmatmul.mubr.bf16.gmra.mrb[0].mxu0 %v1653
    %v1689 = vpop.f32.mrb[0].mxu0
    %v1690 = vadd.f32 %v1603, %v1689
    %v1691 = vpop.f32.mrb[0].mxu0
    %v1692 = vadd.f32 %v1605, %v1691
    %v1693 = vpop.f32.mrb[0].mxu0
    %v1694 = vpop.f32.mrb[0].mxu0
    %1695 = vdwg.mxu0
    %1696 = vmatprep.subr.bf16.mxu0 %v1124
    %1697 = vmatpush1.bf16.msra.mxu0 %v1123
    %1698 = vmatprep.subr.bf16.mxu0 %v1128
    %1699 = vmatpush1.bf16.msra.mxu0 %v1127
    %1700 = vmatprep.subr.bf16.mxu0 %v1132
    %1701 = vmatpush1.bf16.msra.mxu0 %v1131
    %1702 = vmatprep.subr.bf16.mxu0 %v1136
    %1703 = vmatpush1.bf16.msra.mxu0 %v1135
    %1704 = vmatprep.subr.bf16.mxu0 %v1140
    %1705 = vmatpush1.bf16.msra.mxu0 %v1139
    %1706 = vmatprep.subr.bf16.mxu0 %v1144
    %1707 = vmatpush1.bf16.msra.mxu0 %v1143
    %1708 = vmatprep.subr.bf16.mxu0 %v1148
    %1709 = vmatpush1.bf16.msra.mxu0 %v1147
    %1710 = vmatprep.subr.bf16.mxu0 %v1152
    %1711 = vmatpush1.bf16.msra.mxu0 %v1151
    %1712 = vmatprep.subr.bf16.mxu0 0
    %1713 = vmatpush1.bf16.msra.mxu0 0
    %1714 = vmatprep.subr.bf16.mxu0 0
    %1715 = vmatpush1.bf16.msra.mxu0 0
    %1716 = vmatprep.subr.bf16.mxu0 0
    %1717 = vmatpush1.bf16.msra.mxu0 0
    %1718 = vmatprep.subr.bf16.mxu0 0
    %1719 = vmatpush1.bf16.msra.mxu0 0
    %1720 = vmatprep.subr.bf16.mxu0 0
    %1721 = vmatpush1.bf16.msra.mxu0 0
    %1722 = vmatprep.subr.bf16.mxu0 0
    %1723 = vmatpush1.bf16.msra.mxu0 0
    %1724 = vmatprep.subr.bf16.mxu0 0
    %1725 = vmatpush1.bf16.msra.mxu0 0
    %1726 = vmatprep.subr.bf16.mxu0 0
    %1727 = vmatpush1.bf16.msra.mxu0 0
    %1728 = vmatprep.mubr.bf16.mxu0 0
    %1729 = vmatmul.mubr.bf16.gmra.mrb[0].mxu0 %v1653
    %v1730 = vpop.f32.mrb[0].mxu0
    %v1731 = vadd.f32 %v1644, %v1730
    %v1732 = vpop.f32.mrb[0].mxu0
    %v1733 = vadd.f32 %v1646, %v1732
    %v1734 = vpop.f32.mrb[0].mxu0
    %v1735 = vpop.f32.mrb[0].mxu0
    %1736 = vdwg.mxu0
    %v1737 = vadd.f32 %v1690, %v1271
    %v1738 = vadd.f32 %v1692, %v1275
    %v1739 = vadd.f32 %v1731, %v1279
    %v1740 = vadd.f32 %v1733, %v1283
    %v1741 = vxor.u32 %v1737, 2147483648
    %v1742 = vmul.f32 %v1741, 1.442695
    %v1743 = vpow.pop %v1742
    %v1744 = vadd.f32 %v1743, 1.0
    %v1745 = vrcp.pop %v1744
    %v1746 = vmul.f32 1.0, %v1745
    %v1747 = vxor.u32 %v1738, 2147483648
    %v1748 = vmul.f32 %v1747, 1.442695
    %v1749 = vpow.pop %v1748
    %v1750 = vadd.f32 %v1749, 1.0
    %v1751 = vrcp.pop %v1750
    %v1752 = vmul.f32 1.0, %v1751
    %v1753 = vtanh.pop %v1739
    %v1754 = vxor.u32 %v1740, 2147483648
    %v1755 = vmul.f32 %v1754, 1.442695
    %v1756 = vpow.pop %v1755
    %v1757 = vadd.f32 %v1756, 1.0
    %v1758 = vrcp.pop %v1757
    %v1759 = vmul.f32 1.0, %v1758
    %v1760 = vmul.f32 %v1752, %v1313
    %v1761 = vmul.f32 %v1746, %v1753
    %v1762 = vadd.f32 %v1760, %v1761
    %v1763 = vtanh.pop %v1762
    %v1764 = vmul.f32 %v1759, %v1763
    %v1767 = vunpack.c.l.s4 1966171168
    %v1768 = vunpack.c.0.s8 %v1767
    %v1769 = vlaneseq
    %v1770 = vshrl.u32 %v1769, 7
    %v1771 = vsub.s32 %v1768, %v1770
    %v1772 = vrot.slane %v1566, %v1771
    %v1773 = vcombine.high %v1772, %v1772
    %v1775 = vunpack.c.l.s4 1966171168
    %v1776 = vunpack.c.0.s8 %v1775
    %v1777 = vlaneseq
    %v1778 = vshrl.u32 %v1777, 7
    %v1779 = vsub.s32 %v1776, %v1778
    %v1780 = vrot.slane %v1772, %v1779
    %v1782 = vunpack.c.l.s4 1966171168
    %v1783 = vunpack.c.0.s8 %v1782
    %v1784 = vlaneseq
    %v1785 = vshrl.u32 %v1784, 7
    %v1786 = vsub.s32 %v1783, %v1785
    %v1787 = vrot.slane %v1773, %v1786
    %1790 = vst [vmem:[#allocation11 + $0x1] sm:$0x1] %v1780
    %1791 = vst [vmem:[#allocation11 + $0x11] sm:$0x1] %v1787
    %v1794 = vunpack.c.l.s4 1966171168
    %v1795 = vunpack.c.0.s8 %v1794
    %v1796 = vlaneseq
    %v1797 = vshrl.u32 %v1796, 7
    %v1798 = vsub.s32 %v1795, %v1797
    %v1799 = vrot.slane %v1764, %v1798
    %v1800 = vcombine.high %v1799, %v1799
    %v1802 = vunpack.c.l.s4 1966171168
    %v1803 = vunpack.c.0.s8 %v1802
    %v1804 = vlaneseq
    %v1805 = vshrl.u32 %v1804, 7
    %v1806 = vsub.s32 %v1803, %v1805
    %v1807 = vrot.slane %v1799, %v1806
    %v1809 = vunpack.c.l.s4 1966171168
    %v1810 = vunpack.c.0.s8 %v1809
    %v1811 = vlaneseq
    %v1812 = vshrl.u32 %v1811, 7
    %v1813 = vsub.s32 %v1810, %v1812
    %v1814 = vrot.slane %v1800, %v1813
    %1817 = vst [vmem:[#allocation11 + $0xe] sm:$0x1] %v1807
    %1818 = vst [vmem:[#allocation11 + $0x1e] sm:$0x1] %v1814
    %v1819 = vpack.c.bf16 %v1566, %v1566
    %1820 = vmatprep.subr.bf16.mxu0 %v329
    %1821 = vmatpush1.bf16.msra.mxu0 %v328
    %1822 = vmatprep.subr.bf16.mxu0 %v333
    %1823 = vmatpush1.bf16.msra.mxu0 %v332
    %1824 = vmatprep.subr.bf16.mxu0 %v337
    %1825 = vmatpush1.bf16.msra.mxu0 %v336
    %1826 = vmatprep.subr.bf16.mxu0 %v341
    %1827 = vmatpush1.bf16.msra.mxu0 %v340
    %1828 = vmatprep.subr.bf16.mxu0 %v345
    %1829 = vmatpush1.bf16.msra.mxu0 %v344
    %1830 = vmatprep.subr.bf16.mxu0 %v349
    %1831 = vmatpush1.bf16.msra.mxu0 %v348
    %1832 = vmatprep.subr.bf16.mxu0 %v353
    %1833 = vmatpush1.bf16.msra.mxu0 %v352
    %1834 = vmatprep.subr.bf16.mxu0 %v357
    %1835 = vmatpush1.bf16.msra.mxu0 %v356
    %1836 = vmatprep.subr.bf16.mxu0 0
    %1837 = vmatpush1.bf16.msra.mxu0 0
    %1838 = vmatprep.subr.bf16.mxu0 0
    %1839 = vmatpush1.bf16.msra.mxu0 0
    %1840 = vmatprep.subr.bf16.mxu0 0
    %1841 = vmatpush1.bf16.msra.mxu0 0
    %1842 = vmatprep.subr.bf16.mxu0 0
    %1843 = vmatpush1.bf16.msra.mxu0 0
    %1844 = vmatprep.subr.bf16.mxu0 0
    %1845 = vmatpush1.bf16.msra.mxu0 0
    %1846 = vmatprep.subr.bf16.mxu0 0
    %1847 = vmatpush1.bf16.msra.mxu0 0
    %1848 = vmatprep.subr.bf16.mxu0 0
    %1849 = vmatpush1.bf16.msra.mxu0 0
    %1850 = vmatprep.subr.bf16.mxu0 0
    %1851 = vmatpush1.bf16.msra.mxu0 0
    %1852 = vmatprep.mubr.bf16.mxu0 0
    %1853 = vmatmul.mubr.bf16.gmra.mrb[0].mxu0 %v1819
    %v1854 = vpop.f32.mrb[0].mxu0
    %v1855 = vadd.f32 0.0, %v1854
    %v1856 = vpop.f32.mrb[0].mxu0
    %v1857 = vadd.f32 0.0, %v1856
    %v1858 = vpop.f32.mrb[0].mxu0
    %v1859 = vpop.f32.mrb[0].mxu0
    %1860 = vdwg.mxu0
    %1861 = vmatprep.subr.bf16.mxu0 %v331
    %1862 = vmatpush1.bf16.msra.mxu0 %v330
    %1863 = vmatprep.subr.bf16.mxu0 %v335
    %1864 = vmatpush1.bf16.msra.mxu0 %v334
    %1865 = vmatprep.subr.bf16.mxu0 %v339
    %1866 = vmatpush1.bf16.msra.mxu0 %v338
    %1867 = vmatprep.subr.bf16.mxu0 %v343
    %1868 = vmatpush1.bf16.msra.mxu0 %v342
    %1869 = vmatprep.subr.bf16.mxu0 %v347
    %1870 = vmatpush1.bf16.msra.mxu0 %v346
    %1871 = vmatprep.subr.bf16.mxu0 %v351
    %1872 = vmatpush1.bf16.msra.mxu0 %v350
    %1873 = vmatprep.subr.bf16.mxu0 %v355
    %1874 = vmatpush1.bf16.msra.mxu0 %v354
    %1875 = vmatprep.subr.bf16.mxu0 %v359
    %1876 = vmatpush1.bf16.msra.mxu0 %v358
    %1877 = vmatprep.subr.bf16.mxu0 0
    %1878 = vmatpush1.bf16.msra.mxu0 0
    %1879 = vmatprep.subr.bf16.mxu0 0
    %1880 = vmatpush1.bf16.msra.mxu0 0
    %1881 = vmatprep.subr.bf16.mxu0 0
    %1882 = vmatpush1.bf16.msra.mxu0 0
    %1883 = vmatprep.subr.bf16.mxu0 0
    %1884 = vmatpush1.bf16.msra.mxu0 0
    %1885 = vmatprep.subr.bf16.mxu0 0
    %1886 = vmatpush1.bf16.msra.mxu0 0
    %1887 = vmatprep.subr.bf16.mxu0 0
    %1888 = vmatpush1.bf16.msra.mxu0 0
    %1889 = vmatprep.subr.bf16.mxu0 0
    %1890 = vmatpush1.bf16.msra.mxu0 0
    %1891 = vmatprep.subr.bf16.mxu0 0
    %1892 = vmatpush1.bf16.msra.mxu0 0
    %1893 = vmatprep.mubr.bf16.mxu0 0
    %1894 = vmatmul.mubr.bf16.gmra.mrb[0].mxu0 %v1819
    %v1895 = vpop.f32.mrb[0].mxu0
    %v1896 = vadd.f32 0.0, %v1895
    %v1897 = vpop.f32.mrb[0].mxu0
    %v1898 = vadd.f32 0.0, %v1897
    %v1899 = vpop.f32.mrb[0].mxu0
    %v1900 = vpop.f32.mrb[0].mxu0
    %1901 = vdwg.mxu0
    %v1902 = vrot.slane %v480, 2
    %v1903 = vrot.slane %v481, 1
    %v1904 = vsel %vm483, %v1903, %v1902
    %v1905 = vpack.c.b16 %v1904, %v1904
    %1907 = vmatprep.subr.bf16.mxu0 %v584
    %1908 = vmatpush1.bf16.msra.mxu0 %v583
    %1909 = vmatprep.subr.bf16.mxu0 %v588
    %1910 = vmatpush1.bf16.msra.mxu0 %v587
    %1911 = vmatprep.subr.bf16.mxu0 %v592
    %1912 = vmatpush1.bf16.msra.mxu0 %v591
    %1913 = vmatprep.subr.bf16.mxu0 %v596
    %1914 = vmatpush1.bf16.msra.mxu0 %v595
    %1915 = vmatprep.subr.bf16.mxu0 %v600
    %1916 = vmatpush1.bf16.msra.mxu0 %v599
    %1917 = vmatprep.subr.bf16.mxu0 %v604
    %1918 = vmatpush1.bf16.msra.mxu0 %v603
    %1919 = vmatprep.subr.bf16.mxu0 %v608
    %1920 = vmatpush1.bf16.msra.mxu0 %v607
    %1921 = vmatprep.subr.bf16.mxu0 %v612
    %1922 = vmatpush1.bf16.msra.mxu0 %v611
    %1923 = vmatprep.subr.bf16.mxu0 0
    %1924 = vmatpush1.bf16.msra.mxu0 0
    %1925 = vmatprep.subr.bf16.mxu0 0
    %1926 = vmatpush1.bf16.msra.mxu0 0
    %1927 = vmatprep.subr.bf16.mxu0 0
    %1928 = vmatpush1.bf16.msra.mxu0 0
    %1929 = vmatprep.subr.bf16.mxu0 0
    %1930 = vmatpush1.bf16.msra.mxu0 0
    %1931 = vmatprep.subr.bf16.mxu0 0
    %1932 = vmatpush1.bf16.msra.mxu0 0
    %1933 = vmatprep.subr.bf16.mxu0 0
    %1934 = vmatpush1.bf16.msra.mxu0 0
    %1935 = vmatprep.subr.bf16.mxu0 0
    %1936 = vmatpush1.bf16.msra.mxu0 0
    %1937 = vmatprep.subr.bf16.mxu0 0
    %1938 = vmatpush1.bf16.msra.mxu0 0
    %1939 = vmatprep.mubr.bf16.mxu0 0
    %1940 = vmatmul.mubr.bf16.gmra.mrb[0].mxu0 %v1905
    %v1941 = vpop.f32.mrb[0].mxu0
    %v1942 = vadd.f32 %v1855, %v1941
    %v1943 = vpop.f32.mrb[0].mxu0
    %v1944 = vadd.f32 %v1857, %v1943
    %v1945 = vpop.f32.mrb[0].mxu0
    %v1946 = vpop.f32.mrb[0].mxu0
    %1947 = vdwg.mxu0
    %1948 = vmatprep.subr.bf16.mxu0 %v586
    %1949 = vmatpush1.bf16.msra.mxu0 %v585
    %1950 = vmatprep.subr.bf16.mxu0 %v590
    %1951 = vmatpush1.bf16.msra.mxu0 %v589
    %1952 = vmatprep.subr.bf16.mxu0 %v594
    %1953 = vmatpush1.bf16.msra.mxu0 %v593
    %1954 = vmatprep.subr.bf16.mxu0 %v598
    %1955 = vmatpush1.bf16.msra.mxu0 %v597
    %1956 = vmatprep.subr.bf16.mxu0 %v602
    %1957 = vmatpush1.bf16.msra.mxu0 %v601
    %1958 = vmatprep.subr.bf16.mxu0 %v606
    %1959 = vmatpush1.bf16.msra.mxu0 %v605
    %1960 = vmatprep.subr.bf16.mxu0 %v610
    %1961 = vmatpush1.bf16.msra.mxu0 %v609
    %1962 = vmatprep.subr.bf16.mxu0 %v614
    %1963 = vmatpush1.bf16.msra.mxu0 %v613
    %1964 = vmatprep.subr.bf16.mxu0 0
    %1965 = vmatpush1.bf16.msra.mxu0 0
    %1966 = vmatprep.subr.bf16.mxu0 0
    %1967 = vmatpush1.bf16.msra.mxu0 0
    %1968 = vmatprep.subr.bf16.mxu0 0
    %1969 = vmatpush1.bf16.msra.mxu0 0
    %1970 = vmatprep.subr.bf16.mxu0 0
    %1971 = vmatpush1.bf16.msra.mxu0 0
    %1972 = vmatprep.subr.bf16.mxu0 0
    %1973 = vmatpush1.bf16.msra.mxu0 0
    %1974 = vmatprep.subr.bf16.mxu0 0
    %1975 = vmatpush1.bf16.msra.mxu0 0
    %1976 = vmatprep.subr.bf16.mxu0 0
    %1977 = vmatpush1.bf16.msra.mxu0 0
    %1978 = vmatprep.subr.bf16.mxu0 0
    %1979 = vmatpush1.bf16.msra.mxu0 0
    %1980 = vmatprep.mubr.bf16.mxu0 0
    %1981 = vmatmul.mubr.bf16.gmra.mrb[0].mxu0 %v1905
    %v1982 = vpop.f32.mrb[0].mxu0
    %v1983 = vadd.f32 %v1896, %v1982
    %v1984 = vpop.f32.mrb[0].mxu0
    %v1985 = vadd.f32 %v1898, %v1984
    %v1986 = vpop.f32.mrb[0].mxu0
    %v1987 = vpop.f32.mrb[0].mxu0
    %1988 = vdwg.mxu0
    %v1989 = vadd.f32 %v1942, %v733
    %v1990 = vadd.f32 %v1944, %v737
    %v1991 = vadd.f32 %v1983, %v741
    %v1992 = vadd.f32 %v1985, %v745
    %v1993 = vxor.u32 %v1989, 2147483648
    %v1994 = vmul.f32 %v1993, 1.442695
    %v1995 = vpow.pop %v1994
    %v1996 = vadd.f32 %v1995, 1.0
    %v1997 = vrcp.pop %v1996
    %v1998 = vmul.f32 1.0, %v1997
    %v1999 = vxor.u32 %v1990, 2147483648
    %v2000 = vmul.f32 %v1999, 1.442695
    %v2001 = vpow.pop %v2000
    %v2002 = vadd.f32 %v2001, 1.0
    %v2003 = vrcp.pop %v2002
    %v2004 = vmul.f32 1.0, %v2003
    %v2005 = vtanh.pop %v1991
    %v2006 = vxor.u32 %v1992, 2147483648
    %v2007 = vmul.f32 %v2006, 1.442695
    %v2008 = vpow.pop %v2007
    %v2009 = vadd.f32 %v2008, 1.0
    %v2010 = vrcp.pop %v2009
    %v2011 = vmul.f32 1.0, %v2010
    %v2012 = vmul.f32 %v2004, %v1564
    %v2013 = vmul.f32 %v1998, %v2005
    %v2014 = vadd.f32 %v2012, %v2013
    %v2015 = vtanh.pop %v2014
    %v2016 = vmul.f32 %v2011, %v2015
    %v2017 = vpack.c.bf16 %v1764, %v1764
    %2018 = vmatprep.subr.bf16.mxu0 %v875
    %2019 = vmatpush1.bf16.msra.mxu0 %v874
    %2020 = vmatprep.subr.bf16.mxu0 %v879
    %2021 = vmatpush1.bf16.msra.mxu0 %v878
    %2022 = vmatprep.subr.bf16.mxu0 %v883
    %2023 = vmatpush1.bf16.msra.mxu0 %v882
    %2024 = vmatprep.subr.bf16.mxu0 %v887
    %2025 = vmatpush1.bf16.msra.mxu0 %v886
    %2026 = vmatprep.subr.bf16.mxu0 %v891
    %2027 = vmatpush1.bf16.msra.mxu0 %v890
    %2028 = vmatprep.subr.bf16.mxu0 %v895
    %2029 = vmatpush1.bf16.msra.mxu0 %v894
    %2030 = vmatprep.subr.bf16.mxu0 %v899
    %2031 = vmatpush1.bf16.msra.mxu0 %v898
    %2032 = vmatprep.subr.bf16.mxu0 %v903
    %2033 = vmatpush1.bf16.msra.mxu0 %v902
    %2034 = vmatprep.subr.bf16.mxu0 0
    %2035 = vmatpush1.bf16.msra.mxu0 0
    %2036 = vmatprep.subr.bf16.mxu0 0
    %2037 = vmatpush1.bf16.msra.mxu0 0
    %2038 = vmatprep.subr.bf16.mxu0 0
    %2039 = vmatpush1.bf16.msra.mxu0 0
    %2040 = vmatprep.subr.bf16.mxu0 0
    %2041 = vmatpush1.bf16.msra.mxu0 0
    %2042 = vmatprep.subr.bf16.mxu0 0
    %2043 = vmatpush1.bf16.msra.mxu0 0
    %2044 = vmatprep.subr.bf16.mxu0 0
    %2045 = vmatpush1.bf16.msra.mxu0 0
    %2046 = vmatprep.subr.bf16.mxu0 0
    %2047 = vmatpush1.bf16.msra.mxu0 0
    %2048 = vmatprep.subr.bf16.mxu0 0
    %2049 = vmatpush1.bf16.msra.mxu0 0
    %2050 = vmatprep.mubr.bf16.mxu0 0
    %2051 = vmatmul.mubr.bf16.gmra.mrb[0].mxu0 %v2017
    %v2052 = vpop.f32.mrb[0].mxu0
    %v2053 = vadd.f32 0.0, %v2052
    %v2054 = vpop.f32.mrb[0].mxu0
    %v2055 = vadd.f32 0.0, %v2054
    %v2056 = vpop.f32.mrb[0].mxu0
    %v2057 = vpop.f32.mrb[0].mxu0
    %2058 = vdwg.mxu0
    %2059 = vmatprep.subr.bf16.mxu0 %v877
    %2060 = vmatpush1.bf16.msra.mxu0 %v876
    %2061 = vmatprep.subr.bf16.mxu0 %v881
    %2062 = vmatpush1.bf16.msra.mxu0 %v880
    %2063 = vmatprep.subr.bf16.mxu0 %v885
    %2064 = vmatpush1.bf16.msra.mxu0 %v884
    %2065 = vmatprep.subr.bf16.mxu0 %v889
    %2066 = vmatpush1.bf16.msra.mxu0 %v888
    %2067 = vmatprep.subr.bf16.mxu0 %v893
    %2068 = vmatpush1.bf16.msra.mxu0 %v892
    %2069 = vmatprep.subr.bf16.mxu0 %v897
    %2070 = vmatpush1.bf16.msra.mxu0 %v896
    %2071 = vmatprep.subr.bf16.mxu0 %v901
    %2072 = vmatpush1.bf16.msra.mxu0 %v900
    %2073 = vmatprep.subr.bf16.mxu0 %v905
    %2074 = vmatpush1.bf16.msra.mxu0 %v904
    %2075 = vmatprep.subr.bf16.mxu0 0
    %2076 = vmatpush1.bf16.msra.mxu0 0
    %2077 = vmatprep.subr.bf16.mxu0 0
    %2078 = vmatpush1.bf16.msra.mxu0 0
    %2079 = vmatprep.subr.bf16.mxu0 0
    %2080 = vmatpush1.bf16.msra.mxu0 0
    %2081 = vmatprep.subr.bf16.mxu0 0
    %2082 = vmatpush1.bf16.msra.mxu0 0
    %2083 = vmatprep.subr.bf16.mxu0 0
    %2084 = vmatpush1.bf16.msra.mxu0 0
    %2085 = vmatprep.subr.bf16.mxu0 0
    %2086 = vmatpush1.bf16.msra.mxu0 0
    %2087 = vmatprep.subr.bf16.mxu0 0
    %2088 = vmatpush1.bf16.msra.mxu0 0
    %2089 = vmatprep.subr.bf16.mxu0 0
    %2090 = vmatpush1.bf16.msra.mxu0 0
    %2091 = vmatprep.mubr.bf16.mxu0 0
    %2092 = vmatmul.mubr.bf16.gmra.mrb[0].mxu0 %v2017
    %v2093 = vpop.f32.mrb[0].mxu0
    %v2094 = vadd.f32 0.0, %v2093
    %v2095 = vpop.f32.mrb[0].mxu0
    %v2096 = vadd.f32 0.0, %v2095
    %v2097 = vpop.f32.mrb[0].mxu0
    %v2098 = vpop.f32.mrb[0].mxu0
    %2099 = vdwg.mxu0
    %v2100 = vrot.slane %v480, 5
    %v2101 = vrot.slane %v481, 4
    %v2102 = vsel %vm483, %v2101, %v2100
    %v2103 = vpack.c.b16 %v2102, %v2102
    %2105 = vmatprep.subr.bf16.mxu0 %v1122
    %2106 = vmatpush1.bf16.msra.mxu0 %v1121
    %2107 = vmatprep.subr.bf16.mxu0 %v1126
    %2108 = vmatpush1.bf16.msra.mxu0 %v1125
    %2109 = vmatprep.subr.bf16.mxu0 %v1130
    %2110 = vmatpush1.bf16.msra.mxu0 %v1129
    %2111 = vmatprep.subr.bf16.mxu0 %v1134
    %2112 = vmatpush1.bf16.msra.mxu0 %v1133
    %2113 = vmatprep.subr.bf16.mxu0 %v1138
    %2114 = vmatpush1.bf16.msra.mxu0 %v1137
    %2115 = vmatprep.subr.bf16.mxu0 %v1142
    %2116 = vmatpush1.bf16.msra.mxu0 %v1141
    %2117 = vmatprep.subr.bf16.mxu0 %v1146
    %2118 = vmatpush1.bf16.msra.mxu0 %v1145
    %2119 = vmatprep.subr.bf16.mxu0 %v1150
    %2120 = vmatpush1.bf16.msra.mxu0 %v1149
    %2121 = vmatprep.subr.bf16.mxu0 0
    %2122 = vmatpush1.bf16.msra.mxu0 0
    %2123 = vmatprep.subr.bf16.mxu0 0
    %2124 = vmatpush1.bf16.msra.mxu0 0
    %2125 = vmatprep.subr.bf16.mxu0 0
    %2126 = vmatpush1.bf16.msra.mxu0 0
    %2127 = vmatprep.subr.bf16.mxu0 0
    %2128 = vmatpush1.bf16.msra.mxu0 0
    %2129 = vmatprep.subr.bf16.mxu0 0
    %2130 = vmatpush1.bf16.msra.mxu0 0
    %2131 = vmatprep.subr.bf16.mxu0 0
    %2132 = vmatpush1.bf16.msra.mxu0 0
    %2133 = vmatprep.subr.bf16.mxu0 0
    %2134 = vmatpush1.bf16.msra.mxu0 0
    %2135 = vmatprep.subr.bf16.mxu0 0
    %2136 = vmatpush1.bf16.msra.mxu0 0
    %2137 = vmatprep.mubr.bf16.mxu0 0
    %2138 = vmatmul.mubr.bf16.gmra.mrb[0].mxu0 %v2103
    %v2139 = vpop.f32.mrb[0].mxu0
    %v2140 = vadd.f32 %v2053, %v2139
    %v2141 = vpop.f32.mrb[0].mxu0
    %v2142 = vadd.f32 %v2055, %v2141
    %v2143 = vpop.f32.mrb[0].mxu0
    %v2144 = vpop.f32.mrb[0].mxu0
    %2145 = vdwg.mxu0
    %2146 = vmatprep.subr.bf16.mxu0 %v1124
    %2147 = vmatpush1.bf16.msra.mxu0 %v1123
    %2148 = vmatprep.subr.bf16.mxu0 %v1128
    %2149 = vmatpush1.bf16.msra.mxu0 %v1127
    %2150 = vmatprep.subr.bf16.mxu0 %v1132
    %2151 = vmatpush1.bf16.msra.mxu0 %v1131
    %2152 = vmatprep.subr.bf16.mxu0 %v1136
    %2153 = vmatpush1.bf16.msra.mxu0 %v1135
    %2154 = vmatprep.subr.bf16.mxu0 %v1140
    %2155 = vmatpush1.bf16.msra.mxu0 %v1139
    %2156 = vmatprep.subr.bf16.mxu0 %v1144
    %2157 = vmatpush1.bf16.msra.mxu0 %v1143
    %2158 = vmatprep.subr.bf16.mxu0 %v1148
    %2159 = vmatpush1.bf16.msra.mxu0 %v1147
    %2160 = vmatprep.subr.bf16.mxu0 %v1152
    %2161 = vmatpush1.bf16.msra.mxu0 %v1151
    %2162 = vmatprep.subr.bf16.mxu0 0
    %2163 = vmatpush1.bf16.msra.mxu0 0
    %2164 = vmatprep.subr.bf16.mxu0 0
    %2165 = vmatpush1.bf16.msra.mxu0 0
    %2166 = vmatprep.subr.bf16.mxu0 0
    %2167 = vmatpush1.bf16.msra.mxu0 0
    %2168 = vmatprep.subr.bf16.mxu0 0
    %2169 = vmatpush1.bf16.msra.mxu0 0
    %2170 = vmatprep.subr.bf16.mxu0 0
    %2171 = vmatpush1.bf16.msra.mxu0 0
    %2172 = vmatprep.subr.bf16.mxu0 0
    %2173 = vmatpush1.bf16.msra.mxu0 0
    %2174 = vmatprep.subr.bf16.mxu0 0
    %2175 = vmatpush1.bf16.msra.mxu0 0
    %2176 = vmatprep.subr.bf16.mxu0 0
    %2177 = vmatpush1.bf16.msra.mxu0 0
    %2178 = vmatprep.mubr.bf16.mxu0 0
    %2179 = vmatmul.mubr.bf16.gmra.mrb[0].mxu0 %v2103
    %v2180 = vpop.f32.mrb[0].mxu0
    %v2181 = vadd.f32 %v2094, %v2180
    %v2182 = vpop.f32.mrb[0].mxu0
    %v2183 = vadd.f32 %v2096, %v2182
    %v2184 = vpop.f32.mrb[0].mxu0
    %v2185 = vpop.f32.mrb[0].mxu0
    %2186 = vdwg.mxu0
    %v2187 = vadd.f32 %v2140, %v1271
    %v2188 = vadd.f32 %v2142, %v1275
    %v2189 = vadd.f32 %v2181, %v1279
    %v2190 = vadd.f32 %v2183, %v1283
    %v2191 = vxor.u32 %v2187, 2147483648
    %v2192 = vmul.f32 %v2191, 1.442695
    %v2193 = vpow.pop %v2192
    %v2194 = vadd.f32 %v2193, 1.0
    %v2195 = vrcp.pop %v2194
    %v2196 = vmul.f32 1.0, %v2195
    %v2197 = vxor.u32 %v2188, 2147483648
    %v2198 = vmul.f32 %v2197, 1.442695
    %v2199 = vpow.pop %v2198
    %v2200 = vadd.f32 %v2199, 1.0
    %v2201 = vrcp.pop %v2200
    %v2202 = vmul.f32 1.0, %v2201
    %v2203 = vtanh.pop %v2189
    %v2204 = vxor.u32 %v2190, 2147483648
    %v2205 = vmul.f32 %v2204, 1.442695
    %v2206 = vpow.pop %v2205
    %v2207 = vadd.f32 %v2206, 1.0
    %v2208 = vrcp.pop %v2207
    %v2209 = vmul.f32 1.0, %v2208
    %v2210 = vmul.f32 %v2202, %v1762
    %v2211 = vmul.f32 %v2196, %v2203
    %v2212 = vadd.f32 %v2210, %v2211
    %v2213 = vtanh.pop %v2212
    %v2214 = vmul.f32 %v2209, %v2213
    %v2217 = vunpack.c.l.s4 1966171168
    %v2218 = vunpack.c.0.s8 %v2217
    %v2219 = vlaneseq
    %v2220 = vshrl.u32 %v2219, 7
    %v2221 = vsub.s32 %v2218, %v2220
    %v2222 = vrot.slane %v2016, %v2221
    %v2223 = vcombine.high %v2222, %v2222
    %v2225 = vunpack.c.l.s4 1966171168
    %v2226 = vunpack.c.0.s8 %v2225
    %v2227 = vlaneseq
    %v2228 = vshrl.u32 %v2227, 7
    %v2229 = vsub.s32 %v2226, %v2228
    %v2230 = vrot.slane %v2222, %v2229
    %v2232 = vunpack.c.l.s4 1966171168
    %v2233 = vunpack.c.0.s8 %v2232
    %v2234 = vlaneseq
    %v2235 = vshrl.u32 %v2234, 7
    %v2236 = vsub.s32 %v2233, %v2235
    %v2237 = vrot.slane %v2223, %v2236
    %2240 = vst [vmem:[#allocation11 + $0x2] sm:$0x1] %v2230
    %2241 = vst [vmem:[#allocation11 + $0x12] sm:$0x1] %v2237
    %v2244 = vunpack.c.l.s4 1966171168
    %v2245 = vunpack.c.0.s8 %v2244
    %v2246 = vlaneseq
    %v2247 = vshrl.u32 %v2246, 7
    %v2248 = vsub.s32 %v2245, %v2247
    %v2249 = vrot.slane %v2214, %v2248
    %v2250 = vcombine.high %v2249, %v2249
    %v2252 = vunpack.c.l.s4 1966171168
    %v2253 = vunpack.c.0.s8 %v2252
    %v2254 = vlaneseq
    %v2255 = vshrl.u32 %v2254, 7
    %v2256 = vsub.s32 %v2253, %v2255
    %v2257 = vrot.slane %v2249, %v2256
    %v2259 = vunpack.c.l.s4 1966171168
    %v2260 = vunpack.c.0.s8 %v2259
    %v2261 = vlaneseq
    %v2262 = vshrl.u32 %v2261, 7
    %v2263 = vsub.s32 %v2260, %v2262
    %v2264 = vrot.slane %v2250, %v2263
    %2267 = vst [vmem:[#allocation11 + $0xd] sm:$0x1] %v2257
    %2268 = vst [vmem:[#allocation11 + $0x1d] sm:$0x1] %v2264
    %v2269 = vpack.c.bf16 %v2016, %v2016
    %2270 = vmatprep.subr.bf16.mxu0 %v329
    %2271 = vmatpush1.bf16.msra.mxu0 %v328
    %2272 = vmatprep.subr.bf16.mxu0 %v333
    %2273 = vmatpush1.bf16.msra.mxu0 %v332
    %2274 = vmatprep.subr.bf16.mxu0 %v337
    %2275 = vmatpush1.bf16.msra.mxu0 %v336
    %2276 = vmatprep.subr.bf16.mxu0 %v341
    %2277 = vmatpush1.bf16.msra.mxu0 %v340
    %2278 = vmatprep.subr.bf16.mxu0 %v345
    %2279 = vmatpush1.bf16.msra.mxu0 %v344
    %2280 = vmatprep.subr.bf16.mxu0 %v349
    %2281 = vmatpush1.bf16.msra.mxu0 %v348
    %2282 = vmatprep.subr.bf16.mxu0 %v353
    %2283 = vmatpush1.bf16.msra.mxu0 %v352
    %2284 = vmatprep.subr.bf16.mxu0 %v357
    %2285 = vmatpush1.bf16.msra.mxu0 %v356
    %2286 = vmatprep.subr.bf16.mxu0 0
    %2287 = vmatpush1.bf16.msra.mxu0 0
    %2288 = vmatprep.subr.bf16.mxu0 0
    %2289 = vmatpush1.bf16.msra.mxu0 0
    %2290 = vmatprep.subr.bf16.mxu0 0
    %2291 = vmatpush1.bf16.msra.mxu0 0
    %2292 = vmatprep.subr.bf16.mxu0 0
    %2293 = vmatpush1.bf16.msra.mxu0 0
    %2294 = vmatprep.subr.bf16.mxu0 0
    %2295 = vmatpush1.bf16.msra.mxu0 0
    %2296 = vmatprep.subr.bf16.mxu0 0
    %2297 = vmatpush1.bf16.msra.mxu0 0
    %2298 = vmatprep.subr.bf16.mxu0 0
    %2299 = vmatpush1.bf16.msra.mxu0 0
    %2300 = vmatprep.subr.bf16.mxu0 0
    %2301 = vmatpush1.bf16.msra.mxu0 0
    %2302 = vmatprep.mubr.bf16.mxu0 0
    %2303 = vmatmul.mubr.bf16.gmra.mrb[0].mxu0 %v2269
    %v2304 = vpop.f32.mrb[0].mxu0
    %v2305 = vadd.f32 0.0, %v2304
    %v2306 = vpop.f32.mrb[0].mxu0
    %v2307 = vadd.f32 0.0, %v2306
    %v2308 = vpop.f32.mrb[0].mxu0
    %v2309 = vpop.f32.mrb[0].mxu0
    %2310 = vdwg.mxu0
    %2311 = vmatprep.subr.bf16.mxu0 %v331
    %2312 = vmatpush1.bf16.msra.mxu0 %v330
    %2313 = vmatprep.subr.bf16.mxu0 %v335
    %2314 = vmatpush1.bf16.msra.mxu0 %v334
    %2315 = vmatprep.subr.bf16.mxu0 %v339
    %2316 = vmatpush1.bf16.msra.mxu0 %v338
    %2317 = vmatprep.subr.bf16.mxu0 %v343
    %2318 = vmatpush1.bf16.msra.mxu0 %v342
    %2319 = vmatprep.subr.bf16.mxu0 %v347
    %2320 = vmatpush1.bf16.msra.mxu0 %v346
    %2321 = vmatprep.subr.bf16.mxu0 %v351
    %2322 = vmatpush1.bf16.msra.mxu0 %v350
    %2323 = vmatprep.subr.bf16.mxu0 %v355
    %2324 = vmatpush1.bf16.msra.mxu0 %v354
    %2325 = vmatprep.subr.bf16.mxu0 %v359
    %2326 = vmatpush1.bf16.msra.mxu0 %v358
    %2327 = vmatprep.subr.bf16.mxu0 0
    %2328 = vmatpush1.bf16.msra.mxu0 0
    %2329 = vmatprep.subr.bf16.mxu0 0
    %2330 = vmatpush1.bf16.msra.mxu0 0
    %2331 = vmatprep.subr.bf16.mxu0 0
    %2332 = vmatpush1.bf16.msra.mxu0 0
    %2333 = vmatprep.subr.bf16.mxu0 0
    %2334 = vmatpush1.bf16.msra.mxu0 0
    %2335 = vmatprep.subr.bf16.mxu0 0
    %2336 = vmatpush1.bf16.msra.mxu0 0
    %2337 = vmatprep.subr.bf16.mxu0 0
    %2338 = vmatpush1.bf16.msra.mxu0 0
    %2339 = vmatprep.subr.bf16.mxu0 0
    %2340 = vmatpush1.bf16.msra.mxu0 0
    %2341 = vmatprep.subr.bf16.mxu0 0
    %2342 = vmatpush1.bf16.msra.mxu0 0
    %2343 = vmatprep.mubr.bf16.mxu0 0
    %2344 = vmatmul.mubr.bf16.gmra.mrb[0].mxu0 %v2269
    %v2345 = vpop.f32.mrb[0].mxu0
    %v2346 = vadd.f32 0.0, %v2345
    %v2347 = vpop.f32.mrb[0].mxu0
    %v2348 = vadd.f32 0.0, %v2347
    %v2349 = vpop.f32.mrb[0].mxu0
    %v2350 = vpop.f32.mrb[0].mxu0
    %2351 = vdwg.mxu0
    %v2352 = vrot.slane %v480, 3
    %v2353 = vrot.slane %v481, 2
    %v2354 = vsel %vm483, %v2353, %v2352
    %v2355 = vpack.c.b16 %v2354, %v2354
    %2357 = vmatprep.subr.bf16.mxu0 %v584
    %2358 = vmatpush1.bf16.msra.mxu0 %v583
    %2359 = vmatprep.subr.bf16.mxu0 %v588
    %2360 = vmatpush1.bf16.msra.mxu0 %v587
    %2361 = vmatprep.subr.bf16.mxu0 %v592
    %2362 = vmatpush1.bf16.msra.mxu0 %v591
    %2363 = vmatprep.subr.bf16.mxu0 %v596
    %2364 = vmatpush1.bf16.msra.mxu0 %v595
    %2365 = vmatprep.subr.bf16.mxu0 %v600
    %2366 = vmatpush1.bf16.msra.mxu0 %v599
    %2367 = vmatprep.subr.bf16.mxu0 %v604
    %2368 = vmatpush1.bf16.msra.mxu0 %v603
    %2369 = vmatprep.subr.bf16.mxu0 %v608
    %2370 = vmatpush1.bf16.msra.mxu0 %v607
    %2371 = vmatprep.subr.bf16.mxu0 %v612
    %2372 = vmatpush1.bf16.msra.mxu0 %v611
    %2373 = vmatprep.subr.bf16.mxu0 0
    %2374 = vmatpush1.bf16.msra.mxu0 0
    %2375 = vmatprep.subr.bf16.mxu0 0
    %2376 = vmatpush1.bf16.msra.mxu0 0
    %2377 = vmatprep.subr.bf16.mxu0 0
    %2378 = vmatpush1.bf16.msra.mxu0 0
    %2379 = vmatprep.subr.bf16.mxu0 0
    %2380 = vmatpush1.bf16.msra.mxu0 0
    %2381 = vmatprep.subr.bf16.mxu0 0
    %2382 = vmatpush1.bf16.msra.mxu0 0
    %2383 = vmatprep.subr.bf16.mxu0 0
    %2384 = vmatpush1.bf16.msra.mxu0 0
    %2385 = vmatprep.subr.bf16.mxu0 0
    %2386 = vmatpush1.bf16.msra.mxu0 0
    %2387 = vmatprep.subr.bf16.mxu0 0
    %2388 = vmatpush1.bf16.msra.mxu0 0
    %2389 = vmatprep.mubr.bf16.mxu0 0
    %2390 = vmatmul.mubr.bf16.gmra.mrb[0].mxu0 %v2355
    %v2391 = vpop.f32.mrb[0].mxu0
    %v2392 = vadd.f32 %v2305, %v2391
    %v2393 = vpop.f32.mrb[0].mxu0
    %v2394 = vadd.f32 %v2307, %v2393
    %v2395 = vpop.f32.mrb[0].mxu0
    %v2396 = vpop.f32.mrb[0].mxu0
    %2397 = vdwg.mxu0
    %2398 = vmatprep.subr.bf16.mxu0 %v586
    %2399 = vmatpush1.bf16.msra.mxu0 %v585
    %2400 = vmatprep.subr.bf16.mxu0 %v590
    %2401 = vmatpush1.bf16.msra.mxu0 %v589
    %2402 = vmatprep.subr.bf16.mxu0 %v594
    %2403 = vmatpush1.bf16.msra.mxu0 %v593
    %2404 = vmatprep.subr.bf16.mxu0 %v598
    %2405 = vmatpush1.bf16.msra.mxu0 %v597
    %2406 = vmatprep.subr.bf16.mxu0 %v602
    %2407 = vmatpush1.bf16.msra.mxu0 %v601
    %2408 = vmatprep.subr.bf16.mxu0 %v606
    %2409 = vmatpush1.bf16.msra.mxu0 %v605
    %2410 = vmatprep.subr.bf16.mxu0 %v610
    %2411 = vmatpush1.bf16.msra.mxu0 %v609
    %2412 = vmatprep.subr.bf16.mxu0 %v614
    %2413 = vmatpush1.bf16.msra.mxu0 %v613
    %2414 = vmatprep.subr.bf16.mxu0 0
    %2415 = vmatpush1.bf16.msra.mxu0 0
    %2416 = vmatprep.subr.bf16.mxu0 0
    %2417 = vmatpush1.bf16.msra.mxu0 0
    %2418 = vmatprep.subr.bf16.mxu0 0
    %2419 = vmatpush1.bf16.msra.mxu0 0
    %2420 = vmatprep.subr.bf16.mxu0 0
    %2421 = vmatpush1.bf16.msra.mxu0 0
    %2422 = vmatprep.subr.bf16.mxu0 0
    %2423 = vmatpush1.bf16.msra.mxu0 0
    %2424 = vmatprep.subr.bf16.mxu0 0
    %2425 = vmatpush1.bf16.msra.mxu0 0
    %2426 = vmatprep.subr.bf16.mxu0 0
    %2427 = vmatpush1.bf16.msra.mxu0 0
    %2428 = vmatprep.subr.bf16.mxu0 0
    %2429 = vmatpush1.bf16.msra.mxu0 0
    %2430 = vmatprep.mubr.bf16.mxu0 0
    %2431 = vmatmul.mubr.bf16.gmra.mrb[0].mxu0 %v2355
    %v2432 = vpop.f32.mrb[0].mxu0
    %v2433 = vadd.f32 %v2346, %v2432
    %v2434 = vpop.f32.mrb[0].mxu0
    %v2435 = vadd.f32 %v2348, %v2434
    %v2436 = vpop.f32.mrb[0].mxu0
    %v2437 = vpop.f32.mrb[0].mxu0
    %2438 = vdwg.mxu0
    %v2439 = vadd.f32 %v2392, %v733
    %v2440 = vadd.f32 %v2394, %v737
    %v2441 = vadd.f32 %v2433, %v741
    %v2442 = vadd.f32 %v2435, %v745
    %v2443 = vxor.u32 %v2439, 2147483648
    %v2444 = vmul.f32 %v2443, 1.442695
    %v2445 = vpow.pop %v2444
    %v2446 = vadd.f32 %v2445, 1.0
    %v2447 = vrcp.pop %v2446
    %v2448 = vmul.f32 1.0, %v2447
    %v2449 = vxor.u32 %v2440, 2147483648
    %v2450 = vmul.f32 %v2449, 1.442695
    %v2451 = vpow.pop %v2450
    %v2452 = vadd.f32 %v2451, 1.0
    %v2453 = vrcp.pop %v2452
    %v2454 = vmul.f32 1.0, %v2453
    %v2455 = vtanh.pop %v2441
    %v2456 = vxor.u32 %v2442, 2147483648
    %v2457 = vmul.f32 %v2456, 1.442695
    %v2458 = vpow.pop %v2457
    %v2459 = vadd.f32 %v2458, 1.0
    %v2460 = vrcp.pop %v2459
    %v2461 = vmul.f32 1.0, %v2460
    %v2462 = vmul.f32 %v2454, %v2014
    %v2463 = vmul.f32 %v2448, %v2455
    %v2464 = vadd.f32 %v2462, %v2463
    %v2465 = vtanh.pop %v2464
    %v2466 = vmul.f32 %v2461, %v2465
    %v2467 = vpack.c.bf16 %v2214, %v2214
    %2468 = vmatprep.subr.bf16.mxu0 %v875
    %2469 = vmatpush1.bf16.msra.mxu0 %v874
    %2470 = vmatprep.subr.bf16.mxu0 %v879
    %2471 = vmatpush1.bf16.msra.mxu0 %v878
    %2472 = vmatprep.subr.bf16.mxu0 %v883
    %2473 = vmatpush1.bf16.msra.mxu0 %v882
    %2474 = vmatprep.subr.bf16.mxu0 %v887
    %2475 = vmatpush1.bf16.msra.mxu0 %v886
    %2476 = vmatprep.subr.bf16.mxu0 %v891
    %2477 = vmatpush1.bf16.msra.mxu0 %v890
    %2478 = vmatprep.subr.bf16.mxu0 %v895
    %2479 = vmatpush1.bf16.msra.mxu0 %v894
    %2480 = vmatprep.subr.bf16.mxu0 %v899
    %2481 = vmatpush1.bf16.msra.mxu0 %v898
    %2482 = vmatprep.subr.bf16.mxu0 %v903
    %2483 = vmatpush1.bf16.msra.mxu0 %v902
    %2484 = vmatprep.subr.bf16.mxu0 0
    %2485 = vmatpush1.bf16.msra.mxu0 0
    %2486 = vmatprep.subr.bf16.mxu0 0
    %2487 = vmatpush1.bf16.msra.mxu0 0
    %2488 = vmatprep.subr.bf16.mxu0 0
    %2489 = vmatpush1.bf16.msra.mxu0 0
    %2490 = vmatprep.subr.bf16.mxu0 0
    %2491 = vmatpush1.bf16.msra.mxu0 0
    %2492 = vmatprep.subr.bf16.mxu0 0
    %2493 = vmatpush1.bf16.msra.mxu0 0
    %2494 = vmatprep.subr.bf16.mxu0 0
    %2495 = vmatpush1.bf16.msra.mxu0 0
    %2496 = vmatprep.subr.bf16.mxu0 0
    %2497 = vmatpush1.bf16.msra.mxu0 0
    %2498 = vmatprep.subr.bf16.mxu0 0
    %2499 = vmatpush1.bf16.msra.mxu0 0
    %2500 = vmatprep.mubr.bf16.mxu0 0
    %2501 = vmatmul.mubr.bf16.gmra.mrb[0].mxu0 %v2467
    %v2502 = vpop.f32.mrb[0].mxu0
    %v2503 = vadd.f32 0.0, %v2502
    %v2504 = vpop.f32.mrb[0].mxu0
    %v2505 = vadd.f32 0.0, %v2504
    %v2506 = vpop.f32.mrb[0].mxu0
    %v2507 = vpop.f32.mrb[0].mxu0
    %2508 = vdwg.mxu0
    %2509 = vmatprep.subr.bf16.mxu0 %v877
    %2510 = vmatpush1.bf16.msra.mxu0 %v876
    %2511 = vmatprep.subr.bf16.mxu0 %v881
    %2512 = vmatpush1.bf16.msra.mxu0 %v880
    %2513 = vmatprep.subr.bf16.mxu0 %v885
    %2514 = vmatpush1.bf16.msra.mxu0 %v884
    %2515 = vmatprep.subr.bf16.mxu0 %v889
    %2516 = vmatpush1.bf16.msra.mxu0 %v888
    %2517 = vmatprep.subr.bf16.mxu0 %v893
    %2518 = vmatpush1.bf16.msra.mxu0 %v892
    %2519 = vmatprep.subr.bf16.mxu0 %v897
    %2520 = vmatpush1.bf16.msra.mxu0 %v896
    %2521 = vmatprep.subr.bf16.mxu0 %v901
    %2522 = vmatpush1.bf16.msra.mxu0 %v900
    %2523 = vmatprep.subr.bf16.mxu0 %v905
    %2524 = vmatpush1.bf16.msra.mxu0 %v904
    %2525 = vmatprep.subr.bf16.mxu0 0
    %2526 = vmatpush1.bf16.msra.mxu0 0
    %2527 = vmatprep.subr.bf16.mxu0 0
    %2528 = vmatpush1.bf16.msra.mxu0 0
    %2529 = vmatprep.subr.bf16.mxu0 0
    %2530 = vmatpush1.bf16.msra.mxu0 0
    %2531 = vmatprep.subr.bf16.mxu0 0
    %2532 = vmatpush1.bf16.msra.mxu0 0
    %2533 = vmatprep.subr.bf16.mxu0 0
    %2534 = vmatpush1.bf16.msra.mxu0 0
    %2535 = vmatprep.subr.bf16.mxu0 0
    %2536 = vmatpush1.bf16.msra.mxu0 0
    %2537 = vmatprep.subr.bf16.mxu0 0
    %2538 = vmatpush1.bf16.msra.mxu0 0
    %2539 = vmatprep.subr.bf16.mxu0 0
    %2540 = vmatpush1.bf16.msra.mxu0 0
    %2541 = vmatprep.mubr.bf16.mxu0 0
    %2542 = vmatmul.mubr.bf16.gmra.mrb[0].mxu0 %v2467
    %v2543 = vpop.f32.mrb[0].mxu0
    %v2544 = vadd.f32 0.0, %v2543
    %v2545 = vpop.f32.mrb[0].mxu0
    %v2546 = vadd.f32 0.0, %v2545
    %v2547 = vpop.f32.mrb[0].mxu0
    %v2548 = vpop.f32.mrb[0].mxu0
    %2549 = vdwg.mxu0
    %v2550 = vrot.slane %v480, 4
    %v2551 = vrot.slane %v481, 3
    %v2552 = vsel %vm483, %v2551, %v2550
    %v2553 = vpack.c.b16 %v2552, %v2552
    %2555 = vmatprep.subr.bf16.mxu0 %v1122
    %2556 = vmatpush1.bf16.msra.mxu0 %v1121
    %2557 = vmatprep.subr.bf16.mxu0 %v1126
    %2558 = vmatpush1.bf16.msra.mxu0 %v1125
    %2559 = vmatprep.subr.bf16.mxu0 %v1130
    %2560 = vmatpush1.bf16.msra.mxu0 %v1129
    %2561 = vmatprep.subr.bf16.mxu0 %v1134
    %2562 = vmatpush1.bf16.msra.mxu0 %v1133
    %2563 = vmatprep.subr.bf16.mxu0 %v1138
    %2564 = vmatpush1.bf16.msra.mxu0 %v1137
    %2565 = vmatprep.subr.bf16.mxu0 %v1142
    %2566 = vmatpush1.bf16.msra.mxu0 %v1141
    %2567 = vmatprep.subr.bf16.mxu0 %v1146
    %2568 = vmatpush1.bf16.msra.mxu0 %v1145
    %2569 = vmatprep.subr.bf16.mxu0 %v1150
    %2570 = vmatpush1.bf16.msra.mxu0 %v1149
    %2571 = vmatprep.subr.bf16.mxu0 0
    %2572 = vmatpush1.bf16.msra.mxu0 0
    %2573 = vmatprep.subr.bf16.mxu0 0
    %2574 = vmatpush1.bf16.msra.mxu0 0
    %2575 = vmatprep.subr.bf16.mxu0 0
    %2576 = vmatpush1.bf16.msra.mxu0 0
    %2577 = vmatprep.subr.bf16.mxu0 0
    %2578 = vmatpush1.bf16.msra.mxu0 0
    %2579 = vmatprep.subr.bf16.mxu0 0
    %2580 = vmatpush1.bf16.msra.mxu0 0
    %2581 = vmatprep.subr.bf16.mxu0 0
    %2582 = vmatpush1.bf16.msra.mxu0 0
    %2583 = vmatprep.subr.bf16.mxu0 0
    %2584 = vmatpush1.bf16.msra.mxu0 0
    %2585 = vmatprep.subr.bf16.mxu0 0
    %2586 = vmatpush1.bf16.msra.mxu0 0
    %2587 = vmatprep.mubr.bf16.mxu0 0
    %2588 = vmatmul.mubr.bf16.gmra.mrb[0].mxu0 %v2553
    %v2589 = vpop.f32.mrb[0].mxu0
    %v2590 = vadd.f32 %v2503, %v2589
    %v2591 = vpop.f32.mrb[0].mxu0
    %v2592 = vadd.f32 %v2505, %v2591
    %v2593 = vpop.f32.mrb[0].mxu0
    %v2594 = vpop.f32.mrb[0].mxu0
    %2595 = vdwg.mxu0
    %2596 = vmatprep.subr.bf16.mxu0 %v1124
    %2597 = vmatpush1.bf16.msra.mxu0 %v1123
    %2598 = vmatprep.subr.bf16.mxu0 %v1128
    %2599 = vmatpush1.bf16.msra.mxu0 %v1127
    %2600 = vmatprep.subr.bf16.mxu0 %v1132
    %2601 = vmatpush1.bf16.msra.mxu0 %v1131
    %2602 = vmatprep.subr.bf16.mxu0 %v1136
    %2603 = vmatpush1.bf16.msra.mxu0 %v1135
    %2604 = vmatprep.subr.bf16.mxu0 %v1140
    %2605 = vmatpush1.bf16.msra.mxu0 %v1139
    %2606 = vmatprep.subr.bf16.mxu0 %v1144
    %2607 = vmatpush1.bf16.msra.mxu0 %v1143
    %2608 = vmatprep.subr.bf16.mxu0 %v1148
    %2609 = vmatpush1.bf16.msra.mxu0 %v1147
    %2610 = vmatprep.subr.bf16.mxu0 %v1152
    %2611 = vmatpush1.bf16.msra.mxu0 %v1151
    %2612 = vmatprep.subr.bf16.mxu0 0
    %2613 = vmatpush1.bf16.msra.mxu0 0
    %2614 = vmatprep.subr.bf16.mxu0 0
    %2615 = vmatpush1.bf16.msra.mxu0 0
    %2616 = vmatprep.subr.bf16.mxu0 0
    %2617 = vmatpush1.bf16.msra.mxu0 0
    %2618 = vmatprep.subr.bf16.mxu0 0
    %2619 = vmatpush1.bf16.msra.mxu0 0
    %2620 = vmatprep.subr.bf16.mxu0 0
    %2621 = vmatpush1.bf16.msra.mxu0 0
    %2622 = vmatprep.subr.bf16.mxu0 0
    %2623 = vmatpush1.bf16.msra.mxu0 0
    %2624 = vmatprep.subr.bf16.mxu0 0
    %2625 = vmatpush1.bf16.msra.mxu0 0
    %2626 = vmatprep.subr.bf16.mxu0 0
    %2627 = vmatpush1.bf16.msra.mxu0 0
    %2628 = vmatprep.mubr.bf16.mxu0 0
    %2629 = vmatmul.mubr.bf16.gmra.mrb[0].mxu0 %v2553
    %v2630 = vpop.f32.mrb[0].mxu0
    %v2631 = vadd.f32 %v2544, %v2630
    %v2632 = vpop.f32.mrb[0].mxu0
    %v2633 = vadd.f32 %v2546, %v2632
    %v2634 = vpop.f32.mrb[0].mxu0
    %v2635 = vpop.f32.mrb[0].mxu0
    %2636 = vdwg.mxu0
    %v2637 = vadd.f32 %v2590, %v1271
    %v2638 = vadd.f32 %v2592, %v1275
    %v2639 = vadd.f32 %v2631, %v1279
    %v2640 = vadd.f32 %v2633, %v1283
    %v2641 = vxor.u32 %v2637, 2147483648
    %v2642 = vmul.f32 %v2641, 1.442695
    %v2643 = vpow.pop %v2642
    %v2644 = vadd.f32 %v2643, 1.0
    %v2645 = vrcp.pop %v2644
    %v2646 = vmul.f32 1.0, %v2645
    %v2647 = vxor.u32 %v2638, 2147483648
    %v2648 = vmul.f32 %v2647, 1.442695
    %v2649 = vpow.pop %v2648
    %v2650 = vadd.f32 %v2649, 1.0
    %v2651 = vrcp.pop %v2650
    %v2652 = vmul.f32 1.0, %v2651
    %v2653 = vtanh.pop %v2639
    %v2654 = vxor.u32 %v2640, 2147483648
    %v2655 = vmul.f32 %v2654, 1.442695
    %v2656 = vpow.pop %v2655
    %v2657 = vadd.f32 %v2656, 1.0
    %v2658 = vrcp.pop %v2657
    %v2659 = vmul.f32 1.0, %v2658
    %v2660 = vmul.f32 %v2652, %v2212
    %v2661 = vmul.f32 %v2646, %v2653
    %v2662 = vadd.f32 %v2660, %v2661
    %v2663 = vtanh.pop %v2662
    %v2664 = vmul.f32 %v2659, %v2663
    %v2667 = vunpack.c.l.s4 1966171168
    %v2668 = vunpack.c.0.s8 %v2667
    %v2669 = vlaneseq
    %v2670 = vshrl.u32 %v2669, 7
    %v2671 = vsub.s32 %v2668, %v2670
    %v2672 = vrot.slane %v2466, %v2671
    %v2673 = vcombine.high %v2672, %v2672
    %v2675 = vunpack.c.l.s4 1966171168
    %v2676 = vunpack.c.0.s8 %v2675
    %v2677 = vlaneseq
    %v2678 = vshrl.u32 %v2677, 7
    %v2679 = vsub.s32 %v2676, %v2678
    %v2680 = vrot.slane %v2672, %v2679
    %v2682 = vunpack.c.l.s4 1966171168
    %v2683 = vunpack.c.0.s8 %v2682
    %v2684 = vlaneseq
    %v2685 = vshrl.u32 %v2684, 7
    %v2686 = vsub.s32 %v2683, %v2685
    %v2687 = vrot.slane %v2673, %v2686
    %2690 = vst [vmem:[#allocation11 + $0x3] sm:$0x1] %v2680
    %2691 = vst [vmem:[#allocation11 + $0x13] sm:$0x1] %v2687
    %v2694 = vunpack.c.l.s4 1966171168
    %v2695 = vunpack.c.0.s8 %v2694
    %v2696 = vlaneseq
    %v2697 = vshrl.u32 %v2696, 7
    %v2698 = vsub.s32 %v2695, %v2697
    %v2699 = vrot.slane %v2664, %v2698
    %v2700 = vcombine.high %v2699, %v2699
    %v2702 = vunpack.c.l.s4 1966171168
    %v2703 = vunpack.c.0.s8 %v2702
    %v2704 = vlaneseq
    %v2705 = vshrl.u32 %v2704, 7
    %v2706 = vsub.s32 %v2703, %v2705
    %v2707 = vrot.slane %v2699, %v2706
    %v2709 = vunpack.c.l.s4 1966171168
    %v2710 = vunpack.c.0.s8 %v2709
    %v2711 = vlaneseq
    %v2712 = vshrl.u32 %v2711, 7
    %v2713 = vsub.s32 %v2710, %v2712
    %v2714 = vrot.slane %v2700, %v2713
    %2717 = vst [vmem:[#allocation11 + $0xc] sm:$0x1] %v2707
    %2718 = vst [vmem:[#allocation11 + $0x1c] sm:$0x1] %v2714
    %v2719 = vpack.c.bf16 %v2466, %v2466
    %2720 = vmatprep.subr.bf16.mxu0 %v329
    %2721 = vmatpush1.bf16.msra.mxu0 %v328
    %2722 = vmatprep.subr.bf16.mxu0 %v333
    %2723 = vmatpush1.bf16.msra.mxu0 %v332
    %2724 = vmatprep.subr.bf16.mxu0 %v337
    %2725 = vmatpush1.bf16.msra.mxu0 %v336
    %2726 = vmatprep.subr.bf16.mxu0 %v341
    %2727 = vmatpush1.bf16.msra.mxu0 %v340
    %2728 = vmatprep.subr.bf16.mxu0 %v345
    %2729 = vmatpush1.bf16.msra.mxu0 %v344
    %2730 = vmatprep.subr.bf16.mxu0 %v349
    %2731 = vmatpush1.bf16.msra.mxu0 %v348
    %2732 = vmatprep.subr.bf16.mxu0 %v353
    %2733 = vmatpush1.bf16.msra.mxu0 %v352
    %2734 = vmatprep.subr.bf16.mxu0 %v357
    %2735 = vmatpush1.bf16.msra.mxu0 %v356
    %2736 = vmatprep.subr.bf16.mxu0 0
    %2737 = vmatpush1.bf16.msra.mxu0 0
    %2738 = vmatprep.subr.bf16.mxu0 0
    %2739 = vmatpush1.bf16.msra.mxu0 0
    %2740 = vmatprep.subr.bf16.mxu0 0
    %2741 = vmatpush1.bf16.msra.mxu0 0
    %2742 = vmatprep.subr.bf16.mxu0 0
    %2743 = vmatpush1.bf16.msra.mxu0 0
    %2744 = vmatprep.subr.bf16.mxu0 0
    %2745 = vmatpush1.bf16.msra.mxu0 0
    %2746 = vmatprep.subr.bf16.mxu0 0
    %2747 = vmatpush1.bf16.msra.mxu0 0
    %2748 = vmatprep.subr.bf16.mxu0 0
    %2749 = vmatpush1.bf16.msra.mxu0 0
    %2750 = vmatprep.subr.bf16.mxu0 0
    %2751 = vmatpush1.bf16.msra.mxu0 0
    %2752 = vmatprep.mubr.bf16.mxu0 0
    %2753 = vmatmul.mubr.bf16.gmra.mrb[0].mxu0 %v2719
    %v2754 = vpop.f32.mrb[0].mxu0
    %v2755 = vadd.f32 0.0, %v2754
    %v2756 = vpop.f32.mrb[0].mxu0
    %v2757 = vadd.f32 0.0, %v2756
    %v2758 = vpop.f32.mrb[0].mxu0
    %v2759 = vpop.f32.mrb[0].mxu0
    %2760 = vdwg.mxu0
    %2761 = vmatprep.subr.bf16.mxu0 %v331
    %2762 = vmatpush1.bf16.msra.mxu0 %v330
    %2763 = vmatprep.subr.bf16.mxu0 %v335
    %2764 = vmatpush1.bf16.msra.mxu0 %v334
    %2765 = vmatprep.subr.bf16.mxu0 %v339
    %2766 = vmatpush1.bf16.msra.mxu0 %v338
    %2767 = vmatprep.subr.bf16.mxu0 %v343
    %2768 = vmatpush1.bf16.msra.mxu0 %v342
    %2769 = vmatprep.subr.bf16.mxu0 %v347
    %2770 = vmatpush1.bf16.msra.mxu0 %v346
    %2771 = vmatprep.subr.bf16.mxu0 %v351
    %2772 = vmatpush1.bf16.msra.mxu0 %v350
    %2773 = vmatprep.subr.bf16.mxu0 %v355
    %2774 = vmatpush1.bf16.msra.mxu0 %v354
    %2775 = vmatprep.subr.bf16.mxu0 %v359
    %2776 = vmatpush1.bf16.msra.mxu0 %v358
    %2777 = vmatprep.subr.bf16.mxu0 0
    %2778 = vmatpush1.bf16.msra.mxu0 0
    %2779 = vmatprep.subr.bf16.mxu0 0
    %2780 = vmatpush1.bf16.msra.mxu0 0
    %2781 = vmatprep.subr.bf16.mxu0 0
    %2782 = vmatpush1.bf16.msra.mxu0 0
    %2783 = vmatprep.subr.bf16.mxu0 0
    %2784 = vmatpush1.bf16.msra.mxu0 0
    %2785 = vmatprep.subr.bf16.mxu0 0
    %2786 = vmatpush1.bf16.msra.mxu0 0
    %2787 = vmatprep.subr.bf16.mxu0 0
    %2788 = vmatpush1.bf16.msra.mxu0 0
    %2789 = vmatprep.subr.bf16.mxu0 0
    %2790 = vmatpush1.bf16.msra.mxu0 0
    %2791 = vmatprep.subr.bf16.mxu0 0
    %2792 = vmatpush1.bf16.msra.mxu0 0
    %2793 = vmatprep.mubr.bf16.mxu0 0
    %2794 = vmatmul.mubr.bf16.gmra.mrb[0].mxu0 %v2719
    %v2795 = vpop.f32.mrb[0].mxu0
    %v2796 = vadd.f32 0.0, %v2795
    %v2797 = vpop.f32.mrb[0].mxu0
    %v2798 = vadd.f32 0.0, %v2797
    %v2799 = vpop.f32.mrb[0].mxu0
    %v2800 = vpop.f32.mrb[0].mxu0
    %2801 = vdwg.mxu0
    %2802 = vmatprep.subr.bf16.mxu0 %v584
    %2803 = vmatpush1.bf16.msra.mxu0 %v583
    %2804 = vmatprep.subr.bf16.mxu0 %v588
    %2805 = vmatpush1.bf16.msra.mxu0 %v587
    %2806 = vmatprep.subr.bf16.mxu0 %v592
    %2807 = vmatpush1.bf16.msra.mxu0 %v591
    %2808 = vmatprep.subr.bf16.mxu0 %v596
    %2809 = vmatpush1.bf16.msra.mxu0 %v595
    %2810 = vmatprep.subr.bf16.mxu0 %v600
    %2811 = vmatpush1.bf16.msra.mxu0 %v599
    %2812 = vmatprep.subr.bf16.mxu0 %v604
    %2813 = vmatpush1.bf16.msra.mxu0 %v603
    %2814 = vmatprep.subr.bf16.mxu0 %v608
    %2815 = vmatpush1.bf16.msra.mxu0 %v607
    %2816 = vmatprep.subr.bf16.mxu0 %v612
    %2817 = vmatpush1.bf16.msra.mxu0 %v611
    %2818 = vmatprep.subr.bf16.mxu0 0
    %2819 = vmatpush1.bf16.msra.mxu0 0
    %2820 = vmatprep.subr.bf16.mxu0 0
    %2821 = vmatpush1.bf16.msra.mxu0 0
    %2822 = vmatprep.subr.bf16.mxu0 0
    %2823 = vmatpush1.bf16.msra.mxu0 0
    %2824 = vmatprep.subr.bf16.mxu0 0
    %2825 = vmatpush1.bf16.msra.mxu0 0
    %2826 = vmatprep.subr.bf16.mxu0 0
    %2827 = vmatpush1.bf16.msra.mxu0 0
    %2828 = vmatprep.subr.bf16.mxu0 0
    %2829 = vmatpush1.bf16.msra.mxu0 0
    %2830 = vmatprep.subr.bf16.mxu0 0
    %2831 = vmatpush1.bf16.msra.mxu0 0
    %2832 = vmatprep.subr.bf16.mxu0 0
    %2833 = vmatpush1.bf16.msra.mxu0 0
    %2834 = vmatprep.mubr.bf16.mxu0 0
    %2835 = vmatmul.mubr.bf16.gmra.mrb[0].mxu0 %v2553
    %v2836 = vpop.f32.mrb[0].mxu0
    %v2837 = vadd.f32 %v2755, %v2836
    %v2838 = vpop.f32.mrb[0].mxu0
    %v2839 = vadd.f32 %v2757, %v2838
    %v2840 = vpop.f32.mrb[0].mxu0
    %v2841 = vpop.f32.mrb[0].mxu0
    %2842 = vdwg.mxu0
    %2843 = vmatprep.subr.bf16.mxu0 %v586
    %2844 = vmatpush1.bf16.msra.mxu0 %v585
    %2845 = vmatprep.subr.bf16.mxu0 %v590
    %2846 = vmatpush1.bf16.msra.mxu0 %v589
    %2847 = vmatprep.subr.bf16.mxu0 %v594
    %2848 = vmatpush1.bf16.msra.mxu0 %v593
    %2849 = vmatprep.subr.bf16.mxu0 %v598
    %2850 = vmatpush1.bf16.msra.mxu0 %v597
    %2851 = vmatprep.subr.bf16.mxu0 %v602
    %2852 = vmatpush1.bf16.msra.mxu0 %v601
    %2853 = vmatprep.subr.bf16.mxu0 %v606
    %2854 = vmatpush1.bf16.msra.mxu0 %v605
    %2855 = vmatprep.subr.bf16.mxu0 %v610
    %2856 = vmatpush1.bf16.msra.mxu0 %v609
    %2857 = vmatprep.subr.bf16.mxu0 %v614
    %2858 = vmatpush1.bf16.msra.mxu0 %v613
    %2859 = vmatprep.subr.bf16.mxu0 0
    %2860 = vmatpush1.bf16.msra.mxu0 0
    %2861 = vmatprep.subr.bf16.mxu0 0
    %2862 = vmatpush1.bf16.msra.mxu0 0
    %2863 = vmatprep.subr.bf16.mxu0 0
    %2864 = vmatpush1.bf16.msra.mxu0 0
    %2865 = vmatprep.subr.bf16.mxu0 0
    %2866 = vmatpush1.bf16.msra.mxu0 0
    %2867 = vmatprep.subr.bf16.mxu0 0
    %2868 = vmatpush1.bf16.msra.mxu0 0
    %2869 = vmatprep.subr.bf16.mxu0 0
    %2870 = vmatpush1.bf16.msra.mxu0 0
    %2871 = vmatprep.subr.bf16.mxu0 0
    %2872 = vmatpush1.bf16.msra.mxu0 0
    %2873 = vmatprep.subr.bf16.mxu0 0
    %2874 = vmatpush1.bf16.msra.mxu0 0
    %2875 = vmatprep.mubr.bf16.mxu0 0
    %2876 = vmatmul.mubr.bf16.gmra.mrb[0].mxu0 %v2553
    %v2877 = vpop.f32.mrb[0].mxu0
    %v2878 = vadd.f32 %v2796, %v2877
    %v2879 = vpop.f32.mrb[0].mxu0
    %v2880 = vadd.f32 %v2798, %v2879
    %v2881 = vpop.f32.mrb[0].mxu0
    %v2882 = vpop.f32.mrb[0].mxu0
    %2883 = vdwg.mxu0
    %v2884 = vadd.f32 %v2837, %v733
    %v2885 = vadd.f32 %v2839, %v737
    %v2886 = vadd.f32 %v2878, %v741
    %v2887 = vadd.f32 %v2880, %v745
    %v2888 = vxor.u32 %v2884, 2147483648
    %v2889 = vmul.f32 %v2888, 1.442695
    %v2890 = vpow.pop %v2889
    %v2891 = vadd.f32 %v2890, 1.0
    %v2892 = vrcp.pop %v2891
    %v2893 = vmul.f32 1.0, %v2892
    %v2894 = vxor.u32 %v2885, 2147483648
    %v2895 = vmul.f32 %v2894, 1.442695
    %v2896 = vpow.pop %v2895
    %v2897 = vadd.f32 %v2896, 1.0
    %v2898 = vrcp.pop %v2897
    %v2899 = vmul.f32 1.0, %v2898
    %v2900 = vtanh.pop %v2886
    %v2901 = vxor.u32 %v2887, 2147483648
    %v2902 = vmul.f32 %v2901, 1.442695
    %v2903 = vpow.pop %v2902
    %v2904 = vadd.f32 %v2903, 1.0
    %v2905 = vrcp.pop %v2904
    %v2906 = vmul.f32 1.0, %v2905
    %v2907 = vmul.f32 %v2899, %v2464
    %v2908 = vmul.f32 %v2893, %v2900
    %v2909 = vadd.f32 %v2907, %v2908
    %v2910 = vtanh.pop %v2909
    %v2911 = vmul.f32 %v2906, %v2910
    %v2912 = vpack.c.bf16 %v2664, %v2664
    %2913 = vmatprep.subr.bf16.mxu0 %v875
    %2914 = vmatpush1.bf16.msra.mxu0 %v874
    %2915 = vmatprep.subr.bf16.mxu0 %v879
    %2916 = vmatpush1.bf16.msra.mxu0 %v878
    %2917 = vmatprep.subr.bf16.mxu0 %v883
    %2918 = vmatpush1.bf16.msra.mxu0 %v882
    %2919 = vmatprep.subr.bf16.mxu0 %v887
    %2920 = vmatpush1.bf16.msra.mxu0 %v886
    %2921 = vmatprep.subr.bf16.mxu0 %v891
    %2922 = vmatpush1.bf16.msra.mxu0 %v890
    %2923 = vmatprep.subr.bf16.mxu0 %v895
    %2924 = vmatpush1.bf16.msra.mxu0 %v894
    %2925 = vmatprep.subr.bf16.mxu0 %v899
    %2926 = vmatpush1.bf16.msra.mxu0 %v898
    %2927 = vmatprep.subr.bf16.mxu0 %v903
    %2928 = vmatpush1.bf16.msra.mxu0 %v902
    %2929 = vmatprep.subr.bf16.mxu0 0
    %2930 = vmatpush1.bf16.msra.mxu0 0
    %2931 = vmatprep.subr.bf16.mxu0 0
    %2932 = vmatpush1.bf16.msra.mxu0 0
    %2933 = vmatprep.subr.bf16.mxu0 0
    %2934 = vmatpush1.bf16.msra.mxu0 0
    %2935 = vmatprep.subr.bf16.mxu0 0
    %2936 = vmatpush1.bf16.msra.mxu0 0
    %2937 = vmatprep.subr.bf16.mxu0 0
    %2938 = vmatpush1.bf16.msra.mxu0 0
    %2939 = vmatprep.subr.bf16.mxu0 0
    %2940 = vmatpush1.bf16.msra.mxu0 0
    %2941 = vmatprep.subr.bf16.mxu0 0
    %2942 = vmatpush1.bf16.msra.mxu0 0
    %2943 = vmatprep.subr.bf16.mxu0 0
    %2944 = vmatpush1.bf16.msra.mxu0 0
    %2945 = vmatprep.mubr.bf16.mxu0 0
    %2946 = vmatmul.mubr.bf16.gmra.mrb[0].mxu0 %v2912
    %v2947 = vpop.f32.mrb[0].mxu0
    %v2948 = vadd.f32 0.0, %v2947
    %v2949 = vpop.f32.mrb[0].mxu0
    %v2950 = vadd.f32 0.0, %v2949
    %v2951 = vpop.f32.mrb[0].mxu0
    %v2952 = vpop.f32.mrb[0].mxu0
    %2953 = vdwg.mxu0
    %2954 = vmatprep.subr.bf16.mxu0 %v877
    %2955 = vmatpush1.bf16.msra.mxu0 %v876
    %2956 = vmatprep.subr.bf16.mxu0 %v881
    %2957 = vmatpush1.bf16.msra.mxu0 %v880
    %2958 = vmatprep.subr.bf16.mxu0 %v885
    %2959 = vmatpush1.bf16.msra.mxu0 %v884
    %2960 = vmatprep.subr.bf16.mxu0 %v889
    %2961 = vmatpush1.bf16.msra.mxu0 %v888
    %2962 = vmatprep.subr.bf16.mxu0 %v893
    %2963 = vmatpush1.bf16.msra.mxu0 %v892
    %2964 = vmatprep.subr.bf16.mxu0 %v897
    %2965 = vmatpush1.bf16.msra.mxu0 %v896
    %2966 = vmatprep.subr.bf16.mxu0 %v901
    %2967 = vmatpush1.bf16.msra.mxu0 %v900
    %2968 = vmatprep.subr.bf16.mxu0 %v905
    %2969 = vmatpush1.bf16.msra.mxu0 %v904
    %2970 = vmatprep.subr.bf16.mxu0 0
    %2971 = vmatpush1.bf16.msra.mxu0 0
    %2972 = vmatprep.subr.bf16.mxu0 0
    %2973 = vmatpush1.bf16.msra.mxu0 0
    %2974 = vmatprep.subr.bf16.mxu0 0
    %2975 = vmatpush1.bf16.msra.mxu0 0
    %2976 = vmatprep.subr.bf16.mxu0 0
    %2977 = vmatpush1.bf16.msra.mxu0 0
    %2978 = vmatprep.subr.bf16.mxu0 0
    %2979 = vmatpush1.bf16.msra.mxu0 0
    %2980 = vmatprep.subr.bf16.mxu0 0
    %2981 = vmatpush1.bf16.msra.mxu0 0
    %2982 = vmatprep.subr.bf16.mxu0 0
    %2983 = vmatpush1.bf16.msra.mxu0 0
    %2984 = vmatprep.subr.bf16.mxu0 0
    %2985 = vmatpush1.bf16.msra.mxu0 0
    %2986 = vmatprep.mubr.bf16.mxu0 0
    %2987 = vmatmul.mubr.bf16.gmra.mrb[0].mxu0 %v2912
    %v2988 = vpop.f32.mrb[0].mxu0
    %v2989 = vadd.f32 0.0, %v2988
    %v2990 = vpop.f32.mrb[0].mxu0
    %v2991 = vadd.f32 0.0, %v2990
    %v2992 = vpop.f32.mrb[0].mxu0
    %v2993 = vpop.f32.mrb[0].mxu0
    %2994 = vdwg.mxu0
    %2995 = vmatprep.subr.bf16.mxu0 %v1122
    %2996 = vmatpush1.bf16.msra.mxu0 %v1121
    %2997 = vmatprep.subr.bf16.mxu0 %v1126
    %2998 = vmatpush1.bf16.msra.mxu0 %v1125
    %2999 = vmatprep.subr.bf16.mxu0 %v1130
    %3000 = vmatpush1.bf16.msra.mxu0 %v1129
    %3001 = vmatprep.subr.bf16.mxu0 %v1134
    %3002 = vmatpush1.bf16.msra.mxu0 %v1133
    %3003 = vmatprep.subr.bf16.mxu0 %v1138
    %3004 = vmatpush1.bf16.msra.mxu0 %v1137
    %3005 = vmatprep.subr.bf16.mxu0 %v1142
    %3006 = vmatpush1.bf16.msra.mxu0 %v1141
    %3007 = vmatprep.subr.bf16.mxu0 %v1146
    %3008 = vmatpush1.bf16.msra.mxu0 %v1145
    %3009 = vmatprep.subr.bf16.mxu0 %v1150
    %3010 = vmatpush1.bf16.msra.mxu0 %v1149
    %3011 = vmatprep.subr.bf16.mxu0 0
    %3012 = vmatpush1.bf16.msra.mxu0 0
    %3013 = vmatprep.subr.bf16.mxu0 0
    %3014 = vmatpush1.bf16.msra.mxu0 0
    %3015 = vmatprep.subr.bf16.mxu0 0
    %3016 = vmatpush1.bf16.msra.mxu0 0
    %3017 = vmatprep.subr.bf16.mxu0 0
    %3018 = vmatpush1.bf16.msra.mxu0 0
    %3019 = vmatprep.subr.bf16.mxu0 0
    %3020 = vmatpush1.bf16.msra.mxu0 0
    %3021 = vmatprep.subr.bf16.mxu0 0
    %3022 = vmatpush1.bf16.msra.mxu0 0
    %3023 = vmatprep.subr.bf16.mxu0 0
    %3024 = vmatpush1.bf16.msra.mxu0 0
    %3025 = vmatprep.subr.bf16.mxu0 0
    %3026 = vmatpush1.bf16.msra.mxu0 0
    %3027 = vmatprep.mubr.bf16.mxu0 0
    %3028 = vmatmul.mubr.bf16.gmra.mrb[0].mxu0 %v2355
    %v3029 = vpop.f32.mrb[0].mxu0
    %v3030 = vadd.f32 %v2948, %v3029
    %v3031 = vpop.f32.mrb[0].mxu0
    %v3032 = vadd.f32 %v2950, %v3031
    %v3033 = vpop.f32.mrb[0].mxu0
    %v3034 = vpop.f32.mrb[0].mxu0
    %3035 = vdwg.mxu0
    %3036 = vmatprep.subr.bf16.mxu0 %v1124
    %3037 = vmatpush1.bf16.msra.mxu0 %v1123
    %3038 = vmatprep.subr.bf16.mxu0 %v1128
    %3039 = vmatpush1.bf16.msra.mxu0 %v1127
    %3040 = vmatprep.subr.bf16.mxu0 %v1132
    %3041 = vmatpush1.bf16.msra.mxu0 %v1131
    %3042 = vmatprep.subr.bf16.mxu0 %v1136
    %3043 = vmatpush1.bf16.msra.mxu0 %v1135
    %3044 = vmatprep.subr.bf16.mxu0 %v1140
    %3045 = vmatpush1.bf16.msra.mxu0 %v1139
    %3046 = vmatprep.subr.bf16.mxu0 %v1144
    %3047 = vmatpush1.bf16.msra.mxu0 %v1143
    %3048 = vmatprep.subr.bf16.mxu0 %v1148
    %3049 = vmatpush1.bf16.msra.mxu0 %v1147
    %3050 = vmatprep.subr.bf16.mxu0 %v1152
    %3051 = vmatpush1.bf16.msra.mxu0 %v1151
    %3052 = vmatprep.subr.bf16.mxu0 0
    %3053 = vmatpush1.bf16.msra.mxu0 0
    %3054 = vmatprep.subr.bf16.mxu0 0
    %3055 = vmatpush1.bf16.msra.mxu0 0
    %3056 = vmatprep.subr.bf16.mxu0 0
    %3057 = vmatpush1.bf16.msra.mxu0 0
    %3058 = vmatprep.subr.bf16.mxu0 0
    %3059 = vmatpush1.bf16.msra.mxu0 0
    %3060 = vmatprep.subr.bf16.mxu0 0
    %3061 = vmatpush1.bf16.msra.mxu0 0
    %3062 = vmatprep.subr.bf16.mxu0 0
    %3063 = vmatpush1.bf16.msra.mxu0 0
    %3064 = vmatprep.subr.bf16.mxu0 0
    %3065 = vmatpush1.bf16.msra.mxu0 0
    %3066 = vmatprep.subr.bf16.mxu0 0
    %3067 = vmatpush1.bf16.msra.mxu0 0
    %3068 = vmatprep.mubr.bf16.mxu0 0
    %3069 = vmatmul.mubr.bf16.gmra.mrb[0].mxu0 %v2355
    %v3070 = vpop.f32.mrb[0].mxu0
    %v3071 = vadd.f32 %v2989, %v3070
    %v3072 = vpop.f32.mrb[0].mxu0
    %v3073 = vadd.f32 %v2991, %v3072
    %v3074 = vpop.f32.mrb[0].mxu0
    %v3075 = vpop.f32.mrb[0].mxu0
    %3076 = vdwg.mxu0
    %v3077 = vadd.f32 %v3030, %v1271
    %v3078 = vadd.f32 %v3032, %v1275
    %v3079 = vadd.f32 %v3071, %v1279
    %v3080 = vadd.f32 %v3073, %v1283
    %v3081 = vxor.u32 %v3077, 2147483648
    %v3082 = vmul.f32 %v3081, 1.442695
    %v3083 = vpow.pop %v3082
    %v3084 = vadd.f32 %v3083, 1.0
    %v3085 = vrcp.pop %v3084
    %v3086 = vmul.f32 1.0, %v3085
    %v3087 = vxor.u32 %v3078, 2147483648
    %v3088 = vmul.f32 %v3087, 1.442695
    %v3089 = vpow.pop %v3088
    %v3090 = vadd.f32 %v3089, 1.0
    %v3091 = vrcp.pop %v3090
    %v3092 = vmul.f32 1.0, %v3091
    %v3093 = vtanh.pop %v3079
    %v3094 = vxor.u32 %v3080, 2147483648
    %v3095 = vmul.f32 %v3094, 1.442695
    %v3096 = vpow.pop %v3095
    %v3097 = vadd.f32 %v3096, 1.0
    %v3098 = vrcp.pop %v3097
    %v3099 = vmul.f32 1.0, %v3098
    %v3100 = vmul.f32 %v3092, %v2662
    %v3101 = vmul.f32 %v3086, %v3093
    %v3102 = vadd.f32 %v3100, %v3101
    %v3103 = vtanh.pop %v3102
    %v3104 = vmul.f32 %v3099, %v3103
    %v3107 = vunpack.c.l.s4 1966171168
    %v3108 = vunpack.c.0.s8 %v3107
    %v3109 = vlaneseq
    %v3110 = vshrl.u32 %v3109, 7
    %v3111 = vsub.s32 %v3108, %v3110
    %v3112 = vrot.slane %v2911, %v3111
    %v3113 = vcombine.high %v3112, %v3112
    %v3115 = vunpack.c.l.s4 1966171168
    %v3116 = vunpack.c.0.s8 %v3115
    %v3117 = vlaneseq
    %v3118 = vshrl.u32 %v3117, 7
    %v3119 = vsub.s32 %v3116, %v3118
    %v3120 = vrot.slane %v3112, %v3119
    %v3122 = vunpack.c.l.s4 1966171168
    %v3123 = vunpack.c.0.s8 %v3122
    %v3124 = vlaneseq
    %v3125 = vshrl.u32 %v3124, 7
    %v3126 = vsub.s32 %v3123, %v3125
    %v3127 = vrot.slane %v3113, %v3126
    %3130 = vst [vmem:[#allocation11 + $0x4] sm:$0x1] %v3120
    %3131 = vst [vmem:[#allocation11 + $0x14] sm:$0x1] %v3127
    %v3134 = vunpack.c.l.s4 1966171168
    %v3135 = vunpack.c.0.s8 %v3134
    %v3136 = vlaneseq
    %v3137 = vshrl.u32 %v3136, 7
    %v3138 = vsub.s32 %v3135, %v3137
    %v3139 = vrot.slane %v3104, %v3138
    %v3140 = vcombine.high %v3139, %v3139
    %v3142 = vunpack.c.l.s4 1966171168
    %v3143 = vunpack.c.0.s8 %v3142
    %v3144 = vlaneseq
    %v3145 = vshrl.u32 %v3144, 7
    %v3146 = vsub.s32 %v3143, %v3145
    %v3147 = vrot.slane %v3139, %v3146
    %v3149 = vunpack.c.l.s4 1966171168
    %v3150 = vunpack.c.0.s8 %v3149
    %v3151 = vlaneseq
    %v3152 = vshrl.u32 %v3151, 7
    %v3153 = vsub.s32 %v3150, %v3152
    %v3154 = vrot.slane %v3140, %v3153
    %3157 = vst [vmem:[#allocation11 + $0xb] sm:$0x1] %v3147
    %3158 = vst [vmem:[#allocation11 + $0x1b] sm:$0x1] %v3154
    %v3159 = vpack.c.bf16 %v2911, %v2911
    %3160 = vmatprep.subr.bf16.mxu0 %v329
    %3161 = vmatpush1.bf16.msra.mxu0 %v328
    %3162 = vmatprep.subr.bf16.mxu0 %v333
    %3163 = vmatpush1.bf16.msra.mxu0 %v332
    %3164 = vmatprep.subr.bf16.mxu0 %v337
    %3165 = vmatpush1.bf16.msra.mxu0 %v336
    %3166 = vmatprep.subr.bf16.mxu0 %v341
    %3167 = vmatpush1.bf16.msra.mxu0 %v340
    %3168 = vmatprep.subr.bf16.mxu0 %v345
    %3169 = vmatpush1.bf16.msra.mxu0 %v344
    %3170 = vmatprep.subr.bf16.mxu0 %v349
    %3171 = vmatpush1.bf16.msra.mxu0 %v348
    %3172 = vmatprep.subr.bf16.mxu0 %v353
    %3173 = vmatpush1.bf16.msra.mxu0 %v352
    %3174 = vmatprep.subr.bf16.mxu0 %v357
    %3175 = vmatpush1.bf16.msra.mxu0 %v356
    %3176 = vmatprep.subr.bf16.mxu0 0
    %3177 = vmatpush1.bf16.msra.mxu0 0
    %3178 = vmatprep.subr.bf16.mxu0 0
    %3179 = vmatpush1.bf16.msra.mxu0 0
    %3180 = vmatprep.subr.bf16.mxu0 0
    %3181 = vmatpush1.bf16.msra.mxu0 0
    %3182 = vmatprep.subr.bf16.mxu0 0
    %3183 = vmatpush1.bf16.msra.mxu0 0
    %3184 = vmatprep.subr.bf16.mxu0 0
    %3185 = vmatpush1.bf16.msra.mxu0 0
    %3186 = vmatprep.subr.bf16.mxu0 0
    %3187 = vmatpush1.bf16.msra.mxu0 0
    %3188 = vmatprep.subr.bf16.mxu0 0
    %3189 = vmatpush1.bf16.msra.mxu0 0
    %3190 = vmatprep.subr.bf16.mxu0 0
    %3191 = vmatpush1.bf16.msra.mxu0 0
    %3192 = vmatprep.mubr.bf16.mxu0 0
    %3193 = vmatmul.mubr.bf16.gmra.mrb[0].mxu0 %v3159
    %v3194 = vpop.f32.mrb[0].mxu0
    %v3195 = vadd.f32 0.0, %v3194
    %v3196 = vpop.f32.mrb[0].mxu0
    %v3197 = vadd.f32 0.0, %v3196
    %v3198 = vpop.f32.mrb[0].mxu0
    %v3199 = vpop.f32.mrb[0].mxu0
    %3200 = vdwg.mxu0
    %3201 = vmatprep.subr.bf16.mxu0 %v331
    %3202 = vmatpush1.bf16.msra.mxu0 %v330
    %3203 = vmatprep.subr.bf16.mxu0 %v335
    %3204 = vmatpush1.bf16.msra.mxu0 %v334
    %3205 = vmatprep.subr.bf16.mxu0 %v339
    %3206 = vmatpush1.bf16.msra.mxu0 %v338
    %3207 = vmatprep.subr.bf16.mxu0 %v343
    %3208 = vmatpush1.bf16.msra.mxu0 %v342
    %3209 = vmatprep.subr.bf16.mxu0 %v347
    %3210 = vmatpush1.bf16.msra.mxu0 %v346
    %3211 = vmatprep.subr.bf16.mxu0 %v351
    %3212 = vmatpush1.bf16.msra.mxu0 %v350
    %3213 = vmatprep.subr.bf16.mxu0 %v355
    %3214 = vmatpush1.bf16.msra.mxu0 %v354
    %3215 = vmatprep.subr.bf16.mxu0 %v359
    %3216 = vmatpush1.bf16.msra.mxu0 %v358
    %3217 = vmatprep.subr.bf16.mxu0 0
    %3218 = vmatpush1.bf16.msra.mxu0 0
    %3219 = vmatprep.subr.bf16.mxu0 0
    %3220 = vmatpush1.bf16.msra.mxu0 0
    %3221 = vmatprep.subr.bf16.mxu0 0
    %3222 = vmatpush1.bf16.msra.mxu0 0
    %3223 = vmatprep.subr.bf16.mxu0 0
    %3224 = vmatpush1.bf16.msra.mxu0 0
    %3225 = vmatprep.subr.bf16.mxu0 0
    %3226 = vmatpush1.bf16.msra.mxu0 0
    %3227 = vmatprep.subr.bf16.mxu0 0
    %3228 = vmatpush1.bf16.msra.mxu0 0
    %3229 = vmatprep.subr.bf16.mxu0 0
    %3230 = vmatpush1.bf16.msra.mxu0 0
    %3231 = vmatprep.subr.bf16.mxu0 0
    %3232 = vmatpush1.bf16.msra.mxu0 0
    %3233 = vmatprep.mubr.bf16.mxu0 0
    %3234 = vmatmul.mubr.bf16.gmra.mrb[0].mxu0 %v3159
    %v3235 = vpop.f32.mrb[0].mxu0
    %v3236 = vadd.f32 0.0, %v3235
    %v3237 = vpop.f32.mrb[0].mxu0
    %v3238 = vadd.f32 0.0, %v3237
    %v3239 = vpop.f32.mrb[0].mxu0
    %v3240 = vpop.f32.mrb[0].mxu0
    %3241 = vdwg.mxu0
    %3242 = vmatprep.subr.bf16.mxu0 %v584
    %3243 = vmatpush1.bf16.msra.mxu0 %v583
    %3244 = vmatprep.subr.bf16.mxu0 %v588
    %3245 = vmatpush1.bf16.msra.mxu0 %v587
    %3246 = vmatprep.subr.bf16.mxu0 %v592
    %3247 = vmatpush1.bf16.msra.mxu0 %v591
    %3248 = vmatprep.subr.bf16.mxu0 %v596
    %3249 = vmatpush1.bf16.msra.mxu0 %v595
    %3250 = vmatprep.subr.bf16.mxu0 %v600
    %3251 = vmatpush1.bf16.msra.mxu0 %v599
    %3252 = vmatprep.subr.bf16.mxu0 %v604
    %3253 = vmatpush1.bf16.msra.mxu0 %v603
    %3254 = vmatprep.subr.bf16.mxu0 %v608
    %3255 = vmatpush1.bf16.msra.mxu0 %v607
    %3256 = vmatprep.subr.bf16.mxu0 %v612
    %3257 = vmatpush1.bf16.msra.mxu0 %v611
    %3258 = vmatprep.subr.bf16.mxu0 0
    %3259 = vmatpush1.bf16.msra.mxu0 0
    %3260 = vmatprep.subr.bf16.mxu0 0
    %3261 = vmatpush1.bf16.msra.mxu0 0
    %3262 = vmatprep.subr.bf16.mxu0 0
    %3263 = vmatpush1.bf16.msra.mxu0 0
    %3264 = vmatprep.subr.bf16.mxu0 0
    %3265 = vmatpush1.bf16.msra.mxu0 0
    %3266 = vmatprep.subr.bf16.mxu0 0
    %3267 = vmatpush1.bf16.msra.mxu0 0
    %3268 = vmatprep.subr.bf16.mxu0 0
    %3269 = vmatpush1.bf16.msra.mxu0 0
    %3270 = vmatprep.subr.bf16.mxu0 0
    %3271 = vmatpush1.bf16.msra.mxu0 0
    %3272 = vmatprep.subr.bf16.mxu0 0
    %3273 = vmatpush1.bf16.msra.mxu0 0
    %3274 = vmatprep.mubr.bf16.mxu0 0
    %3275 = vmatmul.mubr.bf16.gmra.mrb[0].mxu0 %v2103
    %v3276 = vpop.f32.mrb[0].mxu0
    %v3277 = vadd.f32 %v3195, %v3276
    %v3278 = vpop.f32.mrb[0].mxu0
    %v3279 = vadd.f32 %v3197, %v3278
    %v3280 = vpop.f32.mrb[0].mxu0
    %v3281 = vpop.f32.mrb[0].mxu0
    %3282 = vdwg.mxu0
    %3283 = vmatprep.subr.bf16.mxu0 %v586
    %3284 = vmatpush1.bf16.msra.mxu0 %v585
    %3285 = vmatprep.subr.bf16.mxu0 %v590
    %3286 = vmatpush1.bf16.msra.mxu0 %v589
    %3287 = vmatprep.subr.bf16.mxu0 %v594
    %3288 = vmatpush1.bf16.msra.mxu0 %v593
    %3289 = vmatprep.subr.bf16.mxu0 %v598
    %3290 = vmatpush1.bf16.msra.mxu0 %v597
    %3291 = vmatprep.subr.bf16.mxu0 %v602
    %3292 = vmatpush1.bf16.msra.mxu0 %v601
    %3293 = vmatprep.subr.bf16.mxu0 %v606
    %3294 = vmatpush1.bf16.msra.mxu0 %v605
    %3295 = vmatprep.subr.bf16.mxu0 %v610
    %3296 = vmatpush1.bf16.msra.mxu0 %v609
    %3297 = vmatprep.subr.bf16.mxu0 %v614
    %3298 = vmatpush1.bf16.msra.mxu0 %v613
    %3299 = vmatprep.subr.bf16.mxu0 0
    %3300 = vmatpush1.bf16.msra.mxu0 0
    %3301 = vmatprep.subr.bf16.mxu0 0
    %3302 = vmatpush1.bf16.msra.mxu0 0
    %3303 = vmatprep.subr.bf16.mxu0 0
    %3304 = vmatpush1.bf16.msra.mxu0 0
    %3305 = vmatprep.subr.bf16.mxu0 0
    %3306 = vmatpush1.bf16.msra.mxu0 0
    %3307 = vmatprep.subr.bf16.mxu0 0
    %3308 = vmatpush1.bf16.msra.mxu0 0
    %3309 = vmatprep.subr.bf16.mxu0 0
    %3310 = vmatpush1.bf16.msra.mxu0 0
    %3311 = vmatprep.subr.bf16.mxu0 0
    %3312 = vmatpush1.bf16.msra.mxu0 0
    %3313 = vmatprep.subr.bf16.mxu0 0
    %3314 = vmatpush1.bf16.msra.mxu0 0
    %3315 = vmatprep.mubr.bf16.mxu0 0
    %3316 = vmatmul.mubr.bf16.gmra.mrb[0].mxu0 %v2103
    %v3317 = vpop.f32.mrb[0].mxu0
    %v3318 = vadd.f32 %v3236, %v3317
    %v3319 = vpop.f32.mrb[0].mxu0
    %v3320 = vadd.f32 %v3238, %v3319
    %v3321 = vpop.f32.mrb[0].mxu0
    %v3322 = vpop.f32.mrb[0].mxu0
    %3323 = vdwg.mxu0
    %v3324 = vadd.f32 %v3277, %v733
    %v3325 = vadd.f32 %v3279, %v737
    %v3326 = vadd.f32 %v3318, %v741
    %v3327 = vadd.f32 %v3320, %v745
    %v3328 = vxor.u32 %v3324, 2147483648
    %v3329 = vmul.f32 %v3328, 1.442695
    %v3330 = vpow.pop %v3329
    %v3331 = vadd.f32 %v3330, 1.0
    %v3332 = vrcp.pop %v3331
    %v3333 = vmul.f32 1.0, %v3332
    %v3334 = vxor.u32 %v3325, 2147483648
    %v3335 = vmul.f32 %v3334, 1.442695
    %v3336 = vpow.pop %v3335
    %v3337 = vadd.f32 %v3336, 1.0
    %v3338 = vrcp.pop %v3337
    %v3339 = vmul.f32 1.0, %v3338
    %v3340 = vtanh.pop %v3326
    %v3341 = vxor.u32 %v3327, 2147483648
    %v3342 = vmul.f32 %v3341, 1.442695
    %v3343 = vpow.pop %v3342
    %v3344 = vadd.f32 %v3343, 1.0
    %v3345 = vrcp.pop %v3344
    %v3346 = vmul.f32 1.0, %v3345
    %v3347 = vmul.f32 %v3339, %v2909
    %v3348 = vmul.f32 %v3333, %v3340
    %v3349 = vadd.f32 %v3347, %v3348
    %v3350 = vtanh.pop %v3349
    %v3351 = vmul.f32 %v3346, %v3350
    %v3352 = vpack.c.bf16 %v3104, %v3104
    %3353 = vmatprep.subr.bf16.mxu0 %v875
    %3354 = vmatpush1.bf16.msra.mxu0 %v874
    %3355 = vmatprep.subr.bf16.mxu0 %v879
    %3356 = vmatpush1.bf16.msra.mxu0 %v878
    %3357 = vmatprep.subr.bf16.mxu0 %v883
    %3358 = vmatpush1.bf16.msra.mxu0 %v882
    %3359 = vmatprep.subr.bf16.mxu0 %v887
    %3360 = vmatpush1.bf16.msra.mxu0 %v886
    %3361 = vmatprep.subr.bf16.mxu0 %v891
    %3362 = vmatpush1.bf16.msra.mxu0 %v890
    %3363 = vmatprep.subr.bf16.mxu0 %v895
    %3364 = vmatpush1.bf16.msra.mxu0 %v894
    %3365 = vmatprep.subr.bf16.mxu0 %v899
    %3366 = vmatpush1.bf16.msra.mxu0 %v898
    %3367 = vmatprep.subr.bf16.mxu0 %v903
    %3368 = vmatpush1.bf16.msra.mxu0 %v902
    %3369 = vmatprep.subr.bf16.mxu0 0
    %3370 = vmatpush1.bf16.msra.mxu0 0
    %3371 = vmatprep.subr.bf16.mxu0 0
    %3372 = vmatpush1.bf16.msra.mxu0 0
    %3373 = vmatprep.subr.bf16.mxu0 0
    %3374 = vmatpush1.bf16.msra.mxu0 0
    %3375 = vmatprep.subr.bf16.mxu0 0
    %3376 = vmatpush1.bf16.msra.mxu0 0
    %3377 = vmatprep.subr.bf16.mxu0 0
    %3378 = vmatpush1.bf16.msra.mxu0 0
    %3379 = vmatprep.subr.bf16.mxu0 0
    %3380 = vmatpush1.bf16.msra.mxu0 0
    %3381 = vmatprep.subr.bf16.mxu0 0
    %3382 = vmatpush1.bf16.msra.mxu0 0
    %3383 = vmatprep.subr.bf16.mxu0 0
    %3384 = vmatpush1.bf16.msra.mxu0 0
    %3385 = vmatprep.mubr.bf16.mxu0 0
    %3386 = vmatmul.mubr.bf16.gmra.mrb[0].mxu0 %v3352
    %v3387 = vpop.f32.mrb[0].mxu0
    %v3388 = vadd.f32 0.0, %v3387
    %v3389 = vpop.f32.mrb[0].mxu0
    %v3390 = vadd.f32 0.0, %v3389
    %v3391 = vpop.f32.mrb[0].mxu0
    %v3392 = vpop.f32.mrb[0].mxu0
    %3393 = vdwg.mxu0
    %3394 = vmatprep.subr.bf16.mxu0 %v877
    %3395 = vmatpush1.bf16.msra.mxu0 %v876
    %3396 = vmatprep.subr.bf16.mxu0 %v881
    %3397 = vmatpush1.bf16.msra.mxu0 %v880
    %3398 = vmatprep.subr.bf16.mxu0 %v885
    %3399 = vmatpush1.bf16.msra.mxu0 %v884
    %3400 = vmatprep.subr.bf16.mxu0 %v889
    %3401 = vmatpush1.bf16.msra.mxu0 %v888
    %3402 = vmatprep.subr.bf16.mxu0 %v893
    %3403 = vmatpush1.bf16.msra.mxu0 %v892
    %3404 = vmatprep.subr.bf16.mxu0 %v897
    %3405 = vmatpush1.bf16.msra.mxu0 %v896
    %3406 = vmatprep.subr.bf16.mxu0 %v901
    %3407 = vmatpush1.bf16.msra.mxu0 %v900
    %3408 = vmatprep.subr.bf16.mxu0 %v905
    %3409 = vmatpush1.bf16.msra.mxu0 %v904
    %3410 = vmatprep.subr.bf16.mxu0 0
    %3411 = vmatpush1.bf16.msra.mxu0 0
    %3412 = vmatprep.subr.bf16.mxu0 0
    %3413 = vmatpush1.bf16.msra.mxu0 0
    %3414 = vmatprep.subr.bf16.mxu0 0
    %3415 = vmatpush1.bf16.msra.mxu0 0
    %3416 = vmatprep.subr.bf16.mxu0 0
    %3417 = vmatpush1.bf16.msra.mxu0 0
    %3418 = vmatprep.subr.bf16.mxu0 0
    %3419 = vmatpush1.bf16.msra.mxu0 0
    %3420 = vmatprep.subr.bf16.mxu0 0
    %3421 = vmatpush1.bf16.msra.mxu0 0
    %3422 = vmatprep.subr.bf16.mxu0 0
    %3423 = vmatpush1.bf16.msra.mxu0 0
    %3424 = vmatprep.subr.bf16.mxu0 0
    %3425 = vmatpush1.bf16.msra.mxu0 0
    %3426 = vmatprep.mubr.bf16.mxu0 0
    %3427 = vmatmul.mubr.bf16.gmra.mrb[0].mxu0 %v3352
    %v3428 = vpop.f32.mrb[0].mxu0
    %v3429 = vadd.f32 0.0, %v3428
    %v3430 = vpop.f32.mrb[0].mxu0
    %v3431 = vadd.f32 0.0, %v3430
    %v3432 = vpop.f32.mrb[0].mxu0
    %v3433 = vpop.f32.mrb[0].mxu0
    %3434 = vdwg.mxu0
    %3435 = vmatprep.subr.bf16.mxu0 %v1122
    %3436 = vmatpush1.bf16.msra.mxu0 %v1121
    %3437 = vmatprep.subr.bf16.mxu0 %v1126
    %3438 = vmatpush1.bf16.msra.mxu0 %v1125
    %3439 = vmatprep.subr.bf16.mxu0 %v1130
    %3440 = vmatpush1.bf16.msra.mxu0 %v1129
    %3441 = vmatprep.subr.bf16.mxu0 %v1134
    %3442 = vmatpush1.bf16.msra.mxu0 %v1133
    %3443 = vmatprep.subr.bf16.mxu0 %v1138
    %3444 = vmatpush1.bf16.msra.mxu0 %v1137
    %3445 = vmatprep.subr.bf16.mxu0 %v1142
    %3446 = vmatpush1.bf16.msra.mxu0 %v1141
    %3447 = vmatprep.subr.bf16.mxu0 %v1146
    %3448 = vmatpush1.bf16.msra.mxu0 %v1145
    %3449 = vmatprep.subr.bf16.mxu0 %v1150
    %3450 = vmatpush1.bf16.msra.mxu0 %v1149
    %3451 = vmatprep.subr.bf16.mxu0 0
    %3452 = vmatpush1.bf16.msra.mxu0 0
    %3453 = vmatprep.subr.bf16.mxu0 0
    %3454 = vmatpush1.bf16.msra.mxu0 0
    %3455 = vmatprep.subr.bf16.mxu0 0
    %3456 = vmatpush1.bf16.msra.mxu0 0
    %3457 = vmatprep.subr.bf16.mxu0 0
    %3458 = vmatpush1.bf16.msra.mxu0 0
    %3459 = vmatprep.subr.bf16.mxu0 0
    %3460 = vmatpush1.bf16.msra.mxu0 0
    %3461 = vmatprep.subr.bf16.mxu0 0
    %3462 = vmatpush1.bf16.msra.mxu0 0
    %3463 = vmatprep.subr.bf16.mxu0 0
    %3464 = vmatpush1.bf16.msra.mxu0 0
    %3465 = vmatprep.subr.bf16.mxu0 0
    %3466 = vmatpush1.bf16.msra.mxu0 0
    %3467 = vmatprep.mubr.bf16.mxu0 0
    %3468 = vmatmul.mubr.bf16.gmra.mrb[0].mxu0 %v1905
    %v3469 = vpop.f32.mrb[0].mxu0
    %v3470 = vadd.f32 %v3388, %v3469
    %v3471 = vpop.f32.mrb[0].mxu0
    %v3472 = vadd.f32 %v3390, %v3471
    %v3473 = vpop.f32.mrb[0].mxu0
    %v3474 = vpop.f32.mrb[0].mxu0
    %3475 = vdwg.mxu0
    %3476 = vmatprep.subr.bf16.mxu0 %v1124
    %3477 = vmatpush1.bf16.msra.mxu0 %v1123
    %3478 = vmatprep.subr.bf16.mxu0 %v1128
    %3479 = vmatpush1.bf16.msra.mxu0 %v1127
    %3480 = vmatprep.subr.bf16.mxu0 %v1132
    %3481 = vmatpush1.bf16.msra.mxu0 %v1131
    %3482 = vmatprep.subr.bf16.mxu0 %v1136
    %3483 = vmatpush1.bf16.msra.mxu0 %v1135
    %3484 = vmatprep.subr.bf16.mxu0 %v1140
    %3485 = vmatpush1.bf16.msra.mxu0 %v1139
    %3486 = vmatprep.subr.bf16.mxu0 %v1144
    %3487 = vmatpush1.bf16.msra.mxu0 %v1143
    %3488 = vmatprep.subr.bf16.mxu0 %v1148
    %3489 = vmatpush1.bf16.msra.mxu0 %v1147
    %3490 = vmatprep.subr.bf16.mxu0 %v1152
    %3491 = vmatpush1.bf16.msra.mxu0 %v1151
    %3492 = vmatprep.subr.bf16.mxu0 0
    %3493 = vmatpush1.bf16.msra.mxu0 0
    %3494 = vmatprep.subr.bf16.mxu0 0
    %3495 = vmatpush1.bf16.msra.mxu0 0
    %3496 = vmatprep.subr.bf16.mxu0 0
    %3497 = vmatpush1.bf16.msra.mxu0 0
    %3498 = vmatprep.subr.bf16.mxu0 0
    %3499 = vmatpush1.bf16.msra.mxu0 0
    %3500 = vmatprep.subr.bf16.mxu0 0
    %3501 = vmatpush1.bf16.msra.mxu0 0
    %3502 = vmatprep.subr.bf16.mxu0 0
    %3503 = vmatpush1.bf16.msra.mxu0 0
    %3504 = vmatprep.subr.bf16.mxu0 0
    %3505 = vmatpush1.bf16.msra.mxu0 0
    %3506 = vmatprep.subr.bf16.mxu0 0
    %3507 = vmatpush1.bf16.msra.mxu0 0
    %3508 = vmatprep.mubr.bf16.mxu0 0
    %3509 = vmatmul.mubr.bf16.gmra.mrb[0].mxu0 %v1905
    %v3510 = vpop.f32.mrb[0].mxu0
    %v3511 = vadd.f32 %v3429, %v3510
    %v3512 = vpop.f32.mrb[0].mxu0
    %v3513 = vadd.f32 %v3431, %v3512
    %v3514 = vpop.f32.mrb[0].mxu0
    %v3515 = vpop.f32.mrb[0].mxu0
    %3516 = vdwg.mxu0
    %v3517 = vadd.f32 %v3470, %v1271
    %v3518 = vadd.f32 %v3472, %v1275
    %v3519 = vadd.f32 %v3511, %v1279
    %v3520 = vadd.f32 %v3513, %v1283
    %v3521 = vxor.u32 %v3517, 2147483648
    %v3522 = vmul.f32 %v3521, 1.442695
    %v3523 = vpow.pop %v3522
    %v3524 = vadd.f32 %v3523, 1.0
    %v3525 = vrcp.pop %v3524
    %v3526 = vmul.f32 1.0, %v3525
    %v3527 = vxor.u32 %v3518, 2147483648
    %v3528 = vmul.f32 %v3527, 1.442695
    %v3529 = vpow.pop %v3528
    %v3530 = vadd.f32 %v3529, 1.0
    %v3531 = vrcp.pop %v3530
    %v3532 = vmul.f32 1.0, %v3531
    %v3533 = vtanh.pop %v3519
    %v3534 = vxor.u32 %v3520, 2147483648
    %v3535 = vmul.f32 %v3534, 1.442695
    %v3536 = vpow.pop %v3535
    %v3537 = vadd.f32 %v3536, 1.0
    %v3538 = vrcp.pop %v3537
    %v3539 = vmul.f32 1.0, %v3538
    %v3540 = vmul.f32 %v3532, %v3102
    %v3541 = vmul.f32 %v3526, %v3533
    %v3542 = vadd.f32 %v3540, %v3541
    %v3543 = vtanh.pop %v3542
    %v3544 = vmul.f32 %v3539, %v3543
    %v3547 = vunpack.c.l.s4 1966171168
    %v3548 = vunpack.c.0.s8 %v3547
    %v3549 = vlaneseq
    %v3550 = vshrl.u32 %v3549, 7
    %v3551 = vsub.s32 %v3548, %v3550
    %v3552 = vrot.slane %v3351, %v3551
    %v3553 = vcombine.high %v3552, %v3552
    %v3555 = vunpack.c.l.s4 1966171168
    %v3556 = vunpack.c.0.s8 %v3555
    %v3557 = vlaneseq
    %v3558 = vshrl.u32 %v3557, 7
    %v3559 = vsub.s32 %v3556, %v3558
    %v3560 = vrot.slane %v3552, %v3559
    %v3562 = vunpack.c.l.s4 1966171168
    %v3563 = vunpack.c.0.s8 %v3562
    %v3564 = vlaneseq
    %v3565 = vshrl.u32 %v3564, 7
    %v3566 = vsub.s32 %v3563, %v3565
    %v3567 = vrot.slane %v3553, %v3566
    %3570 = vst [vmem:[#allocation11 + $0x5] sm:$0x1] %v3560
    %3571 = vst [vmem:[#allocation11 + $0x15] sm:$0x1] %v3567
    %v3574 = vunpack.c.l.s4 1966171168
    %v3575 = vunpack.c.0.s8 %v3574
    %v3576 = vlaneseq
    %v3577 = vshrl.u32 %v3576, 7
    %v3578 = vsub.s32 %v3575, %v3577
    %v3579 = vrot.slane %v3544, %v3578
    %v3580 = vcombine.high %v3579, %v3579
    %v3582 = vunpack.c.l.s4 1966171168
    %v3583 = vunpack.c.0.s8 %v3582
    %v3584 = vlaneseq
    %v3585 = vshrl.u32 %v3584, 7
    %v3586 = vsub.s32 %v3583, %v3585
    %v3587 = vrot.slane %v3579, %v3586
    %v3589 = vunpack.c.l.s4 1966171168
    %v3590 = vunpack.c.0.s8 %v3589
    %v3591 = vlaneseq
    %v3592 = vshrl.u32 %v3591, 7
    %v3593 = vsub.s32 %v3590, %v3592
    %v3594 = vrot.slane %v3580, %v3593
    %3597 = vst [vmem:[#allocation11 + $0xa] sm:$0x1] %v3587
    %3598 = vst [vmem:[#allocation11 + $0x1a] sm:$0x1] %v3594
    %v3599 = vpack.c.bf16 %v3351, %v3351
    %3600 = vmatprep.subr.bf16.mxu0 %v329
    %3601 = vmatpush1.bf16.msra.mxu0 %v328
    %3602 = vmatprep.subr.bf16.mxu0 %v333
    %3603 = vmatpush1.bf16.msra.mxu0 %v332
    %3604 = vmatprep.subr.bf16.mxu0 %v337
    %3605 = vmatpush1.bf16.msra.mxu0 %v336
    %3606 = vmatprep.subr.bf16.mxu0 %v341
    %3607 = vmatpush1.bf16.msra.mxu0 %v340
    %3608 = vmatprep.subr.bf16.mxu0 %v345
    %3609 = vmatpush1.bf16.msra.mxu0 %v344
    %3610 = vmatprep.subr.bf16.mxu0 %v349
    %3611 = vmatpush1.bf16.msra.mxu0 %v348
    %3612 = vmatprep.subr.bf16.mxu0 %v353
    %3613 = vmatpush1.bf16.msra.mxu0 %v352
    %3614 = vmatprep.subr.bf16.mxu0 %v357
    %3615 = vmatpush1.bf16.msra.mxu0 %v356
    %3616 = vmatprep.subr.bf16.mxu0 0
    %3617 = vmatpush1.bf16.msra.mxu0 0
    %3618 = vmatprep.subr.bf16.mxu0 0
    %3619 = vmatpush1.bf16.msra.mxu0 0
    %3620 = vmatprep.subr.bf16.mxu0 0
    %3621 = vmatpush1.bf16.msra.mxu0 0
    %3622 = vmatprep.subr.bf16.mxu0 0
    %3623 = vmatpush1.bf16.msra.mxu0 0
    %3624 = vmatprep.subr.bf16.mxu0 0
    %3625 = vmatpush1.bf16.msra.mxu0 0
    %3626 = vmatprep.subr.bf16.mxu0 0
    %3627 = vmatpush1.bf16.msra.mxu0 0
    %3628 = vmatprep.subr.bf16.mxu0 0
    %3629 = vmatpush1.bf16.msra.mxu0 0
    %3630 = vmatprep.subr.bf16.mxu0 0
    %3631 = vmatpush1.bf16.msra.mxu0 0
    %3632 = vmatprep.mubr.bf16.mxu0 0
    %3633 = vmatmul.mubr.bf16.gmra.mrb[0].mxu0 %v3599
    %v3634 = vpop.f32.mrb[0].mxu0
    %v3635 = vadd.f32 0.0, %v3634
    %v3636 = vpop.f32.mrb[0].mxu0
    %v3637 = vadd.f32 0.0, %v3636
    %v3638 = vpop.f32.mrb[0].mxu0
    %v3639 = vpop.f32.mrb[0].mxu0
    %3640 = vdwg.mxu0
    %3641 = vmatprep.subr.bf16.mxu0 %v331
    %3642 = vmatpush1.bf16.msra.mxu0 %v330
    %3643 = vmatprep.subr.bf16.mxu0 %v335
    %3644 = vmatpush1.bf16.msra.mxu0 %v334
    %3645 = vmatprep.subr.bf16.mxu0 %v339
    %3646 = vmatpush1.bf16.msra.mxu0 %v338
    %3647 = vmatprep.subr.bf16.mxu0 %v343
    %3648 = vmatpush1.bf16.msra.mxu0 %v342
    %3649 = vmatprep.subr.bf16.mxu0 %v347
    %3650 = vmatpush1.bf16.msra.mxu0 %v346
    %3651 = vmatprep.subr.bf16.mxu0 %v351
    %3652 = vmatpush1.bf16.msra.mxu0 %v350
    %3653 = vmatprep.subr.bf16.mxu0 %v355
    %3654 = vmatpush1.bf16.msra.mxu0 %v354
    %3655 = vmatprep.subr.bf16.mxu0 %v359
    %3656 = vmatpush1.bf16.msra.mxu0 %v358
    %3657 = vmatprep.subr.bf16.mxu0 0
    %3658 = vmatpush1.bf16.msra.mxu0 0
    %3659 = vmatprep.subr.bf16.mxu0 0
    %3660 = vmatpush1.bf16.msra.mxu0 0
    %3661 = vmatprep.subr.bf16.mxu0 0
    %3662 = vmatpush1.bf16.msra.mxu0 0
    %3663 = vmatprep.subr.bf16.mxu0 0
    %3664 = vmatpush1.bf16.msra.mxu0 0
    %3665 = vmatprep.subr.bf16.mxu0 0
    %3666 = vmatpush1.bf16.msra.mxu0 0
    %3667 = vmatprep.subr.bf16.mxu0 0
    %3668 = vmatpush1.bf16.msra.mxu0 0
    %3669 = vmatprep.subr.bf16.mxu0 0
    %3670 = vmatpush1.bf16.msra.mxu0 0
    %3671 = vmatprep.subr.bf16.mxu0 0
    %3672 = vmatpush1.bf16.msra.mxu0 0
    %3673 = vmatprep.mubr.bf16.mxu0 0
    %3674 = vmatmul.mubr.bf16.gmra.mrb[0].mxu0 %v3599
    %v3675 = vpop.f32.mrb[0].mxu0
    %v3676 = vadd.f32 0.0, %v3675
    %v3677 = vpop.f32.mrb[0].mxu0
    %v3678 = vadd.f32 0.0, %v3677
    %v3679 = vpop.f32.mrb[0].mxu0
    %v3680 = vpop.f32.mrb[0].mxu0
    %3681 = vdwg.mxu0
    %3682 = vmatprep.subr.bf16.mxu0 %v584
    %3683 = vmatpush1.bf16.msra.mxu0 %v583
    %3684 = vmatprep.subr.bf16.mxu0 %v588
    %3685 = vmatpush1.bf16.msra.mxu0 %v587
    %3686 = vmatprep.subr.bf16.mxu0 %v592
    %3687 = vmatpush1.bf16.msra.mxu0 %v591
    %3688 = vmatprep.subr.bf16.mxu0 %v596
    %3689 = vmatpush1.bf16.msra.mxu0 %v595
    %3690 = vmatprep.subr.bf16.mxu0 %v600
    %3691 = vmatpush1.bf16.msra.mxu0 %v599
    %3692 = vmatprep.subr.bf16.mxu0 %v604
    %3693 = vmatpush1.bf16.msra.mxu0 %v603
    %3694 = vmatprep.subr.bf16.mxu0 %v608
    %3695 = vmatpush1.bf16.msra.mxu0 %v607
    %3696 = vmatprep.subr.bf16.mxu0 %v612
    %3697 = vmatpush1.bf16.msra.mxu0 %v611
    %3698 = vmatprep.subr.bf16.mxu0 0
    %3699 = vmatpush1.bf16.msra.mxu0 0
    %3700 = vmatprep.subr.bf16.mxu0 0
    %3701 = vmatpush1.bf16.msra.mxu0 0
    %3702 = vmatprep.subr.bf16.mxu0 0
    %3703 = vmatpush1.bf16.msra.mxu0 0
    %3704 = vmatprep.subr.bf16.mxu0 0
    %3705 = vmatpush1.bf16.msra.mxu0 0
    %3706 = vmatprep.subr.bf16.mxu0 0
    %3707 = vmatpush1.bf16.msra.mxu0 0
    %3708 = vmatprep.subr.bf16.mxu0 0
    %3709 = vmatpush1.bf16.msra.mxu0 0
    %3710 = vmatprep.subr.bf16.mxu0 0
    %3711 = vmatpush1.bf16.msra.mxu0 0
    %3712 = vmatprep.subr.bf16.mxu0 0
    %3713 = vmatpush1.bf16.msra.mxu0 0
    %3714 = vmatprep.mubr.bf16.mxu0 0
    %3715 = vmatmul.mubr.bf16.gmra.mrb[0].mxu0 %v1653
    %v3716 = vpop.f32.mrb[0].mxu0
    %v3717 = vadd.f32 %v3635, %v3716
    %v3718 = vpop.f32.mrb[0].mxu0
    %v3719 = vadd.f32 %v3637, %v3718
    %v3720 = vpop.f32.mrb[0].mxu0
    %v3721 = vpop.f32.mrb[0].mxu0
    %3722 = vdwg.mxu0
    %3723 = vmatprep.subr.bf16.mxu0 %v586
    %3724 = vmatpush1.bf16.msra.mxu0 %v585
    %3725 = vmatprep.subr.bf16.mxu0 %v590
    %3726 = vmatpush1.bf16.msra.mxu0 %v589
    %3727 = vmatprep.subr.bf16.mxu0 %v594
    %3728 = vmatpush1.bf16.msra.mxu0 %v593
    %3729 = vmatprep.subr.bf16.mxu0 %v598
    %3730 = vmatpush1.bf16.msra.mxu0 %v597
    %3731 = vmatprep.subr.bf16.mxu0 %v602
    %3732 = vmatpush1.bf16.msra.mxu0 %v601
    %3733 = vmatprep.subr.bf16.mxu0 %v606
    %3734 = vmatpush1.bf16.msra.mxu0 %v605
    %3735 = vmatprep.subr.bf16.mxu0 %v610
    %3736 = vmatpush1.bf16.msra.mxu0 %v609
    %3737 = vmatprep.subr.bf16.mxu0 %v614
    %3738 = vmatpush1.bf16.msra.mxu0 %v613
    %3739 = vmatprep.subr.bf16.mxu0 0
    %3740 = vmatpush1.bf16.msra.mxu0 0
    %3741 = vmatprep.subr.bf16.mxu0 0
    %3742 = vmatpush1.bf16.msra.mxu0 0
    %3743 = vmatprep.subr.bf16.mxu0 0
    %3744 = vmatpush1.bf16.msra.mxu0 0
    %3745 = vmatprep.subr.bf16.mxu0 0
    %3746 = vmatpush1.bf16.msra.mxu0 0
    %3747 = vmatprep.subr.bf16.mxu0 0
    %3748 = vmatpush1.bf16.msra.mxu0 0
    %3749 = vmatprep.subr.bf16.mxu0 0
    %3750 = vmatpush1.bf16.msra.mxu0 0
    %3751 = vmatprep.subr.bf16.mxu0 0
    %3752 = vmatpush1.bf16.msra.mxu0 0
    %3753 = vmatprep.subr.bf16.mxu0 0
    %3754 = vmatpush1.bf16.msra.mxu0 0
    %3755 = vmatprep.mubr.bf16.mxu0 0
    %3756 = vmatmul.mubr.bf16.gmra.mrb[0].mxu0 %v1653
    %v3757 = vpop.f32.mrb[0].mxu0
    %v3758 = vadd.f32 %v3676, %v3757
    %v3759 = vpop.f32.mrb[0].mxu0
    %v3760 = vadd.f32 %v3678, %v3759
    %v3761 = vpop.f32.mrb[0].mxu0
    %v3762 = vpop.f32.mrb[0].mxu0
    %3763 = vdwg.mxu0
    %v3764 = vadd.f32 %v3717, %v733
    %v3765 = vadd.f32 %v3719, %v737
    %v3766 = vadd.f32 %v3758, %v741
    %v3767 = vadd.f32 %v3760, %v745
    %v3768 = vxor.u32 %v3764, 2147483648
    %v3769 = vmul.f32 %v3768, 1.442695
    %v3770 = vpow.pop %v3769
    %v3771 = vadd.f32 %v3770, 1.0
    %v3772 = vrcp.pop %v3771
    %v3773 = vmul.f32 1.0, %v3772
    %v3774 = vxor.u32 %v3765, 2147483648
    %v3775 = vmul.f32 %v3774, 1.442695
    %v3776 = vpow.pop %v3775
    %v3777 = vadd.f32 %v3776, 1.0
    %v3778 = vrcp.pop %v3777
    %v3779 = vmul.f32 1.0, %v3778
    %v3780 = vtanh.pop %v3766
    %v3781 = vxor.u32 %v3767, 2147483648
    %v3782 = vmul.f32 %v3781, 1.442695
    %v3783 = vpow.pop %v3782
    %v3784 = vadd.f32 %v3783, 1.0
    %v3785 = vrcp.pop %v3784
    %v3786 = vmul.f32 1.0, %v3785
    %v3787 = vmul.f32 %v3779, %v3349
    %v3788 = vmul.f32 %v3773, %v3780
    %v3789 = vadd.f32 %v3787, %v3788
    %v3790 = vtanh.pop %v3789
    %v3791 = vmul.f32 %v3786, %v3790
    %v3792 = vpack.c.bf16 %v3544, %v3544
    %3793 = vmatprep.subr.bf16.mxu0 %v875
    %3794 = vmatpush1.bf16.msra.mxu0 %v874
    %3795 = vmatprep.subr.bf16.mxu0 %v879
    %3796 = vmatpush1.bf16.msra.mxu0 %v878
    %3797 = vmatprep.subr.bf16.mxu0 %v883
    %3798 = vmatpush1.bf16.msra.mxu0 %v882
    %3799 = vmatprep.subr.bf16.mxu0 %v887
    %3800 = vmatpush1.bf16.msra.mxu0 %v886
    %3801 = vmatprep.subr.bf16.mxu0 %v891
    %3802 = vmatpush1.bf16.msra.mxu0 %v890
    %3803 = vmatprep.subr.bf16.mxu0 %v895
    %3804 = vmatpush1.bf16.msra.mxu0 %v894
    %3805 = vmatprep.subr.bf16.mxu0 %v899
    %3806 = vmatpush1.bf16.msra.mxu0 %v898
    %3807 = vmatprep.subr.bf16.mxu0 %v903
    %3808 = vmatpush1.bf16.msra.mxu0 %v902
    %3809 = vmatprep.subr.bf16.mxu0 0
    %3810 = vmatpush1.bf16.msra.mxu0 0
    %3811 = vmatprep.subr.bf16.mxu0 0
    %3812 = vmatpush1.bf16.msra.mxu0 0
    %3813 = vmatprep.subr.bf16.mxu0 0
    %3814 = vmatpush1.bf16.msra.mxu0 0
    %3815 = vmatprep.subr.bf16.mxu0 0
    %3816 = vmatpush1.bf16.msra.mxu0 0
    %3817 = vmatprep.subr.bf16.mxu0 0
    %3818 = vmatpush1.bf16.msra.mxu0 0
    %3819 = vmatprep.subr.bf16.mxu0 0
    %3820 = vmatpush1.bf16.msra.mxu0 0
    %3821 = vmatprep.subr.bf16.mxu0 0
    %3822 = vmatpush1.bf16.msra.mxu0 0
    %3823 = vmatprep.subr.bf16.mxu0 0
    %3824 = vmatpush1.bf16.msra.mxu0 0
    %3825 = vmatprep.mubr.bf16.mxu0 0
    %3826 = vmatmul.mubr.bf16.gmra.mrb[0].mxu0 %v3792
    %v3827 = vpop.f32.mrb[0].mxu0
    %v3828 = vadd.f32 0.0, %v3827
    %v3829 = vpop.f32.mrb[0].mxu0
    %v3830 = vadd.f32 0.0, %v3829
    %v3831 = vpop.f32.mrb[0].mxu0
    %v3832 = vpop.f32.mrb[0].mxu0
    %3833 = vdwg.mxu0
    %3834 = vmatprep.subr.bf16.mxu0 %v877
    %3835 = vmatpush1.bf16.msra.mxu0 %v876
    %3836 = vmatprep.subr.bf16.mxu0 %v881
    %3837 = vmatpush1.bf16.msra.mxu0 %v880
    %3838 = vmatprep.subr.bf16.mxu0 %v885
    %3839 = vmatpush1.bf16.msra.mxu0 %v884
    %3840 = vmatprep.subr.bf16.mxu0 %v889
    %3841 = vmatpush1.bf16.msra.mxu0 %v888
    %3842 = vmatprep.subr.bf16.mxu0 %v893
    %3843 = vmatpush1.bf16.msra.mxu0 %v892
    %3844 = vmatprep.subr.bf16.mxu0 %v897
    %3845 = vmatpush1.bf16.msra.mxu0 %v896
    %3846 = vmatprep.subr.bf16.mxu0 %v901
    %3847 = vmatpush1.bf16.msra.mxu0 %v900
    %3848 = vmatprep.subr.bf16.mxu0 %v905
    %3849 = vmatpush1.bf16.msra.mxu0 %v904
    %3850 = vmatprep.subr.bf16.mxu0 0
    %3851 = vmatpush1.bf16.msra.mxu0 0
    %3852 = vmatprep.subr.bf16.mxu0 0
    %3853 = vmatpush1.bf16.msra.mxu0 0
    %3854 = vmatprep.subr.bf16.mxu0 0
    %3855 = vmatpush1.bf16.msra.mxu0 0
    %3856 = vmatprep.subr.bf16.mxu0 0
    %3857 = vmatpush1.bf16.msra.mxu0 0
    %3858 = vmatprep.subr.bf16.mxu0 0
    %3859 = vmatpush1.bf16.msra.mxu0 0
    %3860 = vmatprep.subr.bf16.mxu0 0
    %3861 = vmatpush1.bf16.msra.mxu0 0
    %3862 = vmatprep.subr.bf16.mxu0 0
    %3863 = vmatpush1.bf16.msra.mxu0 0
    %3864 = vmatprep.subr.bf16.mxu0 0
    %3865 = vmatpush1.bf16.msra.mxu0 0
    %3866 = vmatprep.mubr.bf16.mxu0 0
    %3867 = vmatmul.mubr.bf16.gmra.mrb[0].mxu0 %v3792
    %v3868 = vpop.f32.mrb[0].mxu0
    %v3869 = vadd.f32 0.0, %v3868
    %v3870 = vpop.f32.mrb[0].mxu0
    %v3871 = vadd.f32 0.0, %v3870
    %v3872 = vpop.f32.mrb[0].mxu0
    %v3873 = vpop.f32.mrb[0].mxu0
    %3874 = vdwg.mxu0
    %3875 = vmatprep.subr.bf16.mxu0 %v1122
    %3876 = vmatpush1.bf16.msra.mxu0 %v1121
    %3877 = vmatprep.subr.bf16.mxu0 %v1126
    %3878 = vmatpush1.bf16.msra.mxu0 %v1125
    %3879 = vmatprep.subr.bf16.mxu0 %v1130
    %3880 = vmatpush1.bf16.msra.mxu0 %v1129
    %3881 = vmatprep.subr.bf16.mxu0 %v1134
    %3882 = vmatpush1.bf16.msra.mxu0 %v1133
    %3883 = vmatprep.subr.bf16.mxu0 %v1138
    %3884 = vmatpush1.bf16.msra.mxu0 %v1137
    %3885 = vmatprep.subr.bf16.mxu0 %v1142
    %3886 = vmatpush1.bf16.msra.mxu0 %v1141
    %3887 = vmatprep.subr.bf16.mxu0 %v1146
    %3888 = vmatpush1.bf16.msra.mxu0 %v1145
    %3889 = vmatprep.subr.bf16.mxu0 %v1150
    %3890 = vmatpush1.bf16.msra.mxu0 %v1149
    %3891 = vmatprep.subr.bf16.mxu0 0
    %3892 = vmatpush1.bf16.msra.mxu0 0
    %3893 = vmatprep.subr.bf16.mxu0 0
    %3894 = vmatpush1.bf16.msra.mxu0 0
    %3895 = vmatprep.subr.bf16.mxu0 0
    %3896 = vmatpush1.bf16.msra.mxu0 0
    %3897 = vmatprep.subr.bf16.mxu0 0
    %3898 = vmatpush1.bf16.msra.mxu0 0
    %3899 = vmatprep.subr.bf16.mxu0 0
    %3900 = vmatpush1.bf16.msra.mxu0 0
    %3901 = vmatprep.subr.bf16.mxu0 0
    %3902 = vmatpush1.bf16.msra.mxu0 0
    %3903 = vmatprep.subr.bf16.mxu0 0
    %3904 = vmatpush1.bf16.msra.mxu0 0
    %3905 = vmatprep.subr.bf16.mxu0 0
    %3906 = vmatpush1.bf16.msra.mxu0 0
    %3907 = vmatprep.mubr.bf16.mxu0 0
    %3908 = vmatmul.mubr.bf16.gmra.mrb[0].mxu0 %v1455
    %v3909 = vpop.f32.mrb[0].mxu0
    %v3910 = vadd.f32 %v3828, %v3909
    %v3911 = vpop.f32.mrb[0].mxu0
    %v3912 = vadd.f32 %v3830, %v3911
    %v3913 = vpop.f32.mrb[0].mxu0
    %v3914 = vpop.f32.mrb[0].mxu0
    %3915 = vdwg.mxu0
    %3916 = vmatprep.subr.bf16.mxu0 %v1124
    %3917 = vmatpush1.bf16.msra.mxu0 %v1123
    %3918 = vmatprep.subr.bf16.mxu0 %v1128
    %3919 = vmatpush1.bf16.msra.mxu0 %v1127
    %3920 = vmatprep.subr.bf16.mxu0 %v1132
    %3921 = vmatpush1.bf16.msra.mxu0 %v1131
    %3922 = vmatprep.subr.bf16.mxu0 %v1136
    %3923 = vmatpush1.bf16.msra.mxu0 %v1135
    %3924 = vmatprep.subr.bf16.mxu0 %v1140
    %3925 = vmatpush1.bf16.msra.mxu0 %v1139
    %3926 = vmatprep.subr.bf16.mxu0 %v1144
    %3927 = vmatpush1.bf16.msra.mxu0 %v1143
    %3928 = vmatprep.subr.bf16.mxu0 %v1148
    %3929 = vmatpush1.bf16.msra.mxu0 %v1147
    %3930 = vmatprep.subr.bf16.mxu0 %v1152
    %3931 = vmatpush1.bf16.msra.mxu0 %v1151
    %3932 = vmatprep.subr.bf16.mxu0 0
    %3933 = vmatpush1.bf16.msra.mxu0 0
    %3934 = vmatprep.subr.bf16.mxu0 0
    %3935 = vmatpush1.bf16.msra.mxu0 0
    %3936 = vmatprep.subr.bf16.mxu0 0
    %3937 = vmatpush1.bf16.msra.mxu0 0
    %3938 = vmatprep.subr.bf16.mxu0 0
    %3939 = vmatpush1.bf16.msra.mxu0 0
    %3940 = vmatprep.subr.bf16.mxu0 0
    %3941 = vmatpush1.bf16.msra.mxu0 0
    %3942 = vmatprep.subr.bf16.mxu0 0
    %3943 = vmatpush1.bf16.msra.mxu0 0
    %3944 = vmatprep.subr.bf16.mxu0 0
    %3945 = vmatpush1.bf16.msra.mxu0 0
    %3946 = vmatprep.subr.bf16.mxu0 0
    %3947 = vmatpush1.bf16.msra.mxu0 0
    %3948 = vmatprep.mubr.bf16.mxu0 0
    %3949 = vmatmul.mubr.bf16.gmra.mrb[0].mxu0 %v1455
    %v3950 = vpop.f32.mrb[0].mxu0
    %v3951 = vadd.f32 %v3869, %v3950
    %v3952 = vpop.f32.mrb[0].mxu0
    %v3953 = vadd.f32 %v3871, %v3952
    %v3954 = vpop.f32.mrb[0].mxu0
    %v3955 = vpop.f32.mrb[0].mxu0
    %3956 = vdwg.mxu0
    %v3957 = vadd.f32 %v3910, %v1271
    %v3958 = vadd.f32 %v3912, %v1275
    %v3959 = vadd.f32 %v3951, %v1279
    %v3960 = vadd.f32 %v3953, %v1283
    %v3961 = vxor.u32 %v3957, 2147483648
    %v3962 = vmul.f32 %v3961, 1.442695
    %v3963 = vpow.pop %v3962
    %v3964 = vadd.f32 %v3963, 1.0
    %v3965 = vrcp.pop %v3964
    %v3966 = vmul.f32 1.0, %v3965
    %v3967 = vxor.u32 %v3958, 2147483648
    %v3968 = vmul.f32 %v3967, 1.442695
    %v3969 = vpow.pop %v3968
    %v3970 = vadd.f32 %v3969, 1.0
    %v3971 = vrcp.pop %v3970
    %v3972 = vmul.f32 1.0, %v3971
    %v3973 = vtanh.pop %v3959
    %v3974 = vxor.u32 %v3960, 2147483648
    %v3975 = vmul.f32 %v3974, 1.442695
    %v3976 = vpow.pop %v3975
    %v3977 = vadd.f32 %v3976, 1.0
    %v3978 = vrcp.pop %v3977
    %v3979 = vmul.f32 1.0, %v3978
    %v3980 = vmul.f32 %v3972, %v3542
    %v3981 = vmul.f32 %v3966, %v3973
    %v3982 = vadd.f32 %v3980, %v3981
    %v3983 = vtanh.pop %v3982
    %v3984 = vmul.f32 %v3979, %v3983
    %v3987 = vunpack.c.l.s4 1966171168
    %v3988 = vunpack.c.0.s8 %v3987
    %v3989 = vlaneseq
    %v3990 = vshrl.u32 %v3989, 7
    %v3991 = vsub.s32 %v3988, %v3990
    %v3992 = vrot.slane %v3791, %v3991
    %v3993 = vcombine.high %v3992, %v3992
    %v3995 = vunpack.c.l.s4 1966171168
    %v3996 = vunpack.c.0.s8 %v3995
    %v3997 = vlaneseq
    %v3998 = vshrl.u32 %v3997, 7
    %v3999 = vsub.s32 %v3996, %v3998
    %v4000 = vrot.slane %v3992, %v3999
    %v4002 = vunpack.c.l.s4 1966171168
    %v4003 = vunpack.c.0.s8 %v4002
    %v4004 = vlaneseq
    %v4005 = vshrl.u32 %v4004, 7
    %v4006 = vsub.s32 %v4003, %v4005
    %v4007 = vrot.slane %v3993, %v4006
    %4010 = vst [vmem:[#allocation11 + $0x6] sm:$0x1] %v4000
    %4011 = vst [vmem:[#allocation11 + $0x16] sm:$0x1] %v4007
    %v4014 = vunpack.c.l.s4 1966171168
    %v4015 = vunpack.c.0.s8 %v4014
    %v4016 = vlaneseq
    %v4017 = vshrl.u32 %v4016, 7
    %v4018 = vsub.s32 %v4015, %v4017
    %v4019 = vrot.slane %v3984, %v4018
    %v4020 = vcombine.high %v4019, %v4019
    %v4022 = vunpack.c.l.s4 1966171168
    %v4023 = vunpack.c.0.s8 %v4022
    %v4024 = vlaneseq
    %v4025 = vshrl.u32 %v4024, 7
    %v4026 = vsub.s32 %v4023, %v4025
    %v4027 = vrot.slane %v4019, %v4026
    %v4029 = vunpack.c.l.s4 1966171168
    %v4030 = vunpack.c.0.s8 %v4029
    %v4031 = vlaneseq
    %v4032 = vshrl.u32 %v4031, 7
    %v4033 = vsub.s32 %v4030, %v4032
    %v4034 = vrot.slane %v4020, %v4033
    %4037 = vst [vmem:[#allocation11 + $0x9] sm:$0x1] %v4027
    %4038 = vst [vmem:[#allocation11 + $0x19] sm:$0x1] %v4034
    %v4039 = vpack.c.bf16 %v3791, %v3791
    %4040 = vmatprep.subr.bf16.mxu0 %v329
    %4041 = vmatpush1.bf16.msra.mxu0 %v328
    %4042 = vmatprep.subr.bf16.mxu0 %v333
    %4043 = vmatpush1.bf16.msra.mxu0 %v332
    %4044 = vmatprep.subr.bf16.mxu0 %v337
    %4045 = vmatpush1.bf16.msra.mxu0 %v336
    %4046 = vmatprep.subr.bf16.mxu0 %v341
    %4047 = vmatpush1.bf16.msra.mxu0 %v340
    %4048 = vmatprep.subr.bf16.mxu0 %v345
    %4049 = vmatpush1.bf16.msra.mxu0 %v344
    %4050 = vmatprep.subr.bf16.mxu0 %v349
    %4051 = vmatpush1.bf16.msra.mxu0 %v348
    %4052 = vmatprep.subr.bf16.mxu0 %v353
    %4053 = vmatpush1.bf16.msra.mxu0 %v352
    %4054 = vmatprep.subr.bf16.mxu0 %v357
    %4055 = vmatpush1.bf16.msra.mxu0 %v356
    %4056 = vmatprep.subr.bf16.mxu0 0
    %4057 = vmatpush1.bf16.msra.mxu0 0
    %4058 = vmatprep.subr.bf16.mxu0 0
    %4059 = vmatpush1.bf16.msra.mxu0 0
    %4060 = vmatprep.subr.bf16.mxu0 0
    %4061 = vmatpush1.bf16.msra.mxu0 0
    %4062 = vmatprep.subr.bf16.mxu0 0
    %4063 = vmatpush1.bf16.msra.mxu0 0
    %4064 = vmatprep.subr.bf16.mxu0 0
    %4065 = vmatpush1.bf16.msra.mxu0 0
    %4066 = vmatprep.subr.bf16.mxu0 0
    %4067 = vmatpush1.bf16.msra.mxu0 0
    %4068 = vmatprep.subr.bf16.mxu0 0
    %4069 = vmatpush1.bf16.msra.mxu0 0
    %4070 = vmatprep.subr.bf16.mxu0 0
    %4071 = vmatpush1.bf16.msra.mxu0 0
    %4072 = vmatprep.mubr.bf16.mxu0 0
    %4073 = vmatmul.mubr.bf16.gmra.mrb[0].mxu0 %v4039
    %v4074 = vpop.f32.mrb[0].mxu0
    %v4075 = vadd.f32 0.0, %v4074
    %v4076 = vpop.f32.mrb[0].mxu0
    %v4077 = vadd.f32 0.0, %v4076
    %v4078 = vpop.f32.mrb[0].mxu0
    %v4079 = vpop.f32.mrb[0].mxu0
    %4080 = vdwg.mxu0
    %4081 = vmatprep.subr.bf16.mxu0 %v331
    %4082 = vmatpush1.bf16.msra.mxu0 %v330
    %4083 = vmatprep.subr.bf16.mxu0 %v335
    %4084 = vmatpush1.bf16.msra.mxu0 %v334
    %4085 = vmatprep.subr.bf16.mxu0 %v339
    %4086 = vmatpush1.bf16.msra.mxu0 %v338
    %4087 = vmatprep.subr.bf16.mxu0 %v343
    %4088 = vmatpush1.bf16.msra.mxu0 %v342
    %4089 = vmatprep.subr.bf16.mxu0 %v347
    %4090 = vmatpush1.bf16.msra.mxu0 %v346
    %4091 = vmatprep.subr.bf16.mxu0 %v351
    %4092 = vmatpush1.bf16.msra.mxu0 %v350
    %4093 = vmatprep.subr.bf16.mxu0 %v355
    %4094 = vmatpush1.bf16.msra.mxu0 %v354
    %4095 = vmatprep.subr.bf16.mxu0 %v359
    %4096 = vmatpush1.bf16.msra.mxu0 %v358
    %4097 = vmatprep.subr.bf16.mxu0 0
    %4098 = vmatpush1.bf16.msra.mxu0 0
    %4099 = vmatprep.subr.bf16.mxu0 0
    %4100 = vmatpush1.bf16.msra.mxu0 0
    %4101 = vmatprep.subr.bf16.mxu0 0
    %4102 = vmatpush1.bf16.msra.mxu0 0
    %4103 = vmatprep.subr.bf16.mxu0 0
    %4104 = vmatpush1.bf16.msra.mxu0 0
    %4105 = vmatprep.subr.bf16.mxu0 0
    %4106 = vmatpush1.bf16.msra.mxu0 0
    %4107 = vmatprep.subr.bf16.mxu0 0
    %4108 = vmatpush1.bf16.msra.mxu0 0
    %4109 = vmatprep.subr.bf16.mxu0 0
    %4110 = vmatpush1.bf16.msra.mxu0 0
    %4111 = vmatprep.subr.bf16.mxu0 0
    %4112 = vmatpush1.bf16.msra.mxu0 0
    %4113 = vmatprep.mubr.bf16.mxu0 0
    %4114 = vmatmul.mubr.bf16.gmra.mrb[0].mxu0 %v4039
    %v4115 = vpop.f32.mrb[0].mxu0
    %v4116 = vadd.f32 0.0, %v4115
    %v4117 = vpop.f32.mrb[0].mxu0
    %v4118 = vadd.f32 0.0, %v4117
    %v4119 = vpop.f32.mrb[0].mxu0
    %v4120 = vpop.f32.mrb[0].mxu0
    %4121 = vdwg.mxu0
    %4122 = vmatprep.subr.bf16.mxu0 %v584
    %4123 = vmatpush1.bf16.msra.mxu0 %v583
    %4124 = vmatprep.subr.bf16.mxu0 %v588
    %4125 = vmatpush1.bf16.msra.mxu0 %v587
    %4126 = vmatprep.subr.bf16.mxu0 %v592
    %4127 = vmatpush1.bf16.msra.mxu0 %v591
    %4128 = vmatprep.subr.bf16.mxu0 %v596
    %4129 = vmatpush1.bf16.msra.mxu0 %v595
    %4130 = vmatprep.subr.bf16.mxu0 %v600
    %4131 = vmatpush1.bf16.msra.mxu0 %v599
    %4132 = vmatprep.subr.bf16.mxu0 %v604
    %4133 = vmatpush1.bf16.msra.mxu0 %v603
    %4134 = vmatprep.subr.bf16.mxu0 %v608
    %4135 = vmatpush1.bf16.msra.mxu0 %v607
    %4136 = vmatprep.subr.bf16.mxu0 %v612
    %4137 = vmatpush1.bf16.msra.mxu0 %v611
    %4138 = vmatprep.subr.bf16.mxu0 0
    %4139 = vmatpush1.bf16.msra.mxu0 0
    %4140 = vmatprep.subr.bf16.mxu0 0
    %4141 = vmatpush1.bf16.msra.mxu0 0
    %4142 = vmatprep.subr.bf16.mxu0 0
    %4143 = vmatpush1.bf16.msra.mxu0 0
    %4144 = vmatprep.subr.bf16.mxu0 0
    %4145 = vmatpush1.bf16.msra.mxu0 0
    %4146 = vmatprep.subr.bf16.mxu0 0
    %4147 = vmatpush1.bf16.msra.mxu0 0
    %4148 = vmatprep.subr.bf16.mxu0 0
    %4149 = vmatpush1.bf16.msra.mxu0 0
    %4150 = vmatprep.subr.bf16.mxu0 0
    %4151 = vmatpush1.bf16.msra.mxu0 0
    %4152 = vmatprep.subr.bf16.mxu0 0
    %4153 = vmatpush1.bf16.msra.mxu0 0
    %4154 = vmatprep.mubr.bf16.mxu0 0
    %4155 = vmatmul.mubr.bf16.gmra.mrb[0].mxu0 %v1023
    %v4156 = vpop.f32.mrb[0].mxu0
    %v4157 = vadd.f32 %v4075, %v4156
    %v4158 = vpop.f32.mrb[0].mxu0
    %v4159 = vadd.f32 %v4077, %v4158
    %v4160 = vpop.f32.mrb[0].mxu0
    %v4161 = vpop.f32.mrb[0].mxu0
    %4162 = vdwg.mxu0
    %4163 = vmatprep.subr.bf16.mxu0 %v586
    %4164 = vmatpush1.bf16.msra.mxu0 %v585
    %4165 = vmatprep.subr.bf16.mxu0 %v590
    %4166 = vmatpush1.bf16.msra.mxu0 %v589
    %4167 = vmatprep.subr.bf16.mxu0 %v594
    %4168 = vmatpush1.bf16.msra.mxu0 %v593
    %4169 = vmatprep.subr.bf16.mxu0 %v598
    %4170 = vmatpush1.bf16.msra.mxu0 %v597
    %4171 = vmatprep.subr.bf16.mxu0 %v602
    %4172 = vmatpush1.bf16.msra.mxu0 %v601
    %4173 = vmatprep.subr.bf16.mxu0 %v606
    %4174 = vmatpush1.bf16.msra.mxu0 %v605
    %4175 = vmatprep.subr.bf16.mxu0 %v610
    %4176 = vmatpush1.bf16.msra.mxu0 %v609
    %4177 = vmatprep.subr.bf16.mxu0 %v614
    %4178 = vmatpush1.bf16.msra.mxu0 %v613
    %4179 = vmatprep.subr.bf16.mxu0 0
    %4180 = vmatpush1.bf16.msra.mxu0 0
    %4181 = vmatprep.subr.bf16.mxu0 0
    %4182 = vmatpush1.bf16.msra.mxu0 0
    %4183 = vmatprep.subr.bf16.mxu0 0
    %4184 = vmatpush1.bf16.msra.mxu0 0
    %4185 = vmatprep.subr.bf16.mxu0 0
    %4186 = vmatpush1.bf16.msra.mxu0 0
    %4187 = vmatprep.subr.bf16.mxu0 0
    %4188 = vmatpush1.bf16.msra.mxu0 0
    %4189 = vmatprep.subr.bf16.mxu0 0
    %4190 = vmatpush1.bf16.msra.mxu0 0
    %4191 = vmatprep.subr.bf16.mxu0 0
    %4192 = vmatpush1.bf16.msra.mxu0 0
    %4193 = vmatprep.subr.bf16.mxu0 0
    %4194 = vmatpush1.bf16.msra.mxu0 0
    %4195 = vmatprep.mubr.bf16.mxu0 0
    %4196 = vmatmul.mubr.bf16.gmra.mrb[0].mxu0 %v1023
    %v4197 = vpop.f32.mrb[0].mxu0
    %v4198 = vadd.f32 %v4116, %v4197
    %v4199 = vpop.f32.mrb[0].mxu0
    %v4200 = vadd.f32 %v4118, %v4199
    %v4201 = vpop.f32.mrb[0].mxu0
    %v4202 = vpop.f32.mrb[0].mxu0
    %4203 = vdwg.mxu0
    %v4204 = vadd.f32 %v4157, %v733
    %v4205 = vadd.f32 %v4159, %v737
    %v4206 = vadd.f32 %v4198, %v741
    %v4207 = vadd.f32 %v4200, %v745
    %v4208 = vxor.u32 %v4204, 2147483648
    %v4209 = vmul.f32 %v4208, 1.442695
    %v4210 = vpow.pop %v4209
    %v4211 = vadd.f32 %v4210, 1.0
    %v4212 = vrcp.pop %v4211
    %v4213 = vmul.f32 1.0, %v4212
    %v4214 = vxor.u32 %v4205, 2147483648
    %v4215 = vmul.f32 %v4214, 1.442695
    %v4216 = vpow.pop %v4215
    %v4217 = vadd.f32 %v4216, 1.0
    %v4218 = vrcp.pop %v4217
    %v4219 = vmul.f32 1.0, %v4218
    %v4220 = vtanh.pop %v4206
    %v4221 = vxor.u32 %v4207, 2147483648
    %v4222 = vmul.f32 %v4221, 1.442695
    %v4223 = vpow.pop %v4222
    %v4224 = vadd.f32 %v4223, 1.0
    %v4225 = vrcp.pop %v4224
    %v4226 = vmul.f32 1.0, %v4225
    %v4227 = vmul.f32 %v4219, %v3789
    %v4228 = vmul.f32 %v4213, %v4220
    %v4229 = vadd.f32 %v4227, %v4228
    %v4230 = vtanh.pop %v4229
    %v4231 = vmul.f32 %v4226, %v4230
    %v4232 = vpack.c.bf16 %v3984, %v3984
    %4233 = vmatprep.subr.bf16.mxu0 %v875
    %4234 = vmatpush1.bf16.msra.mxu0 %v874
    %4235 = vmatprep.subr.bf16.mxu0 %v879
    %4236 = vmatpush1.bf16.msra.mxu0 %v878
    %4237 = vmatprep.subr.bf16.mxu0 %v883
    %4238 = vmatpush1.bf16.msra.mxu0 %v882
    %4239 = vmatprep.subr.bf16.mxu0 %v887
    %4240 = vmatpush1.bf16.msra.mxu0 %v886
    %4241 = vmatprep.subr.bf16.mxu0 %v891
    %4242 = vmatpush1.bf16.msra.mxu0 %v890
    %4243 = vmatprep.subr.bf16.mxu0 %v895
    %4244 = vmatpush1.bf16.msra.mxu0 %v894
    %4245 = vmatprep.subr.bf16.mxu0 %v899
    %4246 = vmatpush1.bf16.msra.mxu0 %v898
    %4247 = vmatprep.subr.bf16.mxu0 %v903
    %4248 = vmatpush1.bf16.msra.mxu0 %v902
    %4249 = vmatprep.subr.bf16.mxu0 0
    %4250 = vmatpush1.bf16.msra.mxu0 0
    %4251 = vmatprep.subr.bf16.mxu0 0
    %4252 = vmatpush1.bf16.msra.mxu0 0
    %4253 = vmatprep.subr.bf16.mxu0 0
    %4254 = vmatpush1.bf16.msra.mxu0 0
    %4255 = vmatprep.subr.bf16.mxu0 0
    %4256 = vmatpush1.bf16.msra.mxu0 0
    %4257 = vmatprep.subr.bf16.mxu0 0
    %4258 = vmatpush1.bf16.msra.mxu0 0
    %4259 = vmatprep.subr.bf16.mxu0 0
    %4260 = vmatpush1.bf16.msra.mxu0 0
    %4261 = vmatprep.subr.bf16.mxu0 0
    %4262 = vmatpush1.bf16.msra.mxu0 0
    %4263 = vmatprep.subr.bf16.mxu0 0
    %4264 = vmatpush1.bf16.msra.mxu0 0
    %4265 = vmatprep.mubr.bf16.mxu0 0
    %4266 = vmatmul.mubr.bf16.gmra.mrb[0].mxu0 %v4232
    %v4267 = vpop.f32.mrb[0].mxu0
    %v4268 = vadd.f32 0.0, %v4267
    %v4269 = vpop.f32.mrb[0].mxu0
    %v4270 = vadd.f32 0.0, %v4269
    %v4271 = vpop.f32.mrb[0].mxu0
    %v4272 = vpop.f32.mrb[0].mxu0
    %4273 = vdwg.mxu0
    %4274 = vmatprep.subr.bf16.mxu0 %v877
    %4275 = vmatpush1.bf16.msra.mxu0 %v876
    %4276 = vmatprep.subr.bf16.mxu0 %v881
    %4277 = vmatpush1.bf16.msra.mxu0 %v880
    %4278 = vmatprep.subr.bf16.mxu0 %v885
    %4279 = vmatpush1.bf16.msra.mxu0 %v884
    %4280 = vmatprep.subr.bf16.mxu0 %v889
    %4281 = vmatpush1.bf16.msra.mxu0 %v888
    %4282 = vmatprep.subr.bf16.mxu0 %v893
    %4283 = vmatpush1.bf16.msra.mxu0 %v892
    %4284 = vmatprep.subr.bf16.mxu0 %v897
    %4285 = vmatpush1.bf16.msra.mxu0 %v896
    %4286 = vmatprep.subr.bf16.mxu0 %v901
    %4287 = vmatpush1.bf16.msra.mxu0 %v900
    %4288 = vmatprep.subr.bf16.mxu0 %v905
    %4289 = vmatpush1.bf16.msra.mxu0 %v904
    %4290 = vmatprep.subr.bf16.mxu0 0
    %4291 = vmatpush1.bf16.msra.mxu0 0
    %4292 = vmatprep.subr.bf16.mxu0 0
    %4293 = vmatpush1.bf16.msra.mxu0 0
    %4294 = vmatprep.subr.bf16.mxu0 0
    %4295 = vmatpush1.bf16.msra.mxu0 0
    %4296 = vmatprep.subr.bf16.mxu0 0
    %4297 = vmatpush1.bf16.msra.mxu0 0
    %4298 = vmatprep.subr.bf16.mxu0 0
    %4299 = vmatpush1.bf16.msra.mxu0 0
    %4300 = vmatprep.subr.bf16.mxu0 0
    %4301 = vmatpush1.bf16.msra.mxu0 0
    %4302 = vmatprep.subr.bf16.mxu0 0
    %4303 = vmatpush1.bf16.msra.mxu0 0
    %4304 = vmatprep.subr.bf16.mxu0 0
    %4305 = vmatpush1.bf16.msra.mxu0 0
    %4306 = vmatprep.mubr.bf16.mxu0 0
    %4307 = vmatmul.mubr.bf16.gmra.mrb[0].mxu0 %v4232
    %v4308 = vpop.f32.mrb[0].mxu0
    %v4309 = vadd.f32 0.0, %v4308
    %v4310 = vpop.f32.mrb[0].mxu0
    %v4311 = vadd.f32 0.0, %v4310
    %v4312 = vpop.f32.mrb[0].mxu0
    %v4313 = vpop.f32.mrb[0].mxu0
    %4314 = vdwg.mxu0
    %4315 = vmatprep.subr.bf16.mxu0 %v1122
    %4316 = vmatpush1.bf16.msra.mxu0 %v1121
    %4317 = vmatprep.subr.bf16.mxu0 %v1126
    %4318 = vmatpush1.bf16.msra.mxu0 %v1125
    %4319 = vmatprep.subr.bf16.mxu0 %v1130
    %4320 = vmatpush1.bf16.msra.mxu0 %v1129
    %4321 = vmatprep.subr.bf16.mxu0 %v1134
    %4322 = vmatpush1.bf16.msra.mxu0 %v1133
    %4323 = vmatprep.subr.bf16.mxu0 %v1138
    %4324 = vmatpush1.bf16.msra.mxu0 %v1137
    %4325 = vmatprep.subr.bf16.mxu0 %v1142
    %4326 = vmatpush1.bf16.msra.mxu0 %v1141
    %4327 = vmatprep.subr.bf16.mxu0 %v1146
    %4328 = vmatpush1.bf16.msra.mxu0 %v1145
    %4329 = vmatprep.subr.bf16.mxu0 %v1150
    %4330 = vmatpush1.bf16.msra.mxu0 %v1149
    %4331 = vmatprep.subr.bf16.mxu0 0
    %4332 = vmatpush1.bf16.msra.mxu0 0
    %4333 = vmatprep.subr.bf16.mxu0 0
    %4334 = vmatpush1.bf16.msra.mxu0 0
    %4335 = vmatprep.subr.bf16.mxu0 0
    %4336 = vmatpush1.bf16.msra.mxu0 0
    %4337 = vmatprep.subr.bf16.mxu0 0
    %4338 = vmatpush1.bf16.msra.mxu0 0
    %4339 = vmatprep.subr.bf16.mxu0 0
    %4340 = vmatpush1.bf16.msra.mxu0 0
    %4341 = vmatprep.subr.bf16.mxu0 0
    %4342 = vmatpush1.bf16.msra.mxu0 0
    %4343 = vmatprep.subr.bf16.mxu0 0
    %4344 = vmatpush1.bf16.msra.mxu0 0
    %4345 = vmatprep.subr.bf16.mxu0 0
    %4346 = vmatpush1.bf16.msra.mxu0 0
    %4347 = vmatprep.mubr.bf16.mxu0 0
    %4348 = vmatmul.mubr.bf16.gmra.mrb[0].mxu0 %v485
    %v4349 = vpop.f32.mrb[0].mxu0
    %v4350 = vadd.f32 %v4268, %v4349
    %v4351 = vpop.f32.mrb[0].mxu0
    %v4352 = vadd.f32 %v4270, %v4351
    %v4353 = vpop.f32.mrb[0].mxu0
    %v4354 = vpop.f32.mrb[0].mxu0
    %4355 = vdwg.mxu0
    %4356 = vmatprep.subr.bf16.mxu0 %v1124
    %4357 = vmatpush1.bf16.msra.mxu0 %v1123
    %4358 = vmatprep.subr.bf16.mxu0 %v1128
    %4359 = vmatpush1.bf16.msra.mxu0 %v1127
    %4360 = vmatprep.subr.bf16.mxu0 %v1132
    %4361 = vmatpush1.bf16.msra.mxu0 %v1131
    %4362 = vmatprep.subr.bf16.mxu0 %v1136
    %4363 = vmatpush1.bf16.msra.mxu0 %v1135
    %4364 = vmatprep.subr.bf16.mxu0 %v1140
    %4365 = vmatpush1.bf16.msra.mxu0 %v1139
    %4366 = vmatprep.subr.bf16.mxu0 %v1144
    %4367 = vmatpush1.bf16.msra.mxu0 %v1143
    %4368 = vmatprep.subr.bf16.mxu0 %v1148
    %4369 = vmatpush1.bf16.msra.mxu0 %v1147
    %4370 = vmatprep.subr.bf16.mxu0 %v1152
    %4371 = vmatpush1.bf16.msra.mxu0 %v1151
    %4372 = vmatprep.subr.bf16.mxu0 0
    %4373 = vmatpush1.bf16.msra.mxu0 0
    %4374 = vmatprep.subr.bf16.mxu0 0
    %4375 = vmatpush1.bf16.msra.mxu0 0
    %4376 = vmatprep.subr.bf16.mxu0 0
    %4377 = vmatpush1.bf16.msra.mxu0 0
    %4378 = vmatprep.subr.bf16.mxu0 0
    %4379 = vmatpush1.bf16.msra.mxu0 0
    %4380 = vmatprep.subr.bf16.mxu0 0
    %4381 = vmatpush1.bf16.msra.mxu0 0
    %4382 = vmatprep.subr.bf16.mxu0 0
    %4383 = vmatpush1.bf16.msra.mxu0 0
    %4384 = vmatprep.subr.bf16.mxu0 0
    %4385 = vmatpush1.bf16.msra.mxu0 0
    %4386 = vmatprep.subr.bf16.mxu0 0
    %4387 = vmatpush1.bf16.msra.mxu0 0
    %4388 = vmatprep.mubr.bf16.mxu0 0
    %4389 = vmatmul.mubr.bf16.gmra.mrb[0].mxu0 %v485
    %v4390 = vpop.f32.mrb[0].mxu0
    %v4391 = vadd.f32 %v4309, %v4390
    %v4392 = vpop.f32.mrb[0].mxu0
    %v4393 = vadd.f32 %v4311, %v4392
    %v4394 = vpop.f32.mrb[0].mxu0
    %v4395 = vpop.f32.mrb[0].mxu0
    %4396 = vdwg.mxu0
    %v4397 = vadd.f32 %v4350, %v1271
    %v4398 = vadd.f32 %v4352, %v1275
    %v4399 = vadd.f32 %v4391, %v1279
    %v4400 = vadd.f32 %v4393, %v1283
    %v4401 = vxor.u32 %v4397, 2147483648
    %v4402 = vmul.f32 %v4401, 1.442695
    %v4403 = vpow.pop %v4402
    %v4404 = vadd.f32 %v4403, 1.0
    %v4405 = vrcp.pop %v4404
    %v4406 = vmul.f32 1.0, %v4405
    %v4407 = vxor.u32 %v4398, 2147483648
    %v4408 = vmul.f32 %v4407, 1.442695
    %v4409 = vpow.pop %v4408
    %v4410 = vadd.f32 %v4409, 1.0
    %v4411 = vrcp.pop %v4410
    %v4412 = vmul.f32 1.0, %v4411
    %v4413 = vtanh.pop %v4399
    %v4414 = vxor.u32 %v4400, 2147483648
    %v4415 = vmul.f32 %v4414, 1.442695
    %v4416 = vpow.pop %v4415
    %v4417 = vadd.f32 %v4416, 1.0
    %v4418 = vrcp.pop %v4417
    %v4419 = vmul.f32 1.0, %v4418
    %v4420 = vmul.f32 %v4412, %v3982
    %v4421 = vmul.f32 %v4406, %v4413
    %v4422 = vadd.f32 %v4420, %v4421
    %v4423 = vtanh.pop %v4422
    %v4424 = vmul.f32 %v4419, %v4423
    %v4427 = vunpack.c.l.s4 1966171168
    %v4428 = vunpack.c.0.s8 %v4427
    %v4429 = vlaneseq
    %v4430 = vshrl.u32 %v4429, 7
    %v4431 = vsub.s32 %v4428, %v4430
    %v4432 = vrot.slane %v4231, %v4431
    %v4433 = vcombine.high %v4432, %v4432
    %v4435 = vunpack.c.l.s4 1966171168
    %v4436 = vunpack.c.0.s8 %v4435
    %v4437 = vlaneseq
    %v4438 = vshrl.u32 %v4437, 7
    %v4439 = vsub.s32 %v4436, %v4438
    %v4440 = vrot.slane %v4432, %v4439
    %v4442 = vunpack.c.l.s4 1966171168
    %v4443 = vunpack.c.0.s8 %v4442
    %v4444 = vlaneseq
    %v4445 = vshrl.u32 %v4444, 7
    %v4446 = vsub.s32 %v4443, %v4445
    %v4447 = vrot.slane %v4433, %v4446
    %4450 = vst [vmem:[#allocation11 + $0x7] sm:$0x1] %v4440
    %4451 = vst [vmem:[#allocation11 + $0x17] sm:$0x1] %v4447
    %v4454 = vunpack.c.l.s4 1966171168
    %v4455 = vunpack.c.0.s8 %v4454
    %v4456 = vlaneseq
    %v4457 = vshrl.u32 %v4456, 7
    %v4458 = vsub.s32 %v4455, %v4457
    %v4459 = vrot.slane %v4424, %v4458
    %v4460 = vcombine.high %v4459, %v4459
    %v4462 = vunpack.c.l.s4 1966171168
    %v4463 = vunpack.c.0.s8 %v4462
    %v4464 = vlaneseq
    %v4465 = vshrl.u32 %v4464, 7
    %v4466 = vsub.s32 %v4463, %v4465
    %v4467 = vrot.slane %v4459, %v4466
    %v4469 = vunpack.c.l.s4 1966171168
    %v4470 = vunpack.c.0.s8 %v4469
    %v4471 = vlaneseq
    %v4472 = vshrl.u32 %v4471, 7
    %v4473 = vsub.s32 %v4470, %v4472
    %v4474 = vrot.slane %v4460, %v4473
    %4477 = vst [vmem:[#allocation11 + $0x8] sm:$0x1] %v4467
    %4478 = vst [vmem:[#allocation11 + $0x18] sm:$0x1] %v4474
    %v4479 = vadd.f32 %v4231, %v4424
    %4480 = vst [vmem:[#allocation12] sm:$0x3] %v4479
    %v4481 = vadd.f32 %v4229, %v4422
    %4482 = vst [vmem:[#allocation14] sm:$0x3] %v4481
    // Predicated region
    $region50: #{tpu_custom_call.1} parent=1 // pred_check
      _
    $region51: #{tpu_custom_call.1} parent=1 // pred_check_branch
      %4484 = sbr.rel (0) target = $region53
    $region52: #{tpu_custom_call.1} parent=1 // pred_region
      %s4486 = ssub.s32 512, 512
      %4487 = vsyncadd [#allocation4], %s4486
      %s4488 = sshll.u32 [#allocation11], 4
      %s4489 = int_to_ptr.vmem [resolvable:$true] %s4488
      %4494 = dma.vmem_to_hbm [thread:$0]  %s4489, 512, %s7, [#allocation4], 256, 256, 16
    $region53: #{tpu_custom_call.1} parent=1 // pred_fallthru
      _
    // Predicated region
    $region54: #{tpu_custom_call.1} parent=1 // pred_check
      _
    $region55: #{tpu_custom_call.1} parent=1 // pred_check_branch
      %4496 = sbr.rel (0) target = $region57
    $region56: #{tpu_custom_call.1} parent=1 // pred_region
      %s4498 = ssub.s32 32, 32
      %4499 = vsyncadd [#allocation13], %s4498
      %s4501 = sshll.u32 [#allocation12], 4
      %s4502 = int_to_ptr.vmem [resolvable:$true] %s4501
      %4504 = dma.vmem_to_hbm [thread:$0]  %s4502, 32, %s8, [#allocation13]
    $region57: #{tpu_custom_call.1} parent=1 // pred_fallthru
      _
    // Predicated region
    $region58: #{tpu_custom_call.1} parent=1 // pred_check
      _
    $region59: #{tpu_custom_call.1} parent=1 // pred_check_branch
      %4506 = sbr.rel (0) target = $region61
    $region60: #{tpu_custom_call.1} parent=1 // pred_region
      %s4508 = ssub.s32 32, 32
      %4509 = vsyncadd [#allocation13], %s4508
      %s4511 = sshll.u32 [#allocation14], 4
      %s4512 = int_to_ptr.vmem [resolvable:$true] %s4511
      %4514 = dma.vmem_to_hbm [thread:$0]  %s4512, 32, %s9, [#allocation13]
    $region61: #{tpu_custom_call.1} parent=1 // pred_fallthru
      _
    // Predicated region
    $region62: #{tpu_custom_call.1} parent=1 // pred_check
      _
    $region63: #{tpu_custom_call.1} parent=1 // pred_check_branch
      %4516 = sbr.rel (0) target = $region65
    $region64: #{tpu_custom_call.1} parent=1 // pred_region
      %4517 = dma.done [#allocation4], 512
    $region65: #{tpu_custom_call.1} parent=1 // pred_fallthru
      _
    // Predicated region
    $region66: #{tpu_custom_call.1} parent=1 // pred_check
      _
    $region67: #{tpu_custom_call.1} parent=1 // pred_check_branch
      %4519 = sbr.rel (0) target = $region69
    $region68: #{tpu_custom_call.1} parent=1 // pred_region
      %4520 = dma.done [#allocation13], 32
    $region69: #{tpu_custom_call.1} parent=1 // pred_fallthru
      _
    // Predicated region
    $region70: #{tpu_custom_call.1} parent=1 // pred_check
      _
    $region71: #{tpu_custom_call.1} parent=1 // pred_check_branch
      %4522 = sbr.rel (0) target = $region73
    $region72: #{tpu_custom_call.1} parent=1 // pred_region
      %4523 = dma.done [#allocation13], 32
    $region73: #{tpu_custom_call.1} parent=1 // pred_fallthru
      _
    %4524 = vsyncpa [#allocation3], 1
    %4525 = vsyncpa [#allocation6], 1
    %4526 = vsyncpa [#allocation9], 1
    %4527 = vsyncpa [#allocation4], 1
    %4528 = vsyncpa [#allocation13], 1

</llo_original>
